<compile_context>
chip_gen: v7x
topology: tpu7x:2x2x1
jax: 0.10.0
libtpu: 0.0.40
codegen_flags: <defaults>
</compile_context>

<pallas_src>
import numpy as np
import jax
import jax.numpy as jnp
from jax import lax
from jax.experimental import pallas as pl
from jax.experimental.pallas import tpu as pltpu

EPS = 1e-5  # PyTorch BatchNorm2d default eps


def _round_up(x, m):
    return ((x + m - 1) // m) * m


# ----------------------- selection-matrix constructors ---------------------- #
# Activation layout is (C, P) with flat position index p = n*H*W + h*W + w.

def _upsample_mat(n, h, w):
    """(N*h*w, N*2h*2w) 0/1 matrix: X @ M == nearest-neighbor x2 upsample."""
    ho, wo = 2 * h, 2 * w
    p_in, p_out = n * h * w, n * ho * wo
    dst = np.arange(p_out)
    ni = dst // (ho * wo)
    rem = dst % (ho * wo)
    hh, ww = rem // wo, rem % wo
    src = ni * (h * w) + (hh // 2) * w + (ww // 2)
    m = np.zeros((p_in, p_out), np.float32)
    m[src, dst] = 1.0
    return m


def _pool_mat_fused(n, h, w):
    """(N*h*w, 4*N*(h/2)*(w/2)) 0/1 matrix: the four 2x2-offset stride-2 pick
    matrices hstacked.  Elementwise max over the four column slabs of X @ M
    equals MaxPool2d(2, 2); the offset-(0,0) slab is the stride-2 subsample."""
    assert h % 2 == 0 and w % 2 == 0, "stride-2 block needs even spatial dims"
    ho, wo = h // 2, w // 2
    p_in, p_out = n * h * w, n * ho * wo
    dst = np.arange(p_out)
    ni = dst // (ho * wo)
    rem = dst % (ho * wo)
    hh, ww = rem // wo, rem % wo
    cols = []
    for dh in (0, 1):
        for dw in (0, 1):
            src = ni * (h * w) + (2 * hh + dh) * w + (2 * ww + dw)
            m = np.zeros((p_in, p_out), np.float32)
            m[src, dst] = 1.0
            cols.append(m)
    return np.concatenate(cols, axis=1), p_out


# ----------------------------- parameter build ------------------------------ #

def _conv_init(key, c_in, c_out):
    # PyTorch Conv2d default: kaiming_uniform(a=sqrt(5)) -> U(-1/sqrt(fan_in), 1/sqrt(fan_in))
    bound = 1.0 / float(np.sqrt(c_in))
    return jax.random.uniform(key, (c_out, c_in), jnp.float32, -bound, bound)


def build_generator(key, nblocks, nfilters, n, h, w, level):
    """Returns (meta, arrays). `arrays` is the flat kernel-input list:
    [noise pack per lane-width..., packed conv weights (bf16), upsample mat (bf16),
     fused pool mat (bf16)].  `meta` holds static indices/offsets into them."""
    layer_cfg = [
        (8 * nfilters, 1, nblocks[0]),
        (4 * nfilters, 2, nblocks[1]),
        (2 * nfilters, 2, nblocks[2]),
        (1 * nfilters, 2, nblocks[3]),
    ]

    noise_packs = {}    # P -> list of (c_pad, P) f32 chunks
    noise_offsets = {}  # P -> running row offset
    weights = []        # list of (c_out, c_in) f32
    up_sizes, pool_sizes = set(), set()

    def add_noise(k, c, cur_h, cur_w):
        P = n * cur_h * cur_w
        # fixed perturbation noise: (2*U[0,1)-1)*level, generated per (C, h*w)
        # then tiled over the batch (exact broadcast for p = b*h*w + pos layout).
        nz = (2.0 * jax.random.uniform(k, (c, cur_h * cur_w), jnp.float32) - 1.0) * level
        nz = jnp.tile(nz, (1, n))
        c_pad = _round_up(c, 8)  # keep pack slices sublane-aligned
        if c_pad > c:
            nz = jnp.concatenate([nz, jnp.zeros((c_pad - c, P), jnp.float32)], axis=0)
        off = noise_offsets.get(P, 0)
        noise_packs.setdefault(P, []).append(nz)
        noise_offsets[P] = off + c_pad
        return (P, off, c)

    def add_weight(k, c_in, c_out):
        weights.append(_conv_init(k, c_in, c_out))
        return (len(weights) - 1, c_out, c_in)

    layers_meta = []
    in_planes = nfilters
    cur_h, cur_w = h, w
    for li, (planes, stride, nb) in enumerate(layer_cfg):
        lmeta = {"upsample": li > 0, "blocks": []}
        if li > 0:  # nearest-neighbor x2 upsample precedes layers 2..4
            up_sizes.add((cur_h, cur_w))
            cur_h, cur_w = cur_h * 2, cur_w * 2
        for bi in range(nb):
            s = stride if bi == 0 else 1
            key, k1, k2, k3, k4, k5 = jax.random.split(key, 6)
            h2, w2 = cur_h // s, cur_w // s
            blk = {"stride": s}
            blk["n1"] = add_noise(k1, in_planes, cur_h, cur_w)
            blk["w1"] = add_weight(k2, in_planes, planes)
            if s != 1:
                pool_sizes.add((cur_h, cur_w))
            blk["n2"] = add_noise(k3, planes, h2, w2)
            blk["w2"] = add_weight(k4, planes, planes)
            blk["w_sc"] = add_weight(k5, in_planes, planes) if (s != 1 or in_planes != planes) else None
            # subsample∘(nearest x2 upsample) == identity: a stride-2 shortcut in
            # the block immediately following the layer's upsample can read the
            # pre-upsample activation directly (bit-exact, no selection matmul).
            blk["sc_preup"] = (s != 1) and (bi == 0) and (li > 0)
            blk["sc_subsample"] = (s != 1) and not blk["sc_preup"]
            lmeta["blocks"].append(blk)
            in_planes = planes
            cur_h, cur_w = h2, w2
        layers_meta.append(lmeta)

    # --- pack constants into a handful of arrays (fewer, larger DMAs) --------
    pack_Ps = sorted(noise_packs.keys())
    noise_arrays = [jnp.concatenate(noise_packs[P], axis=0) for P in pack_Ps]

    wpad_o = _round_up(max(wt.shape[0] for wt in weights), 8)
    wpad_i = _round_up(max(wt.shape[1] for wt in weights), 8)
    wstack = np.zeros((len(weights), wpad_o, wpad_i), np.float32)
    for i, wt in enumerate(weights):
        wstack[i, : wt.shape[0], : wt.shape[1]] = np.asarray(wt)
    weights_bf16 = jnp.asarray(wstack, dtype=jnp.bfloat16)

    assert len(up_sizes) == 1 and len(pool_sizes) == 1, (up_sizes, pool_sizes)
    (uh, uw), = up_sizes
    (ph, pw), = pool_sizes
    up_mat = jnp.asarray(_upsample_mat(n, uh, uw), dtype=jnp.bfloat16)
    pool_np, pool_pout = _pool_mat_fused(n, ph, pw)
    pool_mat = jnp.asarray(pool_np, dtype=jnp.bfloat16)

    meta = {
        "layers": layers_meta,
        "pack_Ps": pack_Ps,
        "pool_pout": pool_pout,
        "n": n,
        "out_c": in_planes,
        "out_h": cur_h,
        "out_w": cur_w,
        "out_p": n * cur_h * cur_w,
    }
    arrays = noise_arrays + [weights_bf16, up_mat, pool_mat]
    return meta, arrays


# ------------------------------ fused kernel -------------------------------- #

def make_kernel(meta):
    layers = meta["layers"]
    pack_Ps = meta["pack_Ps"]
    pout = meta["pool_pout"]
    npk = len(pack_Ps)

    def kernel(*refs):
        x_ref = refs[0]
        noise_refs = {P: refs[1 + i] for i, P in enumerate(pack_Ps)}
        w_ref = refs[1 + npk]
        up_ref = refs[2 + npk]
        pool_ref = refs[3 + npk]
        out_ref = refs[-1]

        def bn(y):
            # Training-mode BatchNorm2d: per-channel stats over all N*H*W lanes,
            # gamma=1, beta=0, biased variance.  var = E[y^2] - E[y]^2 keeps the
            # two XLU lane reductions independent (shorter dependency chain).
            # Requires the full batch in one program -- do NOT tile the lane
            # axis without making this two-pass.
            m1 = jnp.mean(y, axis=1, keepdims=True)
            m2 = jnp.mean(y * y, axis=1, keepdims=True)
            var = jnp.maximum(m2 - m1 * m1, 0.0)
            return (y - m1) * lax.rsqrt(var + EPS)

        def conv1x1(wmeta, act):
            widx, co, ci = wmeta
            wgt = w_ref[widx][:co, :ci]                     # bf16 (co, ci)
            return jnp.dot(wgt, act.astype(jnp.bfloat16),
                           preferred_element_type=jnp.float32)

        def sel(act, sel_ref):                              # 0/1 selection matmul
            return jnp.dot(act.astype(jnp.bfloat16), sel_ref[...],
                           preferred_element_type=jnp.float32)

        def noise(nmeta):                                   # f32, pre-tiled over batch
            P, off, c = nmeta
            return noise_refs[P][off:off + c, :]

        x = x_ref[...]                                      # (C0, N*H*W) f32
        for lmeta in layers:
            x_pre = x                                       # pre-upsample activation
            if lmeta["upsample"]:
                x = sel(x, up_ref)                          # nearest x2 upsample
            for blk in lmeta["blocks"]:
                xin = x
                # NoiseLayer 1: Conv1x1(BN(ReLU(x + fixed_noise)))
                y = jnp.maximum(xin + noise(blk["n1"]), 0.0)
                y = conv1x1(blk["w1"], bn(y))
                # MaxPool2d(2,2): one fused selection matmul, VPU max over 4 slabs
                if blk["stride"] != 1:
                    p4 = sel(y, pool_ref)
                    y = jnp.maximum(
                        jnp.maximum(p4[:, 0:pout], p4[:, pout:2 * pout]),
                        jnp.maximum(p4[:, 2 * pout:3 * pout], p4[:, 3 * pout:4 * pout]))
                # BN + ReLU
                y = jnp.maximum(bn(y), 0.0)
                # NoiseLayer 2: Conv1x1(BN(ReLU(y + fixed_noise)))
                y = jnp.maximum(y + noise(blk["n2"]), 0.0)
                y = conv1x1(blk["w2"], bn(y))
                # shortcut: (strided) Conv1x1 + BN, or identity
                if blk["w_sc"] is not None:
                    if blk["sc_preup"]:
                        xs = x_pre                          # subsample∘upsample == identity
                    elif blk["sc_subsample"]:
                        xs = sel(xin, pool_ref)[:, 0:pout]  # offset-(0,0) stride-2 pick
                    else:
                        xs = xin
                    res = bn(conv1x1(blk["w_sc"], xs))
                else:
                    res = xin
                # final BN of the block, residual add, ReLU
                x = jnp.maximum(bn(y) + res, 0.0)
        out_ref[...] = jnp.tanh(x)

    return kernel


def generator_forward(x_nchw, meta, arrays):
    n, c, h, w = x_nchw.shape
    # NCHW -> (C, N*H*W): channels on sublanes, flattened positions on lanes.
    x2d = jnp.transpose(x_nchw, (1, 0, 2, 3)).reshape(c, n * h * w)
    vmem = pltpu.MemorySpace.VMEM
    out2d = pl.pallas_call(
        make_kernel(meta),
        out_shape=jax.ShapeDtypeStruct((meta["out_c"], meta["out_p"]), jnp.float32),
        in_specs=[pl.BlockSpec(memory_space=vmem)] * (1 + len(arrays)),
        out_specs=pl.BlockSpec(memory_space=vmem),
    )(x2d, *arrays)
    out = out2d.reshape(meta["out_c"], n, meta["out_h"], meta["out_w"])
    return jnp.transpose(out, (1, 0, 2, 3))  # -> NCHW


# ---------------------------------- main ------------------------------------ #

if __name__ == "__main__":
    key = jax.random.PRNGKey(0)
    kx, kp = jax.random.split(key)

    nblocks = [2, 1, 1, 1]
    nfilters = 4          # input channels must equal nfilters (self.in_planes)
    level = 0.2
    N, C, H, W = 2, nfilters, 8, 8

    x = jax.random.normal(kx, (N, C, H, W), dtype=jnp.float32)
    meta, arrays = build_generator(kp, nblocks, nfilters, N, H, W, level)

    fwd = jax.jit(lambda inp: generator_forward(inp, meta, arrays))
    out = jax.block_until_ready(fwd(x))

    assert out.shape == (N, nfilters, H, W), out.shape
    assert bool(jnp.all(jnp.isfinite(out)))
    assert bool(jnp.all(jnp.abs(out) <= 1.0))  # tanh output range
    print("KERNEL_OK")
</pallas_src>

<mosaic_0001>
module attributes {stable_mosaic.version = 11 : i64} {
  func.func @kernel(%arg0: memref<4x128xf32, #tpu.memory_space<vmem>>, %arg1: memref<136x128xf32, #tpu.memory_space<vmem>>, %arg2: memref<56x512xf32, #tpu.memory_space<vmem>>, %arg3: memref<14x32x32xbf16, #tpu.memory_space<vmem>>, %arg4: memref<128x512xbf16, #tpu.memory_space<vmem>>, %arg5: memref<512x512xbf16, #tpu.memory_space<vmem>>, %arg6: memref<4x128xf32, #tpu.memory_space<vmem>>) attributes {dimension_semantics = [], scalar_prefetch = 0 : i64, scratch_operands = 0 : i64, tpu.core_type = #tpu.core_type<tc>} {
    %c0 = arith.constant 0 : index
    %c0_0 = arith.constant 0 : index
    %0 = vector.load %arg0[%c0, %c0_0] : memref<4x128xf32, #tpu.memory_space<vmem>>, vector<4x128xf32>
    %c0_1 = arith.constant 0 : index
    %c0_2 = arith.constant 0 : index
    %1 = vector.load %arg1[%c0_1, %c0_2] : memref<136x128xf32, #tpu.memory_space<vmem>>, vector<4x128xf32>
    %2 = arith.addf %0, %1 : vector<4x128xf32>
    %cst = arith.constant 0.000000e+00 : f32
    %3 = vector.broadcast %cst : f32 to vector<4x128xf32>
    %4 = arith.maximumf %2, %3 : vector<4x128xf32>
    %cst_3 = arith.constant dense<0.000000e+00> : vector<4xf32>
    %5 = vector.multi_reduction <add>, %4, %cst_3 [1] : vector<4x128xf32> to vector<4xf32>
    %6 = vector.shape_cast %5 : vector<4xf32> to vector<4x1xf32>
    %cst_4 = arith.constant 1.280000e+02 : f32
    %7 = vector.broadcast %cst_4 : f32 to vector<4x1xf32>
    %8 = arith.divf %6, %7 : vector<4x1xf32>
    %9 = arith.mulf %4, %4 : vector<4x128xf32>
    %cst_5 = arith.constant dense<0.000000e+00> : vector<4xf32>
    %10 = vector.multi_reduction <add>, %9, %cst_5 [1] : vector<4x128xf32> to vector<4xf32>
    %11 = vector.shape_cast %10 : vector<4xf32> to vector<4x1xf32>
    %cst_6 = arith.constant 1.280000e+02 : f32
    %12 = vector.broadcast %cst_6 : f32 to vector<4x1xf32>
    %13 = arith.divf %11, %12 : vector<4x1xf32>
    %14 = arith.mulf %8, %8 : vector<4x1xf32>
    %15 = arith.subf %13, %14 : vector<4x1xf32>
    %cst_7 = arith.constant 0.000000e+00 : f32
    %16 = vector.broadcast %cst_7 : f32 to vector<4x1xf32>
    %17 = arith.maximumf %15, %16 : vector<4x1xf32>
    %18 = vector.broadcast %8 : vector<4x1xf32> to vector<4x128xf32>
    %19 = arith.subf %4, %18 : vector<4x128xf32>
    %cst_8 = arith.constant 9.99999974E-6 : f32
    %20 = vector.broadcast %cst_8 : f32 to vector<4x1xf32>
    %21 = arith.addf %17, %20 : vector<4x1xf32>
    %22 = math.rsqrt %21 : vector<4x1xf32>
    %23 = vector.broadcast %22 : vector<4x1xf32> to vector<4x128xf32>
    %24 = arith.mulf %19, %23 : vector<4x128xf32>
    %c0_9 = arith.constant 0 : index
    %c0_10 = arith.constant 0 : index
    %c0_11 = arith.constant 0 : index
    %25 = vector.load %arg3[%c0_9, %c0_10, %c0_11] : memref<14x32x32xbf16, #tpu.memory_space<vmem>>, vector<1x32x32xbf16>
    %26 = vector.shape_cast %25 : vector<1x32x32xbf16> to vector<32x32xbf16>
    %27 = vector.extract_strided_slice %26 {offsets = [0, 0], sizes = [32, 4], strides = [1, 1]} : vector<32x32xbf16> to vector<32x4xbf16>
    %28 = arith.truncf %24 : vector<4x128xf32> to vector<4x128xbf16>
    %cst_12 = arith.constant dense<0.000000e+00> : vector<32x128xf32>
    %29 = tpu.matmul %27, %28, %cst_12 {dimension_numbers = #tpu.dot_dimension_numbers<[1], [0], [0], [1], [0, 0, 1, 1], [], []>} : vector<32x4xbf16>, vector<4x128xbf16>, vector<32x128xf32> -> vector<32x128xf32>
    %cst_13 = arith.constant dense<0.000000e+00> : vector<32xf32>
    %30 = vector.multi_reduction <add>, %29, %cst_13 [1] : vector<32x128xf32> to vector<32xf32>
    %31 = vector.shape_cast %30 : vector<32xf32> to vector<32x1xf32>
    %cst_14 = arith.constant 1.280000e+02 : f32
    %32 = vector.broadcast %cst_14 : f32 to vector<32x1xf32>
    %33 = arith.divf %31, %32 : vector<32x1xf32>
    %34 = arith.mulf %29, %29 : vector<32x128xf32>
    %cst_15 = arith.constant dense<0.000000e+00> : vector<32xf32>
    %35 = vector.multi_reduction <add>, %34, %cst_15 [1] : vector<32x128xf32> to vector<32xf32>
    %36 = vector.shape_cast %35 : vector<32xf32> to vector<32x1xf32>
    %cst_16 = arith.constant 1.280000e+02 : f32
    %37 = vector.broadcast %cst_16 : f32 to vector<32x1xf32>
    %38 = arith.divf %36, %37 : vector<32x1xf32>
    %39 = arith.mulf %33, %33 : vector<32x1xf32>
    %40 = arith.subf %38, %39 : vector<32x1xf32>
    %cst_17 = arith.constant 0.000000e+00 : f32
    %41 = vector.broadcast %cst_17 : f32 to vector<32x1xf32>
    %42 = arith.maximumf %40, %41 : vector<32x1xf32>
    %43 = vector.broadcast %33 : vector<32x1xf32> to vector<32x128xf32>
    %44 = arith.subf %29, %43 : vector<32x128xf32>
    %cst_18 = arith.constant 9.99999974E-6 : f32
    %45 = vector.broadcast %cst_18 : f32 to vector<32x1xf32>
    %46 = arith.addf %42, %45 : vector<32x1xf32>
    %47 = math.rsqrt %46 : vector<32x1xf32>
    %48 = vector.broadcast %47 : vector<32x1xf32> to vector<32x128xf32>
    %49 = arith.mulf %44, %48 : vector<32x128xf32>
    %cst_19 = arith.constant 0.000000e+00 : f32
    %50 = vector.broadcast %cst_19 : f32 to vector<32x128xf32>
    %51 = arith.maximumf %49, %50 : vector<32x128xf32>
    %c8 = arith.constant 8 : index
    %c0_20 = arith.constant 0 : index
    %52 = vector.load %arg1[%c8, %c0_20] : memref<136x128xf32, #tpu.memory_space<vmem>>, vector<32x128xf32>
    %53 = arith.addf %51, %52 : vector<32x128xf32>
    %cst_21 = arith.constant 0.000000e+00 : f32
    %54 = vector.broadcast %cst_21 : f32 to vector<32x128xf32>
    %55 = arith.maximumf %53, %54 : vector<32x128xf32>
    %cst_22 = arith.constant dense<0.000000e+00> : vector<32xf32>
    %56 = vector.multi_reduction <add>, %55, %cst_22 [1] : vector<32x128xf32> to vector<32xf32>
    %57 = vector.shape_cast %56 : vector<32xf32> to vector<32x1xf32>
    %cst_23 = arith.constant 1.280000e+02 : f32
    %58 = vector.broadcast %cst_23 : f32 to vector<32x1xf32>
    %59 = arith.divf %57, %58 : vector<32x1xf32>
    %60 = arith.mulf %55, %55 : vector<32x128xf32>
    %cst_24 = arith.constant dense<0.000000e+00> : vector<32xf32>
    %61 = vector.multi_reduction <add>, %60, %cst_24 [1] : vector<32x128xf32> to vector<32xf32>
    %62 = vector.shape_cast %61 : vector<32xf32> to vector<32x1xf32>
    %cst_25 = arith.constant 1.280000e+02 : f32
    %63 = vector.broadcast %cst_25 : f32 to vector<32x1xf32>
    %64 = arith.divf %62, %63 : vector<32x1xf32>
    %65 = arith.mulf %59, %59 : vector<32x1xf32>
    %66 = arith.subf %64, %65 : vector<32x1xf32>
    %cst_26 = arith.constant 0.000000e+00 : f32
    %67 = vector.broadcast %cst_26 : f32 to vector<32x1xf32>
    %68 = arith.maximumf %66, %67 : vector<32x1xf32>
    %69 = vector.broadcast %59 : vector<32x1xf32> to vector<32x128xf32>
    %70 = arith.subf %55, %69 : vector<32x128xf32>
    %cst_27 = arith.constant 9.99999974E-6 : f32
    %71 = vector.broadcast %cst_27 : f32 to vector<32x1xf32>
    %72 = arith.addf %68, %71 : vector<32x1xf32>
    %73 = math.rsqrt %72 : vector<32x1xf32>
    %74 = vector.broadcast %73 : vector<32x1xf32> to vector<32x128xf32>
    %75 = arith.mulf %70, %74 : vector<32x128xf32>
    %c1 = arith.constant 1 : index
    %c0_28 = arith.constant 0 : index
    %c0_29 = arith.constant 0 : index
    %76 = vector.load %arg3[%c1, %c0_28, %c0_29] : memref<14x32x32xbf16, #tpu.memory_space<vmem>>, vector<1x32x32xbf16>
    %77 = vector.shape_cast %76 : vector<1x32x32xbf16> to vector<32x32xbf16>
    %78 = arith.truncf %75 : vector<32x128xf32> to vector<32x128xbf16>
    %cst_30 = arith.constant dense<0.000000e+00> : vector<32x128xf32>
    %79 = tpu.matmul %77, %78, %cst_30 {dimension_numbers = #tpu.dot_dimension_numbers<[1], [0], [0], [1], [0, 0, 1, 1], [], []>} : vector<32x32xbf16>, vector<32x128xbf16>, vector<32x128xf32> -> vector<32x128xf32>
    %c2 = arith.constant 2 : index
    %c0_31 = arith.constant 0 : index
    %c0_32 = arith.constant 0 : index
    %80 = vector.load %arg3[%c2, %c0_31, %c0_32] : memref<14x32x32xbf16, #tpu.memory_space<vmem>>, vector<1x32x32xbf16>
    %81 = vector.shape_cast %80 : vector<1x32x32xbf16> to vector<32x32xbf16>
    %82 = vector.extract_strided_slice %81 {offsets = [0, 0], sizes = [32, 4], strides = [1, 1]} : vector<32x32xbf16> to vector<32x4xbf16>
    %83 = arith.truncf %0 : vector<4x128xf32> to vector<4x128xbf16>
    %cst_33 = arith.constant dense<0.000000e+00> : vector<32x128xf32>
    %84 = tpu.matmul %82, %83, %cst_33 {dimension_numbers = #tpu.dot_dimension_numbers<[1], [0], [0], [1], [0, 0, 1, 1], [], []>} : vector<32x4xbf16>, vector<4x128xbf16>, vector<32x128xf32> -> vector<32x128xf32>
    %cst_34 = arith.constant dense<0.000000e+00> : vector<32xf32>
    %85 = vector.multi_reduction <add>, %84, %cst_34 [1] : vector<32x128xf32> to vector<32xf32>
    %86 = vector.shape_cast %85 : vector<32xf32> to vector<32x1xf32>
    %cst_35 = arith.constant 1.280000e+02 : f32
    %87 = vector.broadcast %cst_35 : f32 to vector<32x1xf32>
    %88 = arith.divf %86, %87 : vector<32x1xf32>
    %89 = arith.mulf %84, %84 : vector<32x128xf32>
    %cst_36 = arith.constant dense<0.000000e+00> : vector<32xf32>
    %90 = vector.multi_reduction <add>, %89, %cst_36 [1] : vector<32x128xf32> to vector<32xf32>
    %91 = vector.shape_cast %90 : vector<32xf32> to vector<32x1xf32>
    %cst_37 = arith.constant 1.280000e+02 : f32
    %92 = vector.broadcast %cst_37 : f32 to vector<32x1xf32>
    %93 = arith.divf %91, %92 : vector<32x1xf32>
    %94 = arith.mulf %88, %88 : vector<32x1xf32>
    %95 = arith.subf %93, %94 : vector<32x1xf32>
    %cst_38 = arith.constant 0.000000e+00 : f32
    %96 = vector.broadcast %cst_38 : f32 to vector<32x1xf32>
    %97 = arith.maximumf %95, %96 : vector<32x1xf32>
    %98 = vector.broadcast %88 : vector<32x1xf32> to vector<32x128xf32>
    %99 = arith.subf %84, %98 : vector<32x128xf32>
    %cst_39 = arith.constant 9.99999974E-6 : f32
    %100 = vector.broadcast %cst_39 : f32 to vector<32x1xf32>
    %101 = arith.addf %97, %100 : vector<32x1xf32>
    %102 = math.rsqrt %101 : vector<32x1xf32>
    %103 = vector.broadcast %102 : vector<32x1xf32> to vector<32x128xf32>
    %104 = arith.mulf %99, %103 : vector<32x128xf32>
    %cst_40 = arith.constant dense<0.000000e+00> : vector<32xf32>
    %105 = vector.multi_reduction <add>, %79, %cst_40 [1] : vector<32x128xf32> to vector<32xf32>
    %106 = vector.shape_cast %105 : vector<32xf32> to vector<32x1xf32>
    %cst_41 = arith.constant 1.280000e+02 : f32
    %107 = vector.broadcast %cst_41 : f32 to vector<32x1xf32>
    %108 = arith.divf %106, %107 : vector<32x1xf32>
    %109 = arith.mulf %79, %79 : vector<32x128xf32>
    %cst_42 = arith.constant dense<0.000000e+00> : vector<32xf32>
    %110 = vector.multi_reduction <add>, %109, %cst_42 [1] : vector<32x128xf32> to vector<32xf32>
    %111 = vector.shape_cast %110 : vector<32xf32> to vector<32x1xf32>
    %cst_43 = arith.constant 1.280000e+02 : f32
    %112 = vector.broadcast %cst_43 : f32 to vector<32x1xf32>
    %113 = arith.divf %111, %112 : vector<32x1xf32>
    %114 = arith.mulf %108, %108 : vector<32x1xf32>
    %115 = arith.subf %113, %114 : vector<32x1xf32>
    %cst_44 = arith.constant 0.000000e+00 : f32
    %116 = vector.broadcast %cst_44 : f32 to vector<32x1xf32>
    %117 = arith.maximumf %115, %116 : vector<32x1xf32>
    %118 = vector.broadcast %108 : vector<32x1xf32> to vector<32x128xf32>
    %119 = arith.subf %79, %118 : vector<32x128xf32>
    %cst_45 = arith.constant 9.99999974E-6 : f32
    %120 = vector.broadcast %cst_45 : f32 to vector<32x1xf32>
    %121 = arith.addf %117, %120 : vector<32x1xf32>
    %122 = math.rsqrt %121 : vector<32x1xf32>
    %123 = vector.broadcast %122 : vector<32x1xf32> to vector<32x128xf32>
    %124 = arith.mulf %119, %123 : vector<32x128xf32>
    %125 = arith.addf %124, %104 : vector<32x128xf32>
    %cst_46 = arith.constant 0.000000e+00 : f32
    %126 = vector.broadcast %cst_46 : f32 to vector<32x128xf32>
    %127 = arith.maximumf %125, %126 : vector<32x128xf32>
    %c40 = arith.constant 40 : index
    %c0_47 = arith.constant 0 : index
    %128 = vector.load %arg1[%c40, %c0_47] : memref<136x128xf32, #tpu.memory_space<vmem>>, vector<32x128xf32>
    %129 = arith.addf %127, %128 : vector<32x128xf32>
    %cst_48 = arith.constant 0.000000e+00 : f32
    %130 = vector.broadcast %cst_48 : f32 to vector<32x128xf32>
    %131 = arith.maximumf %129, %130 : vector<32x128xf32>
    %cst_49 = arith.constant dense<0.000000e+00> : vector<32xf32>
    %132 = vector.multi_reduction <add>, %131, %cst_49 [1] : vector<32x128xf32> to vector<32xf32>
    %133 = vector.shape_cast %132 : vector<32xf32> to vector<32x1xf32>
    %cst_50 = arith.constant 1.280000e+02 : f32
    %134 = vector.broadcast %cst_50 : f32 to vector<32x1xf32>
    %135 = arith.divf %133, %134 : vector<32x1xf32>
    %136 = arith.mulf %131, %131 : vector<32x128xf32>
    %cst_51 = arith.constant dense<0.000000e+00> : vector<32xf32>
    %137 = vector.multi_reduction <add>, %136, %cst_51 [1] : vector<32x128xf32> to vector<32xf32>
    %138 = vector.shape_cast %137 : vector<32xf32> to vector<32x1xf32>
    %cst_52 = arith.constant 1.280000e+02 : f32
    %139 = vector.broadcast %cst_52 : f32 to vector<32x1xf32>
    %140 = arith.divf %138, %139 : vector<32x1xf32>
    %141 = arith.mulf %135, %135 : vector<32x1xf32>
    %142 = arith.subf %140, %141 : vector<32x1xf32>
    %cst_53 = arith.constant 0.000000e+00 : f32
    %143 = vector.broadcast %cst_53 : f32 to vector<32x1xf32>
    %144 = arith.maximumf %142, %143 : vector<32x1xf32>
    %145 = vector.broadcast %135 : vector<32x1xf32> to vector<32x128xf32>
    %146 = arith.subf %131, %145 : vector<32x128xf32>
    %cst_54 = arith.constant 9.99999974E-6 : f32
    %147 = vector.broadcast %cst_54 : f32 to vector<32x1xf32>
    %148 = arith.addf %144, %147 : vector<32x1xf32>
    %149 = math.rsqrt %148 : vector<32x1xf32>
    %150 = vector.broadcast %149 : vector<32x1xf32> to vector<32x128xf32>
    %151 = arith.mulf %146, %150 : vector<32x128xf32>
    %c3 = arith.constant 3 : index
    %c0_55 = arith.constant 0 : index
    %c0_56 = arith.constant 0 : index
    %152 = vector.load %arg3[%c3, %c0_55, %c0_56] : memref<14x32x32xbf16, #tpu.memory_space<vmem>>, vector<1x32x32xbf16>
    %153 = vector.shape_cast %152 : vector<1x32x32xbf16> to vector<32x32xbf16>
    %154 = arith.truncf %151 : vector<32x128xf32> to vector<32x128xbf16>
    %cst_57 = arith.constant dense<0.000000e+00> : vector<32x128xf32>
    %155 = tpu.matmul %153, %154, %cst_57 {dimension_numbers = #tpu.dot_dimension_numbers<[1], [0], [0], [1], [0, 0, 1, 1], [], []>} : vector<32x32xbf16>, vector<32x128xbf16>, vector<32x128xf32> -> vector<32x128xf32>
    %cst_58 = arith.constant dense<0.000000e+00> : vector<32xf32>
    %156 = vector.multi_reduction <add>, %155, %cst_58 [1] : vector<32x128xf32> to vector<32xf32>
    %157 = vector.shape_cast %156 : vector<32xf32> to vector<32x1xf32>
    %cst_59 = arith.constant 1.280000e+02 : f32
    %158 = vector.broadcast %cst_59 : f32 to vector<32x1xf32>
    %159 = arith.divf %157, %158 : vector<32x1xf32>
    %160 = arith.mulf %155, %155 : vector<32x128xf32>
    %cst_60 = arith.constant dense<0.000000e+00> : vector<32xf32>
    %161 = vector.multi_reduction <add>, %160, %cst_60 [1] : vector<32x128xf32> to vector<32xf32>
    %162 = vector.shape_cast %161 : vector<32xf32> to vector<32x1xf32>
    %cst_61 = arith.constant 1.280000e+02 : f32
    %163 = vector.broadcast %cst_61 : f32 to vector<32x1xf32>
    %164 = arith.divf %162, %163 : vector<32x1xf32>
    %165 = arith.mulf %159, %159 : vector<32x1xf32>
    %166 = arith.subf %164, %165 : vector<32x1xf32>
    %cst_62 = arith.constant 0.000000e+00 : f32
    %167 = vector.broadcast %cst_62 : f32 to vector<32x1xf32>
    %168 = arith.maximumf %166, %167 : vector<32x1xf32>
    %169 = vector.broadcast %159 : vector<32x1xf32> to vector<32x128xf32>
    %170 = arith.subf %155, %169 : vector<32x128xf32>
    %cst_63 = arith.constant 9.99999974E-6 : f32
    %171 = vector.broadcast %cst_63 : f32 to vector<32x1xf32>
    %172 = arith.addf %168, %171 : vector<32x1xf32>
    %173 = math.rsqrt %172 : vector<32x1xf32>
    %174 = vector.broadcast %173 : vector<32x1xf32> to vector<32x128xf32>
    %175 = arith.mulf %170, %174 : vector<32x128xf32>
    %cst_64 = arith.constant 0.000000e+00 : f32
    %176 = vector.broadcast %cst_64 : f32 to vector<32x128xf32>
    %177 = arith.maximumf %175, %176 : vector<32x128xf32>
    %c72 = arith.constant 72 : index
    %c0_65 = arith.constant 0 : index
    %178 = vector.load %arg1[%c72, %c0_65] : memref<136x128xf32, #tpu.memory_space<vmem>>, vector<32x128xf32>
    %179 = arith.addf %177, %178 : vector<32x128xf32>
    %cst_66 = arith.constant 0.000000e+00 : f32
    %180 = vector.broadcast %cst_66 : f32 to vector<32x128xf32>
    %181 = arith.maximumf %179, %180 : vector<32x128xf32>
    %cst_67 = arith.constant dense<0.000000e+00> : vector<32xf32>
    %182 = vector.multi_reduction <add>, %181, %cst_67 [1] : vector<32x128xf32> to vector<32xf32>
    %183 = vector.shape_cast %182 : vector<32xf32> to vector<32x1xf32>
    %cst_68 = arith.constant 1.280000e+02 : f32
    %184 = vector.broadcast %cst_68 : f32 to vector<32x1xf32>
    %185 = arith.divf %183, %184 : vector<32x1xf32>
    %186 = arith.mulf %181, %181 : vector<32x128xf32>
    %cst_69 = arith.constant dense<0.000000e+00> : vector<32xf32>
    %187 = vector.multi_reduction <add>, %186, %cst_69 [1] : vector<32x128xf32> to vector<32xf32>
    %188 = vector.shape_cast %187 : vector<32xf32> to vector<32x1xf32>
    %cst_70 = arith.constant 1.280000e+02 : f32
    %189 = vector.broadcast %cst_70 : f32 to vector<32x1xf32>
    %190 = arith.divf %188, %189 : vector<32x1xf32>
    %191 = arith.mulf %185, %185 : vector<32x1xf32>
    %192 = arith.subf %190, %191 : vector<32x1xf32>
    %cst_71 = arith.constant 0.000000e+00 : f32
    %193 = vector.broadcast %cst_71 : f32 to vector<32x1xf32>
    %194 = arith.maximumf %192, %193 : vector<32x1xf32>
    %195 = vector.broadcast %185 : vector<32x1xf32> to vector<32x128xf32>
    %196 = arith.subf %181, %195 : vector<32x128xf32>
    %cst_72 = arith.constant 9.99999974E-6 : f32
    %197 = vector.broadcast %cst_72 : f32 to vector<32x1xf32>
    %198 = arith.addf %194, %197 : vector<32x1xf32>
    %199 = math.rsqrt %198 : vector<32x1xf32>
    %200 = vector.broadcast %199 : vector<32x1xf32> to vector<32x128xf32>
    %201 = arith.mulf %196, %200 : vector<32x128xf32>
    %c4 = arith.constant 4 : index
    %c0_73 = arith.constant 0 : index
    %c0_74 = arith.constant 0 : index
    %202 = vector.load %arg3[%c4, %c0_73, %c0_74] : memref<14x32x32xbf16, #tpu.memory_space<vmem>>, vector<1x32x32xbf16>
    %203 = vector.shape_cast %202 : vector<1x32x32xbf16> to vector<32x32xbf16>
    %204 = arith.truncf %201 : vector<32x128xf32> to vector<32x128xbf16>
    %cst_75 = arith.constant dense<0.000000e+00> : vector<32x128xf32>
    %205 = tpu.matmul %203, %204, %cst_75 {dimension_numbers = #tpu.dot_dimension_numbers<[1], [0], [0], [1], [0, 0, 1, 1], [], []>} : vector<32x32xbf16>, vector<32x128xbf16>, vector<32x128xf32> -> vector<32x128xf32>
    %cst_76 = arith.constant dense<0.000000e+00> : vector<32xf32>
    %206 = vector.multi_reduction <add>, %205, %cst_76 [1] : vector<32x128xf32> to vector<32xf32>
    %207 = vector.shape_cast %206 : vector<32xf32> to vector<32x1xf32>
    %cst_77 = arith.constant 1.280000e+02 : f32
    %208 = vector.broadcast %cst_77 : f32 to vector<32x1xf32>
    %209 = arith.divf %207, %208 : vector<32x1xf32>
    %210 = arith.mulf %205, %205 : vector<32x128xf32>
    %cst_78 = arith.constant dense<0.000000e+00> : vector<32xf32>
    %211 = vector.multi_reduction <add>, %210, %cst_78 [1] : vector<32x128xf32> to vector<32xf32>
    %212 = vector.shape_cast %211 : vector<32xf32> to vector<32x1xf32>
    %cst_79 = arith.constant 1.280000e+02 : f32
    %213 = vector.broadcast %cst_79 : f32 to vector<32x1xf32>
    %214 = arith.divf %212, %213 : vector<32x1xf32>
    %215 = arith.mulf %209, %209 : vector<32x1xf32>
    %216 = arith.subf %214, %215 : vector<32x1xf32>
    %cst_80 = arith.constant 0.000000e+00 : f32
    %217 = vector.broadcast %cst_80 : f32 to vector<32x1xf32>
    %218 = arith.maximumf %216, %217 : vector<32x1xf32>
    %219 = vector.broadcast %209 : vector<32x1xf32> to vector<32x128xf32>
    %220 = arith.subf %205, %219 : vector<32x128xf32>
    %cst_81 = arith.constant 9.99999974E-6 : f32
    %221 = vector.broadcast %cst_81 : f32 to vector<32x1xf32>
    %222 = arith.addf %218, %221 : vector<32x1xf32>
    %223 = math.rsqrt %222 : vector<32x1xf32>
    %224 = vector.broadcast %223 : vector<32x1xf32> to vector<32x128xf32>
    %225 = arith.mulf %220, %224 : vector<32x128xf32>
    %226 = arith.addf %225, %127 : vector<32x128xf32>
    %cst_82 = arith.constant 0.000000e+00 : f32
    %227 = vector.broadcast %cst_82 : f32 to vector<32x128xf32>
    %228 = arith.maximumf %226, %227 : vector<32x128xf32>
    %229 = arith.truncf %228 : vector<32x128xf32> to vector<32x128xbf16>
    %c0_83 = arith.constant 0 : index
    %c0_84 = arith.constant 0 : index
    %230 = vector.load %arg4[%c0_83, %c0_84] : memref<128x512xbf16, #tpu.memory_space<vmem>>, vector<128x512xbf16>
    %cst_85 = arith.constant dense<0.000000e+00> : vector<32x512xf32>
    %231 = tpu.matmul %229, %230, %cst_85 {dimension_numbers = #tpu.dot_dimension_numbers<[1], [0], [0], [1], [0, 0, 1, 1], [], []>} : vector<32x128xbf16>, vector<128x512xbf16>, vector<32x512xf32> -> vector<32x512xf32>
    %c0_86 = arith.constant 0 : index
    %c0_87 = arith.constant 0 : index
    %232 = vector.load %arg2[%c0_86, %c0_87] : memref<56x512xf32, #tpu.memory_space<vmem>>, vector<32x512xf32>
    %233 = arith.addf %231, %232 : vector<32x512xf32>
    %cst_88 = arith.constant 0.000000e+00 : f32
    %234 = vector.broadcast %cst_88 : f32 to vector<32x512xf32>
    %235 = arith.maximumf %233, %234 : vector<32x512xf32>
    %cst_89 = arith.constant dense<0.000000e+00> : vector<32xf32>
    %236 = vector.multi_reduction <add>, %235, %cst_89 [1] : vector<32x512xf32> to vector<32xf32>
    %237 = vector.shape_cast %236 : vector<32xf32> to vector<32x1xf32>
    %cst_90 = arith.constant 5.120000e+02 : f32
    %238 = vector.broadcast %cst_90 : f32 to vector<32x1xf32>
    %239 = arith.divf %237, %238 : vector<32x1xf32>
    %240 = arith.mulf %235, %235 : vector<32x512xf32>
    %cst_91 = arith.constant dense<0.000000e+00> : vector<32xf32>
    %241 = vector.multi_reduction <add>, %240, %cst_91 [1] : vector<32x512xf32> to vector<32xf32>
    %242 = vector.shape_cast %241 : vector<32xf32> to vector<32x1xf32>
    %cst_92 = arith.constant 5.120000e+02 : f32
    %243 = vector.broadcast %cst_92 : f32 to vector<32x1xf32>
    %244 = arith.divf %242, %243 : vector<32x1xf32>
    %245 = arith.mulf %239, %239 : vector<32x1xf32>
    %246 = arith.subf %244, %245 : vector<32x1xf32>
    %cst_93 = arith.constant 0.000000e+00 : f32
    %247 = vector.broadcast %cst_93 : f32 to vector<32x1xf32>
    %248 = arith.maximumf %246, %247 : vector<32x1xf32>
    %249 = vector.broadcast %239 : vector<32x1xf32> to vector<32x512xf32>
    %250 = arith.subf %235, %249 : vector<32x512xf32>
    %cst_94 = arith.constant 9.99999974E-6 : f32
    %251 = vector.broadcast %cst_94 : f32 to vector<32x1xf32>
    %252 = arith.addf %248, %251 : vector<32x1xf32>
    %253 = math.rsqrt %252 : vector<32x1xf32>
    %254 = vector.broadcast %253 : vector<32x1xf32> to vector<32x512xf32>
    %255 = arith.mulf %250, %254 : vector<32x512xf32>
    %c5 = arith.constant 5 : index
    %c0_95 = arith.constant 0 : index
    %c0_96 = arith.constant 0 : index
    %256 = vector.load %arg3[%c5, %c0_95, %c0_96] : memref<14x32x32xbf16, #tpu.memory_space<vmem>>, vector<1x32x32xbf16>
    %257 = vector.shape_cast %256 : vector<1x32x32xbf16> to vector<32x32xbf16>
    %258 = vector.extract_strided_slice %257 {offsets = [0, 0], sizes = [16, 32], strides = [1, 1]} : vector<32x32xbf16> to vector<16x32xbf16>
    %259 = arith.truncf %255 : vector<32x512xf32> to vector<32x512xbf16>
    %cst_97 = arith.constant dense<0.000000e+00> : vector<16x512xf32>
    %260 = tpu.matmul %258, %259, %cst_97 {dimension_numbers = #tpu.dot_dimension_numbers<[1], [0], [0], [1], [0, 0, 1, 1], [], []>} : vector<16x32xbf16>, vector<32x512xbf16>, vector<16x512xf32> -> vector<16x512xf32>
    %261 = arith.truncf %260 : vector<16x512xf32> to vector<16x512xbf16>
    %c0_98 = arith.constant 0 : index
    %c0_99 = arith.constant 0 : index
    %262 = vector.load %arg5[%c0_98, %c0_99] : memref<512x512xbf16, #tpu.memory_space<vmem>>, vector<512x512xbf16>
    %cst_100 = arith.constant dense<0.000000e+00> : vector<16x512xf32>
    %263 = tpu.matmul %261, %262, %cst_100 {dimension_numbers = #tpu.dot_dimension_numbers<[1], [0], [0], [1], [0, 0, 1, 1], [], []>} : vector<16x512xbf16>, vector<512x512xbf16>, vector<16x512xf32> -> vector<16x512xf32>
    %264 = vector.extract_strided_slice %263 {offsets = [0, 0], sizes = [16, 128], strides = [1, 1]} : vector<16x512xf32> to vector<16x128xf32>
    %265 = vector.extract_strided_slice %263 {offsets = [0, 128], sizes = [16, 128], strides = [1, 1]} : vector<16x512xf32> to vector<16x128xf32>
    %266 = arith.maximumf %264, %265 : vector<16x128xf32>
    %267 = vector.extract_strided_slice %263 {offsets = [0, 256], sizes = [16, 128], strides = [1, 1]} : vector<16x512xf32> to vector<16x128xf32>
    %268 = vector.extract_strided_slice %263 {offsets = [0, 384], sizes = [16, 128], strides = [1, 1]} : vector<16x512xf32> to vector<16x128xf32>
    %269 = arith.maximumf %267, %268 : vector<16x128xf32>
    %270 = arith.maximumf %266, %269 : vector<16x128xf32>
    %cst_101 = arith.constant dense<0.000000e+00> : vector<16xf32>
    %271 = vector.multi_reduction <add>, %270, %cst_101 [1] : vector<16x128xf32> to vector<16xf32>
    %272 = vector.shape_cast %271 : vector<16xf32> to vector<16x1xf32>
    %cst_102 = arith.constant 1.280000e+02 : f32
    %273 = vector.broadcast %cst_102 : f32 to vector<16x1xf32>
    %274 = arith.divf %272, %273 : vector<16x1xf32>
    %275 = arith.mulf %270, %270 : vector<16x128xf32>
    %cst_103 = arith.constant dense<0.000000e+00> : vector<16xf32>
    %276 = vector.multi_reduction <add>, %275, %cst_103 [1] : vector<16x128xf32> to vector<16xf32>
    %277 = vector.shape_cast %276 : vector<16xf32> to vector<16x1xf32>
    %cst_104 = arith.constant 1.280000e+02 : f32
    %278 = vector.broadcast %cst_104 : f32 to vector<16x1xf32>
    %279 = arith.divf %277, %278 : vector<16x1xf32>
    %280 = arith.mulf %274, %274 : vector<16x1xf32>
    %281 = arith.subf %279, %280 : vector<16x1xf32>
    %cst_105 = arith.constant 0.000000e+00 : f32
    %282 = vector.broadcast %cst_105 : f32 to vector<16x1xf32>
    %283 = arith.maximumf %281, %282 : vector<16x1xf32>
    %284 = vector.broadcast %274 : vector<16x1xf32> to vector<16x128xf32>
    %285 = arith.subf %270, %284 : vector<16x128xf32>
    %cst_106 = arith.constant 9.99999974E-6 : f32
    %286 = vector.broadcast %cst_106 : f32 to vector<16x1xf32>
    %287 = arith.addf %283, %286 : vector<16x1xf32>
    %288 = math.rsqrt %287 : vector<16x1xf32>
    %289 = vector.broadcast %288 : vector<16x1xf32> to vector<16x128xf32>
    %290 = arith.mulf %285, %289 : vector<16x128xf32>
    %cst_107 = arith.constant 0.000000e+00 : f32
    %291 = vector.broadcast %cst_107 : f32 to vector<16x128xf32>
    %292 = arith.maximumf %290, %291 : vector<16x128xf32>
    %c104 = arith.constant 104 : index
    %c0_108 = arith.constant 0 : index
    %293 = vector.load %arg1[%c104, %c0_108] : memref<136x128xf32, #tpu.memory_space<vmem>>, vector<16x128xf32>
    %294 = arith.addf %292, %293 : vector<16x128xf32>
    %cst_109 = arith.constant 0.000000e+00 : f32
    %295 = vector.broadcast %cst_109 : f32 to vector<16x128xf32>
    %296 = arith.maximumf %294, %295 : vector<16x128xf32>
    %cst_110 = arith.constant dense<0.000000e+00> : vector<16xf32>
    %297 = vector.multi_reduction <add>, %296, %cst_110 [1] : vector<16x128xf32> to vector<16xf32>
    %298 = vector.shape_cast %297 : vector<16xf32> to vector<16x1xf32>
    %cst_111 = arith.constant 1.280000e+02 : f32
    %299 = vector.broadcast %cst_111 : f32 to vector<16x1xf32>
    %300 = arith.divf %298, %299 : vector<16x1xf32>
    %301 = arith.mulf %296, %296 : vector<16x128xf32>
    %cst_112 = arith.constant dense<0.000000e+00> : vector<16xf32>
    %302 = vector.multi_reduction <add>, %301, %cst_112 [1] : vector<16x128xf32> to vector<16xf32>
    %303 = vector.shape_cast %302 : vector<16xf32> to vector<16x1xf32>
    %cst_113 = arith.constant 1.280000e+02 : f32
    %304 = vector.broadcast %cst_113 : f32 to vector<16x1xf32>
    %305 = arith.divf %303, %304 : vector<16x1xf32>
    %306 = arith.mulf %300, %300 : vector<16x1xf32>
    %307 = arith.subf %305, %306 : vector<16x1xf32>
    %cst_114 = arith.constant 0.000000e+00 : f32
    %308 = vector.broadcast %cst_114 : f32 to vector<16x1xf32>
    %309 = arith.maximumf %307, %308 : vector<16x1xf32>
    %310 = vector.broadcast %300 : vector<16x1xf32> to vector<16x128xf32>
    %311 = arith.subf %296, %310 : vector<16x128xf32>
    %cst_115 = arith.constant 9.99999974E-6 : f32
    %312 = vector.broadcast %cst_115 : f32 to vector<16x1xf32>
    %313 = arith.addf %309, %312 : vector<16x1xf32>
    %314 = math.rsqrt %313 : vector<16x1xf32>
    %315 = vector.broadcast %314 : vector<16x1xf32> to vector<16x128xf32>
    %316 = arith.mulf %311, %315 : vector<16x128xf32>
    %c6 = arith.constant 6 : index
    %c0_116 = arith.constant 0 : index
    %c0_117 = arith.constant 0 : index
    %317 = vector.load %arg3[%c6, %c0_116, %c0_117] : memref<14x32x32xbf16, #tpu.memory_space<vmem>>, vector<1x32x32xbf16>
    %318 = vector.shape_cast %317 : vector<1x32x32xbf16> to vector<32x32xbf16>
    %319 = vector.extract_strided_slice %318 {offsets = [0, 0], sizes = [16, 16], strides = [1, 1]} : vector<32x32xbf16> to vector<16x16xbf16>
    %320 = arith.truncf %316 : vector<16x128xf32> to vector<16x128xbf16>
    %cst_118 = arith.constant dense<0.000000e+00> : vector<16x128xf32>
    %321 = tpu.matmul %319, %320, %cst_118 {dimension_numbers = #tpu.dot_dimension_numbers<[1], [0], [0], [1], [0, 0, 1, 1], [], []>} : vector<16x16xbf16>, vector<16x128xbf16>, vector<16x128xf32> -> vector<16x128xf32>
    %c7 = arith.constant 7 : index
    %c0_119 = arith.constant 0 : index
    %c0_120 = arith.constant 0 : index
    %322 = vector.load %arg3[%c7, %c0_119, %c0_120] : memref<14x32x32xbf16, #tpu.memory_space<vmem>>, vector<1x32x32xbf16>
    %323 = vector.shape_cast %322 : vector<1x32x32xbf16> to vector<32x32xbf16>
    %324 = vector.extract_strided_slice %323 {offsets = [0, 0], sizes = [16, 32], strides = [1, 1]} : vector<32x32xbf16> to vector<16x32xbf16>
    %325 = arith.truncf %228 : vector<32x128xf32> to vector<32x128xbf16>
    %cst_121 = arith.constant dense<0.000000e+00> : vector<16x128xf32>
    %326 = tpu.matmul %324, %325, %cst_121 {dimension_numbers = #tpu.dot_dimension_numbers<[1], [0], [0], [1], [0, 0, 1, 1], [], []>} : vector<16x32xbf16>, vector<32x128xbf16>, vector<16x128xf32> -> vector<16x128xf32>
    %cst_122 = arith.constant dense<0.000000e+00> : vector<16xf32>
    %327 = vector.multi_reduction <add>, %326, %cst_122 [1] : vector<16x128xf32> to vector<16xf32>
    %328 = vector.shape_cast %327 : vector<16xf32> to vector<16x1xf32>
    %cst_123 = arith.constant 1.280000e+02 : f32
    %329 = vector.broadcast %cst_123 : f32 to vector<16x1xf32>
    %330 = arith.divf %328, %329 : vector<16x1xf32>
    %331 = arith.mulf %326, %326 : vector<16x128xf32>
    %cst_124 = arith.constant dense<0.000000e+00> : vector<16xf32>
    %332 = vector.multi_reduction <add>, %331, %cst_124 [1] : vector<16x128xf32> to vector<16xf32>
    %333 = vector.shape_cast %332 : vector<16xf32> to vector<16x1xf32>
    %cst_125 = arith.constant 1.280000e+02 : f32
    %334 = vector.broadcast %cst_125 : f32 to vector<16x1xf32>
    %335 = arith.divf %333, %334 : vector<16x1xf32>
    %336 = arith.mulf %330, %330 : vector<16x1xf32>
    %337 = arith.subf %335, %336 : vector<16x1xf32>
    %cst_126 = arith.constant 0.000000e+00 : f32
    %338 = vector.broadcast %cst_126 : f32 to vector<16x1xf32>
    %339 = arith.maximumf %337, %338 : vector<16x1xf32>
    %340 = vector.broadcast %330 : vector<16x1xf32> to vector<16x128xf32>
    %341 = arith.subf %326, %340 : vector<16x128xf32>
    %cst_127 = arith.constant 9.99999974E-6 : f32
    %342 = vector.broadcast %cst_127 : f32 to vector<16x1xf32>
    %343 = arith.addf %339, %342 : vector<16x1xf32>
    %344 = math.rsqrt %343 : vector<16x1xf32>
    %345 = vector.broadcast %344 : vector<16x1xf32> to vector<16x128xf32>
    %346 = arith.mulf %341, %345 : vector<16x128xf32>
    %cst_128 = arith.constant dense<0.000000e+00> : vector<16xf32>
    %347 = vector.multi_reduction <add>, %321, %cst_128 [1] : vector<16x128xf32> to vector<16xf32>
    %348 = vector.shape_cast %347 : vector<16xf32> to vector<16x1xf32>
    %cst_129 = arith.constant 1.280000e+02 : f32
    %349 = vector.broadcast %cst_129 : f32 to vector<16x1xf32>
    %350 = arith.divf %348, %349 : vector<16x1xf32>
    %351 = arith.mulf %321, %321 : vector<16x128xf32>
    %cst_130 = arith.constant dense<0.000000e+00> : vector<16xf32>
    %352 = vector.multi_reduction <add>, %351, %cst_130 [1] : vector<16x128xf32> to vector<16xf32>
    %353 = vector.shape_cast %352 : vector<16xf32> to vector<16x1xf32>
    %cst_131 = arith.constant 1.280000e+02 : f32
    %354 = vector.broadcast %cst_131 : f32 to vector<16x1xf32>
    %355 = arith.divf %353, %354 : vector<16x1xf32>
    %356 = arith.mulf %350, %350 : vector<16x1xf32>
    %357 = arith.subf %355, %356 : vector<16x1xf32>
    %cst_132 = arith.constant 0.000000e+00 : f32
    %358 = vector.broadcast %cst_132 : f32 to vector<16x1xf32>
    %359 = arith.maximumf %357, %358 : vector<16x1xf32>
    %360 = vector.broadcast %350 : vector<16x1xf32> to vector<16x128xf32>
    %361 = arith.subf %321, %360 : vector<16x128xf32>
    %cst_133 = arith.constant 9.99999974E-6 : f32
    %362 = vector.broadcast %cst_133 : f32 to vector<16x1xf32>
    %363 = arith.addf %359, %362 : vector<16x1xf32>
    %364 = math.rsqrt %363 : vector<16x1xf32>
    %365 = vector.broadcast %364 : vector<16x1xf32> to vector<16x128xf32>
    %366 = arith.mulf %361, %365 : vector<16x128xf32>
    %367 = arith.addf %366, %346 : vector<16x128xf32>
    %cst_134 = arith.constant 0.000000e+00 : f32
    %368 = vector.broadcast %cst_134 : f32 to vector<16x128xf32>
    %369 = arith.maximumf %367, %368 : vector<16x128xf32>
    %370 = arith.truncf %369 : vector<16x128xf32> to vector<16x128xbf16>
    %c0_135 = arith.constant 0 : index
    %c0_136 = arith.constant 0 : index
    %371 = vector.load %arg4[%c0_135, %c0_136] : memref<128x512xbf16, #tpu.memory_space<vmem>>, vector<128x512xbf16>
    %cst_137 = arith.constant dense<0.000000e+00> : vector<16x512xf32>
    %372 = tpu.matmul %370, %371, %cst_137 {dimension_numbers = #tpu.dot_dimension_numbers<[1], [0], [0], [1], [0, 0, 1, 1], [], []>} : vector<16x128xbf16>, vector<128x512xbf16>, vector<16x512xf32> -> vector<16x512xf32>
    %c32 = arith.constant 32 : index
    %c0_138 = arith.constant 0 : index
    %373 = vector.load %arg2[%c32, %c0_138] : memref<56x512xf32, #tpu.memory_space<vmem>>, vector<16x512xf32>
    %374 = arith.addf %372, %373 : vector<16x512xf32>
    %cst_139 = arith.constant 0.000000e+00 : f32
    %375 = vector.broadcast %cst_139 : f32 to vector<16x512xf32>
    %376 = arith.maximumf %374, %375 : vector<16x512xf32>
    %cst_140 = arith.constant dense<0.000000e+00> : vector<16xf32>
    %377 = vector.multi_reduction <add>, %376, %cst_140 [1] : vector<16x512xf32> to vector<16xf32>
    %378 = vector.shape_cast %377 : vector<16xf32> to vector<16x1xf32>
    %cst_141 = arith.constant 5.120000e+02 : f32
    %379 = vector.broadcast %cst_141 : f32 to vector<16x1xf32>
    %380 = arith.divf %378, %379 : vector<16x1xf32>
    %381 = arith.mulf %376, %376 : vector<16x512xf32>
    %cst_142 = arith.constant dense<0.000000e+00> : vector<16xf32>
    %382 = vector.multi_reduction <add>, %381, %cst_142 [1] : vector<16x512xf32> to vector<16xf32>
    %383 = vector.shape_cast %382 : vector<16xf32> to vector<16x1xf32>
    %cst_143 = arith.constant 5.120000e+02 : f32
    %384 = vector.broadcast %cst_143 : f32 to vector<16x1xf32>
    %385 = arith.divf %383, %384 : vector<16x1xf32>
    %386 = arith.mulf %380, %380 : vector<16x1xf32>
    %387 = arith.subf %385, %386 : vector<16x1xf32>
    %cst_144 = arith.constant 0.000000e+00 : f32
    %388 = vector.broadcast %cst_144 : f32 to vector<16x1xf32>
    %389 = arith.maximumf %387, %388 : vector<16x1xf32>
    %390 = vector.broadcast %380 : vector<16x1xf32> to vector<16x512xf32>
    %391 = arith.subf %376, %390 : vector<16x512xf32>
    %cst_145 = arith.constant 9.99999974E-6 : f32
    %392 = vector.broadcast %cst_145 : f32 to vector<16x1xf32>
    %393 = arith.addf %389, %392 : vector<16x1xf32>
    %394 = math.rsqrt %393 : vector<16x1xf32>
    %395 = vector.broadcast %394 : vector<16x1xf32> to vector<16x512xf32>
    %396 = arith.mulf %391, %395 : vector<16x512xf32>
    %c8_146 = arith.constant 8 : index
    %c0_147 = arith.constant 0 : index
    %c0_148 = arith.constant 0 : index
    %397 = vector.load %arg3[%c8_146, %c0_147, %c0_148] : memref<14x32x32xbf16, #tpu.memory_space<vmem>>, vector<1x32x32xbf16>
    %398 = vector.shape_cast %397 : vector<1x32x32xbf16> to vector<32x32xbf16>
    %399 = vector.extract_strided_slice %398 {offsets = [0, 0], sizes = [8, 16], strides = [1, 1]} : vector<32x32xbf16> to vector<8x16xbf16>
    %400 = arith.truncf %396 : vector<16x512xf32> to vector<16x512xbf16>
    %cst_149 = arith.constant dense<0.000000e+00> : vector<8x512xf32>
    %401 = tpu.matmul %399, %400, %cst_149 {dimension_numbers = #tpu.dot_dimension_numbers<[1], [0], [0], [1], [0, 0, 1, 1], [], []>} : vector<8x16xbf16>, vector<16x512xbf16>, vector<8x512xf32> -> vector<8x512xf32>
    %402 = arith.truncf %401 : vector<8x512xf32> to vector<8x512xbf16>
    %c0_150 = arith.constant 0 : index
    %c0_151 = arith.constant 0 : index
    %403 = vector.load %arg5[%c0_150, %c0_151] : memref<512x512xbf16, #tpu.memory_space<vmem>>, vector<512x512xbf16>
    %cst_152 = arith.constant dense<0.000000e+00> : vector<8x512xf32>
    %404 = tpu.matmul %402, %403, %cst_152 {dimension_numbers = #tpu.dot_dimension_numbers<[1], [0], [0], [1], [0, 0, 1, 1], [], []>} : vector<8x512xbf16>, vector<512x512xbf16>, vector<8x512xf32> -> vector<8x512xf32>
    %405 = vector.extract_strided_slice %404 {offsets = [0, 0], sizes = [8, 128], strides = [1, 1]} : vector<8x512xf32> to vector<8x128xf32>
    %406 = vector.extract_strided_slice %404 {offsets = [0, 128], sizes = [8, 128], strides = [1, 1]} : vector<8x512xf32> to vector<8x128xf32>
    %407 = arith.maximumf %405, %406 : vector<8x128xf32>
    %408 = vector.extract_strided_slice %404 {offsets = [0, 256], sizes = [8, 128], strides = [1, 1]} : vector<8x512xf32> to vector<8x128xf32>
    %409 = vector.extract_strided_slice %404 {offsets = [0, 384], sizes = [8, 128], strides = [1, 1]} : vector<8x512xf32> to vector<8x128xf32>
    %410 = arith.maximumf %408, %409 : vector<8x128xf32>
    %411 = arith.maximumf %407, %410 : vector<8x128xf32>
    %cst_153 = arith.constant dense<0.000000e+00> : vector<8xf32>
    %412 = vector.multi_reduction <add>, %411, %cst_153 [1] : vector<8x128xf32> to vector<8xf32>
    %413 = vector.shape_cast %412 : vector<8xf32> to vector<8x1xf32>
    %cst_154 = arith.constant 1.280000e+02 : f32
    %414 = vector.broadcast %cst_154 : f32 to vector<8x1xf32>
    %415 = arith.divf %413, %414 : vector<8x1xf32>
    %416 = arith.mulf %411, %411 : vector<8x128xf32>
    %cst_155 = arith.constant dense<0.000000e+00> : vector<8xf32>
    %417 = vector.multi_reduction <add>, %416, %cst_155 [1] : vector<8x128xf32> to vector<8xf32>
    %418 = vector.shape_cast %417 : vector<8xf32> to vector<8x1xf32>
    %cst_156 = arith.constant 1.280000e+02 : f32
    %419 = vector.broadcast %cst_156 : f32 to vector<8x1xf32>
    %420 = arith.divf %418, %419 : vector<8x1xf32>
    %421 = arith.mulf %415, %415 : vector<8x1xf32>
    %422 = arith.subf %420, %421 : vector<8x1xf32>
    %cst_157 = arith.constant 0.000000e+00 : f32
    %423 = vector.broadcast %cst_157 : f32 to vector<8x1xf32>
    %424 = arith.maximumf %422, %423 : vector<8x1xf32>
    %425 = vector.broadcast %415 : vector<8x1xf32> to vector<8x128xf32>
    %426 = arith.subf %411, %425 : vector<8x128xf32>
    %cst_158 = arith.constant 9.99999974E-6 : f32
    %427 = vector.broadcast %cst_158 : f32 to vector<8x1xf32>
    %428 = arith.addf %424, %427 : vector<8x1xf32>
    %429 = math.rsqrt %428 : vector<8x1xf32>
    %430 = vector.broadcast %429 : vector<8x1xf32> to vector<8x128xf32>
    %431 = arith.mulf %426, %430 : vector<8x128xf32>
    %cst_159 = arith.constant 0.000000e+00 : f32
    %432 = vector.broadcast %cst_159 : f32 to vector<8x128xf32>
    %433 = arith.maximumf %431, %432 : vector<8x128xf32>
    %c120 = arith.constant 120 : index
    %c0_160 = arith.constant 0 : index
    %434 = vector.load %arg1[%c120, %c0_160] : memref<136x128xf32, #tpu.memory_space<vmem>>, vector<8x128xf32>
    %435 = arith.addf %433, %434 : vector<8x128xf32>
    %cst_161 = arith.constant 0.000000e+00 : f32
    %436 = vector.broadcast %cst_161 : f32 to vector<8x128xf32>
    %437 = arith.maximumf %435, %436 : vector<8x128xf32>
    %cst_162 = arith.constant dense<0.000000e+00> : vector<8xf32>
    %438 = vector.multi_reduction <add>, %437, %cst_162 [1] : vector<8x128xf32> to vector<8xf32>
    %439 = vector.shape_cast %438 : vector<8xf32> to vector<8x1xf32>
    %cst_163 = arith.constant 1.280000e+02 : f32
    %440 = vector.broadcast %cst_163 : f32 to vector<8x1xf32>
    %441 = arith.divf %439, %440 : vector<8x1xf32>
    %442 = arith.mulf %437, %437 : vector<8x128xf32>
    %cst_164 = arith.constant dense<0.000000e+00> : vector<8xf32>
    %443 = vector.multi_reduction <add>, %442, %cst_164 [1] : vector<8x128xf32> to vector<8xf32>
    %444 = vector.shape_cast %443 : vector<8xf32> to vector<8x1xf32>
    %cst_165 = arith.constant 1.280000e+02 : f32
    %445 = vector.broadcast %cst_165 : f32 to vector<8x1xf32>
    %446 = arith.divf %444, %445 : vector<8x1xf32>
    %447 = arith.mulf %441, %441 : vector<8x1xf32>
    %448 = arith.subf %446, %447 : vector<8x1xf32>
    %cst_166 = arith.constant 0.000000e+00 : f32
    %449 = vector.broadcast %cst_166 : f32 to vector<8x1xf32>
    %450 = arith.maximumf %448, %449 : vector<8x1xf32>
    %451 = vector.broadcast %441 : vector<8x1xf32> to vector<8x128xf32>
    %452 = arith.subf %437, %451 : vector<8x128xf32>
    %cst_167 = arith.constant 9.99999974E-6 : f32
    %453 = vector.broadcast %cst_167 : f32 to vector<8x1xf32>
    %454 = arith.addf %450, %453 : vector<8x1xf32>
    %455 = math.rsqrt %454 : vector<8x1xf32>
    %456 = vector.broadcast %455 : vector<8x1xf32> to vector<8x128xf32>
    %457 = arith.mulf %452, %456 : vector<8x128xf32>
    %c9 = arith.constant 9 : index
    %c0_168 = arith.constant 0 : index
    %c0_169 = arith.constant 0 : index
    %458 = vector.load %arg3[%c9, %c0_168, %c0_169] : memref<14x32x32xbf16, #tpu.memory_space<vmem>>, vector<1x32x32xbf16>
    %459 = vector.shape_cast %458 : vector<1x32x32xbf16> to vector<32x32xbf16>
    %460 = vector.extract_strided_slice %459 {offsets = [0, 0], sizes = [8, 8], strides = [1, 1]} : vector<32x32xbf16> to vector<8x8xbf16>
    %461 = arith.truncf %457 : vector<8x128xf32> to vector<8x128xbf16>
    %cst_170 = arith.constant dense<0.000000e+00> : vector<8x128xf32>
    %462 = tpu.matmul %460, %461, %cst_170 {dimension_numbers = #tpu.dot_dimension_numbers<[1], [0], [0], [1], [0, 0, 1, 1], [], []>} : vector<8x8xbf16>, vector<8x128xbf16>, vector<8x128xf32> -> vector<8x128xf32>
    %c10 = arith.constant 10 : index
    %c0_171 = arith.constant 0 : index
    %c0_172 = arith.constant 0 : index
    %463 = vector.load %arg3[%c10, %c0_171, %c0_172] : memref<14x32x32xbf16, #tpu.memory_space<vmem>>, vector<1x32x32xbf16>
    %464 = vector.shape_cast %463 : vector<1x32x32xbf16> to vector<32x32xbf16>
    %465 = vector.extract_strided_slice %464 {offsets = [0, 0], sizes = [8, 16], strides = [1, 1]} : vector<32x32xbf16> to vector<8x16xbf16>
    %466 = arith.truncf %369 : vector<16x128xf32> to vector<16x128xbf16>
    %cst_173 = arith.constant dense<0.000000e+00> : vector<8x128xf32>
    %467 = tpu.matmul %465, %466, %cst_173 {dimension_numbers = #tpu.dot_dimension_numbers<[1], [0], [0], [1], [0, 0, 1, 1], [], []>} : vector<8x16xbf16>, vector<16x128xbf16>, vector<8x128xf32> -> vector<8x128xf32>
    %cst_174 = arith.constant dense<0.000000e+00> : vector<8xf32>
    %468 = vector.multi_reduction <add>, %467, %cst_174 [1] : vector<8x128xf32> to vector<8xf32>
    %469 = vector.shape_cast %468 : vector<8xf32> to vector<8x1xf32>
    %cst_175 = arith.constant 1.280000e+02 : f32
    %470 = vector.broadcast %cst_175 : f32 to vector<8x1xf32>
    %471 = arith.divf %469, %470 : vector<8x1xf32>
    %472 = arith.mulf %467, %467 : vector<8x128xf32>
    %cst_176 = arith.constant dense<0.000000e+00> : vector<8xf32>
    %473 = vector.multi_reduction <add>, %472, %cst_176 [1] : vector<8x128xf32> to vector<8xf32>
    %474 = vector.shape_cast %473 : vector<8xf32> to vector<8x1xf32>
    %cst_177 = arith.constant 1.280000e+02 : f32
    %475 = vector.broadcast %cst_177 : f32 to vector<8x1xf32>
    %476 = arith.divf %474, %475 : vector<8x1xf32>
    %477 = arith.mulf %471, %471 : vector<8x1xf32>
    %478 = arith.subf %476, %477 : vector<8x1xf32>
    %cst_178 = arith.constant 0.000000e+00 : f32
    %479 = vector.broadcast %cst_178 : f32 to vector<8x1xf32>
    %480 = arith.maximumf %478, %479 : vector<8x1xf32>
    %481 = vector.broadcast %471 : vector<8x1xf32> to vector<8x128xf32>
    %482 = arith.subf %467, %481 : vector<8x128xf32>
    %cst_179 = arith.constant 9.99999974E-6 : f32
    %483 = vector.broadcast %cst_179 : f32 to vector<8x1xf32>
    %484 = arith.addf %480, %483 : vector<8x1xf32>
    %485 = math.rsqrt %484 : vector<8x1xf32>
    %486 = vector.broadcast %485 : vector<8x1xf32> to vector<8x128xf32>
    %487 = arith.mulf %482, %486 : vector<8x128xf32>
    %cst_180 = arith.constant dense<0.000000e+00> : vector<8xf32>
    %488 = vector.multi_reduction <add>, %462, %cst_180 [1] : vector<8x128xf32> to vector<8xf32>
    %489 = vector.shape_cast %488 : vector<8xf32> to vector<8x1xf32>
    %cst_181 = arith.constant 1.280000e+02 : f32
    %490 = vector.broadcast %cst_181 : f32 to vector<8x1xf32>
    %491 = arith.divf %489, %490 : vector<8x1xf32>
    %492 = arith.mulf %462, %462 : vector<8x128xf32>
    %cst_182 = arith.constant dense<0.000000e+00> : vector<8xf32>
    %493 = vector.multi_reduction <add>, %492, %cst_182 [1] : vector<8x128xf32> to vector<8xf32>
    %494 = vector.shape_cast %493 : vector<8xf32> to vector<8x1xf32>
    %cst_183 = arith.constant 1.280000e+02 : f32
    %495 = vector.broadcast %cst_183 : f32 to vector<8x1xf32>
    %496 = arith.divf %494, %495 : vector<8x1xf32>
    %497 = arith.mulf %491, %491 : vector<8x1xf32>
    %498 = arith.subf %496, %497 : vector<8x1xf32>
    %cst_184 = arith.constant 0.000000e+00 : f32
    %499 = vector.broadcast %cst_184 : f32 to vector<8x1xf32>
    %500 = arith.maximumf %498, %499 : vector<8x1xf32>
    %501 = vector.broadcast %491 : vector<8x1xf32> to vector<8x128xf32>
    %502 = arith.subf %462, %501 : vector<8x128xf32>
    %cst_185 = arith.constant 9.99999974E-6 : f32
    %503 = vector.broadcast %cst_185 : f32 to vector<8x1xf32>
    %504 = arith.addf %500, %503 : vector<8x1xf32>
    %505 = math.rsqrt %504 : vector<8x1xf32>
    %506 = vector.broadcast %505 : vector<8x1xf32> to vector<8x128xf32>
    %507 = arith.mulf %502, %506 : vector<8x128xf32>
    %508 = arith.addf %507, %487 : vector<8x128xf32>
    %cst_186 = arith.constant 0.000000e+00 : f32
    %509 = vector.broadcast %cst_186 : f32 to vector<8x128xf32>
    %510 = arith.maximumf %508, %509 : vector<8x128xf32>
    %511 = arith.truncf %510 : vector<8x128xf32> to vector<8x128xbf16>
    %c0_187 = arith.constant 0 : index
    %c0_188 = arith.constant 0 : index
    %512 = vector.load %arg4[%c0_187, %c0_188] : memref<128x512xbf16, #tpu.memory_space<vmem>>, vector<128x512xbf16>
    %cst_189 = arith.constant dense<0.000000e+00> : vector<8x512xf32>
    %513 = tpu.matmul %511, %512, %cst_189 {dimension_numbers = #tpu.dot_dimension_numbers<[1], [0], [0], [1], [0, 0, 1, 1], [], []>} : vector<8x128xbf16>, vector<128x512xbf16>, vector<8x512xf32> -> vector<8x512xf32>
    %c48 = arith.constant 48 : index
    %c0_190 = arith.constant 0 : index
    %514 = vector.load %arg2[%c48, %c0_190] : memref<56x512xf32, #tpu.memory_space<vmem>>, vector<8x512xf32>
    %515 = arith.addf %513, %514 : vector<8x512xf32>
    %cst_191 = arith.constant 0.000000e+00 : f32
    %516 = vector.broadcast %cst_191 : f32 to vector<8x512xf32>
    %517 = arith.maximumf %515, %516 : vector<8x512xf32>
    %cst_192 = arith.constant dense<0.000000e+00> : vector<8xf32>
    %518 = vector.multi_reduction <add>, %517, %cst_192 [1] : vector<8x512xf32> to vector<8xf32>
    %519 = vector.shape_cast %518 : vector<8xf32> to vector<8x1xf32>
    %cst_193 = arith.constant 5.120000e+02 : f32
    %520 = vector.broadcast %cst_193 : f32 to vector<8x1xf32>
    %521 = arith.divf %519, %520 : vector<8x1xf32>
    %522 = arith.mulf %517, %517 : vector<8x512xf32>
    %cst_194 = arith.constant dense<0.000000e+00> : vector<8xf32>
    %523 = vector.multi_reduction <add>, %522, %cst_194 [1] : vector<8x512xf32> to vector<8xf32>
    %524 = vector.shape_cast %523 : vector<8xf32> to vector<8x1xf32>
    %cst_195 = arith.constant 5.120000e+02 : f32
    %525 = vector.broadcast %cst_195 : f32 to vector<8x1xf32>
    %526 = arith.divf %524, %525 : vector<8x1xf32>
    %527 = arith.mulf %521, %521 : vector<8x1xf32>
    %528 = arith.subf %526, %527 : vector<8x1xf32>
    %cst_196 = arith.constant 0.000000e+00 : f32
    %529 = vector.broadcast %cst_196 : f32 to vector<8x1xf32>
    %530 = arith.maximumf %528, %529 : vector<8x1xf32>
    %531 = vector.broadcast %521 : vector<8x1xf32> to vector<8x512xf32>
    %532 = arith.subf %517, %531 : vector<8x512xf32>
    %cst_197 = arith.constant 9.99999974E-6 : f32
    %533 = vector.broadcast %cst_197 : f32 to vector<8x1xf32>
    %534 = arith.addf %530, %533 : vector<8x1xf32>
    %535 = math.rsqrt %534 : vector<8x1xf32>
    %536 = vector.broadcast %535 : vector<8x1xf32> to vector<8x512xf32>
    %537 = arith.mulf %532, %536 : vector<8x512xf32>
    %c11 = arith.constant 11 : index
    %c0_198 = arith.constant 0 : index
    %c0_199 = arith.constant 0 : index
    %538 = vector.load %arg3[%c11, %c0_198, %c0_199] : memref<14x32x32xbf16, #tpu.memory_space<vmem>>, vector<1x32x32xbf16>
    %539 = vector.shape_cast %538 : vector<1x32x32xbf16> to vector<32x32xbf16>
    %540 = vector.extract_strided_slice %539 {offsets = [0, 0], sizes = [4, 8], strides = [1, 1]} : vector<32x32xbf16> to vector<4x8xbf16>
    %541 = arith.truncf %537 : vector<8x512xf32> to vector<8x512xbf16>
    %cst_200 = arith.constant dense<0.000000e+00> : vector<4x512xf32>
    %542 = tpu.matmul %540, %541, %cst_200 {dimension_numbers = #tpu.dot_dimension_numbers<[1], [0], [0], [1], [0, 0, 1, 1], [], []>} : vector<4x8xbf16>, vector<8x512xbf16>, vector<4x512xf32> -> vector<4x512xf32>
    %543 = arith.truncf %542 : vector<4x512xf32> to vector<4x512xbf16>
    %c0_201 = arith.constant 0 : index
    %c0_202 = arith.constant 0 : index
    %544 = vector.load %arg5[%c0_201, %c0_202] : memref<512x512xbf16, #tpu.memory_space<vmem>>, vector<512x512xbf16>
    %cst_203 = arith.constant dense<0.000000e+00> : vector<4x512xf32>
    %545 = tpu.matmul %543, %544, %cst_203 {dimension_numbers = #tpu.dot_dimension_numbers<[1], [0], [0], [1], [0, 0, 1, 1], [], []>} : vector<4x512xbf16>, vector<512x512xbf16>, vector<4x512xf32> -> vector<4x512xf32>
    %546 = vector.extract_strided_slice %545 {offsets = [0, 0], sizes = [4, 128], strides = [1, 1]} : vector<4x512xf32> to vector<4x128xf32>
    %547 = vector.extract_strided_slice %545 {offsets = [0, 128], sizes = [4, 128], strides = [1, 1]} : vector<4x512xf32> to vector<4x128xf32>
    %548 = arith.maximumf %546, %547 : vector<4x128xf32>
    %549 = vector.extract_strided_slice %545 {offsets = [0, 256], sizes = [4, 128], strides = [1, 1]} : vector<4x512xf32> to vector<4x128xf32>
    %550 = vector.extract_strided_slice %545 {offsets = [0, 384], sizes = [4, 128], strides = [1, 1]} : vector<4x512xf32> to vector<4x128xf32>
    %551 = arith.maximumf %549, %550 : vector<4x128xf32>
    %552 = arith.maximumf %548, %551 : vector<4x128xf32>
    %cst_204 = arith.constant dense<0.000000e+00> : vector<4xf32>
    %553 = vector.multi_reduction <add>, %552, %cst_204 [1] : vector<4x128xf32> to vector<4xf32>
    %554 = vector.shape_cast %553 : vector<4xf32> to vector<4x1xf32>
    %cst_205 = arith.constant 1.280000e+02 : f32
    %555 = vector.broadcast %cst_205 : f32 to vector<4x1xf32>
    %556 = arith.divf %554, %555 : vector<4x1xf32>
    %557 = arith.mulf %552, %552 : vector<4x128xf32>
    %cst_206 = arith.constant dense<0.000000e+00> : vector<4xf32>
    %558 = vector.multi_reduction <add>, %557, %cst_206 [1] : vector<4x128xf32> to vector<4xf32>
    %559 = vector.shape_cast %558 : vector<4xf32> to vector<4x1xf32>
    %cst_207 = arith.constant 1.280000e+02 : f32
    %560 = vector.broadcast %cst_207 : f32 to vector<4x1xf32>
    %561 = arith.divf %559, %560 : vector<4x1xf32>
    %562 = arith.mulf %556, %556 : vector<4x1xf32>
    %563 = arith.subf %561, %562 : vector<4x1xf32>
    %cst_208 = arith.constant 0.000000e+00 : f32
    %564 = vector.broadcast %cst_208 : f32 to vector<4x1xf32>
    %565 = arith.maximumf %563, %564 : vector<4x1xf32>
    %566 = vector.broadcast %556 : vector<4x1xf32> to vector<4x128xf32>
    %567 = arith.subf %552, %566 : vector<4x128xf32>
    %cst_209 = arith.constant 9.99999974E-6 : f32
    %568 = vector.broadcast %cst_209 : f32 to vector<4x1xf32>
    %569 = arith.addf %565, %568 : vector<4x1xf32>
    %570 = math.rsqrt %569 : vector<4x1xf32>
    %571 = vector.broadcast %570 : vector<4x1xf32> to vector<4x128xf32>
    %572 = arith.mulf %567, %571 : vector<4x128xf32>
    %cst_210 = arith.constant 0.000000e+00 : f32
    %573 = vector.broadcast %cst_210 : f32 to vector<4x128xf32>
    %574 = arith.maximumf %572, %573 : vector<4x128xf32>
    %c128 = arith.constant 128 : index
    %c0_211 = arith.constant 0 : index
    %575 = vector.load %arg1[%c128, %c0_211] : memref<136x128xf32, #tpu.memory_space<vmem>>, vector<4x128xf32>
    %576 = arith.addf %574, %575 : vector<4x128xf32>
    %cst_212 = arith.constant 0.000000e+00 : f32
    %577 = vector.broadcast %cst_212 : f32 to vector<4x128xf32>
    %578 = arith.maximumf %576, %577 : vector<4x128xf32>
    %cst_213 = arith.constant dense<0.000000e+00> : vector<4xf32>
    %579 = vector.multi_reduction <add>, %578, %cst_213 [1] : vector<4x128xf32> to vector<4xf32>
    %580 = vector.shape_cast %579 : vector<4xf32> to vector<4x1xf32>
    %cst_214 = arith.constant 1.280000e+02 : f32
    %581 = vector.broadcast %cst_214 : f32 to vector<4x1xf32>
    %582 = arith.divf %580, %581 : vector<4x1xf32>
    %583 = arith.mulf %578, %578 : vector<4x128xf32>
    %cst_215 = arith.constant dense<0.000000e+00> : vector<4xf32>
    %584 = vector.multi_reduction <add>, %583, %cst_215 [1] : vector<4x128xf32> to vector<4xf32>
    %585 = vector.shape_cast %584 : vector<4xf32> to vector<4x1xf32>
    %cst_216 = arith.constant 1.280000e+02 : f32
    %586 = vector.broadcast %cst_216 : f32 to vector<4x1xf32>
    %587 = arith.divf %585, %586 : vector<4x1xf32>
    %588 = arith.mulf %582, %582 : vector<4x1xf32>
    %589 = arith.subf %587, %588 : vector<4x1xf32>
    %cst_217 = arith.constant 0.000000e+00 : f32
    %590 = vector.broadcast %cst_217 : f32 to vector<4x1xf32>
    %591 = arith.maximumf %589, %590 : vector<4x1xf32>
    %592 = vector.broadcast %582 : vector<4x1xf32> to vector<4x128xf32>
    %593 = arith.subf %578, %592 : vector<4x128xf32>
    %cst_218 = arith.constant 9.99999974E-6 : f32
    %594 = vector.broadcast %cst_218 : f32 to vector<4x1xf32>
    %595 = arith.addf %591, %594 : vector<4x1xf32>
    %596 = math.rsqrt %595 : vector<4x1xf32>
    %597 = vector.broadcast %596 : vector<4x1xf32> to vector<4x128xf32>
    %598 = arith.mulf %593, %597 : vector<4x128xf32>
    %c12 = arith.constant 12 : index
    %c0_219 = arith.constant 0 : index
    %c0_220 = arith.constant 0 : index
    %599 = vector.load %arg3[%c12, %c0_219, %c0_220] : memref<14x32x32xbf16, #tpu.memory_space<vmem>>, vector<1x32x32xbf16>
    %600 = vector.shape_cast %599 : vector<1x32x32xbf16> to vector<32x32xbf16>
    %601 = vector.extract_strided_slice %600 {offsets = [0, 0], sizes = [4, 4], strides = [1, 1]} : vector<32x32xbf16> to vector<4x4xbf16>
    %602 = arith.truncf %598 : vector<4x128xf32> to vector<4x128xbf16>
    %cst_221 = arith.constant dense<0.000000e+00> : vector<4x128xf32>
    %603 = tpu.matmul %601, %602, %cst_221 {dimension_numbers = #tpu.dot_dimension_numbers<[1], [0], [0], [1], [0, 0, 1, 1], [], []>} : vector<4x4xbf16>, vector<4x128xbf16>, vector<4x128xf32> -> vector<4x128xf32>
    %c13 = arith.constant 13 : index
    %c0_222 = arith.constant 0 : index
    %c0_223 = arith.constant 0 : index
    %604 = vector.load %arg3[%c13, %c0_222, %c0_223] : memref<14x32x32xbf16, #tpu.memory_space<vmem>>, vector<1x32x32xbf16>
    %605 = vector.shape_cast %604 : vector<1x32x32xbf16> to vector<32x32xbf16>
    %606 = vector.extract_strided_slice %605 {offsets = [0, 0], sizes = [4, 8], strides = [1, 1]} : vector<32x32xbf16> to vector<4x8xbf16>
    %607 = arith.truncf %510 : vector<8x128xf32> to vector<8x128xbf16>
    %cst_224 = arith.constant dense<0.000000e+00> : vector<4x128xf32>
    %608 = tpu.matmul %606, %607, %cst_224 {dimension_numbers = #tpu.dot_dimension_numbers<[1], [0], [0], [1], [0, 0, 1, 1], [], []>} : vector<4x8xbf16>, vector<8x128xbf16>, vector<4x128xf32> -> vector<4x128xf32>
    %cst_225 = arith.constant dense<0.000000e+00> : vector<4xf32>
    %609 = vector.multi_reduction <add>, %608, %cst_225 [1] : vector<4x128xf32> to vector<4xf32>
    %610 = vector.shape_cast %609 : vector<4xf32> to vector<4x1xf32>
    %cst_226 = arith.constant 1.280000e+02 : f32
    %611 = vector.broadcast %cst_226 : f32 to vector<4x1xf32>
    %612 = arith.divf %610, %611 : vector<4x1xf32>
    %613 = arith.mulf %608, %608 : vector<4x128xf32>
    %cst_227 = arith.constant dense<0.000000e+00> : vector<4xf32>
    %614 = vector.multi_reduction <add>, %613, %cst_227 [1] : vector<4x128xf32> to vector<4xf32>
    %615 = vector.shape_cast %614 : vector<4xf32> to vector<4x1xf32>
    %cst_228 = arith.constant 1.280000e+02 : f32
    %616 = vector.broadcast %cst_228 : f32 to vector<4x1xf32>
    %617 = arith.divf %615, %616 : vector<4x1xf32>
    %618 = arith.mulf %612, %612 : vector<4x1xf32>
    %619 = arith.subf %617, %618 : vector<4x1xf32>
    %cst_229 = arith.constant 0.000000e+00 : f32
    %620 = vector.broadcast %cst_229 : f32 to vector<4x1xf32>
    %621 = arith.maximumf %619, %620 : vector<4x1xf32>
    %622 = vector.broadcast %612 : vector<4x1xf32> to vector<4x128xf32>
    %623 = arith.subf %608, %622 : vector<4x128xf32>
    %cst_230 = arith.constant 9.99999974E-6 : f32
    %624 = vector.broadcast %cst_230 : f32 to vector<4x1xf32>
    %625 = arith.addf %621, %624 : vector<4x1xf32>
    %626 = math.rsqrt %625 : vector<4x1xf32>
    %627 = vector.broadcast %626 : vector<4x1xf32> to vector<4x128xf32>
    %628 = arith.mulf %623, %627 : vector<4x128xf32>
    %cst_231 = arith.constant dense<0.000000e+00> : vector<4xf32>
    %629 = vector.multi_reduction <add>, %603, %cst_231 [1] : vector<4x128xf32> to vector<4xf32>
    %630 = vector.shape_cast %629 : vector<4xf32> to vector<4x1xf32>
    %cst_232 = arith.constant 1.280000e+02 : f32
    %631 = vector.broadcast %cst_232 : f32 to vector<4x1xf32>
    %632 = arith.divf %630, %631 : vector<4x1xf32>
    %633 = arith.mulf %603, %603 : vector<4x128xf32>
    %cst_233 = arith.constant dense<0.000000e+00> : vector<4xf32>
    %634 = vector.multi_reduction <add>, %633, %cst_233 [1] : vector<4x128xf32> to vector<4xf32>
    %635 = vector.shape_cast %634 : vector<4xf32> to vector<4x1xf32>
    %cst_234 = arith.constant 1.280000e+02 : f32
    %636 = vector.broadcast %cst_234 : f32 to vector<4x1xf32>
    %637 = arith.divf %635, %636 : vector<4x1xf32>
    %638 = arith.mulf %632, %632 : vector<4x1xf32>
    %639 = arith.subf %637, %638 : vector<4x1xf32>
    %cst_235 = arith.constant 0.000000e+00 : f32
    %640 = vector.broadcast %cst_235 : f32 to vector<4x1xf32>
    %641 = arith.maximumf %639, %640 : vector<4x1xf32>
    %642 = vector.broadcast %632 : vector<4x1xf32> to vector<4x128xf32>
    %643 = arith.subf %603, %642 : vector<4x128xf32>
    %cst_236 = arith.constant 9.99999974E-6 : f32
    %644 = vector.broadcast %cst_236 : f32 to vector<4x1xf32>
    %645 = arith.addf %641, %644 : vector<4x1xf32>
    %646 = math.rsqrt %645 : vector<4x1xf32>
    %647 = vector.broadcast %646 : vector<4x1xf32> to vector<4x128xf32>
    %648 = arith.mulf %643, %647 : vector<4x128xf32>
    %649 = arith.addf %648, %628 : vector<4x128xf32>
    %cst_237 = arith.constant 0.000000e+00 : f32
    %650 = vector.broadcast %cst_237 : f32 to vector<4x128xf32>
    %651 = arith.maximumf %649, %650 : vector<4x128xf32>
    %652 = math.tanh %651 : vector<4x128xf32>
    %c0_238 = arith.constant 0 : index
    %c0_239 = arith.constant 0 : index
    %653 = vector.load %arg6[%c0_238, %c0_239] : memref<4x128xf32, #tpu.memory_space<vmem>>, vector<4x128xf32>
    tpu.vector_store %arg6[%c0_238, %c0_239], %652 {strides = array<i32>} : memref<4x128xf32, #tpu.memory_space<vmem>>, vector<4x128xf32>,
    return
  }
}

</mosaic_0001>

<llo_original>
// kernel: _lambda_.1
$region0: #{_lambda_.1}
  #allocation0 [shape = 'u32[]', space=smem, size = 0x4, offset = 0x4, fixed_abs, tag = 'smem constant byte address 0x4 - core index']
  #allocation1 [shape = 'u32[144,128]{1,0:T(1,128)}', space=vmem, size = 0x12000, scoped, tag = 'internal scratch']
  %s0 = inlined_call_operand.vmem [shape: f32[4,128], index: 0, kind: input, shape index: {}]
  %s1 = inlined_call_operand.vmem [shape: f32[136,128], index: 1, kind: input, shape index: {}]
  %s2 = inlined_call_operand.vmem [shape: f32[56,512], index: 2, kind: input, shape index: {}]
  %s3 = inlined_call_operand.vmem [shape: bf16[14,32,32], index: 3, kind: input, shape index: {}]
  %s4 = inlined_call_operand.vmem [shape: bf16[128,512], index: 4, kind: input, shape index: {}]
  %s5 = inlined_call_operand.vmem [shape: bf16[512,512], index: 5, kind: input, shape index: {}]
  %s6 = inlined_call_operand.vmem [shape: f32[4,128], index: 6, kind: output, shape index: {}]
  %s7 = sld [smem:[#allocation0]]
  $region34: #{_lambda_.1} parent=0
    _
  %s9 = ssub.s32 1, %s7
  %s10 = scalar_select 0, %s9, %s7
  // Predicated region
  $region2: #{_lambda_.1} parent=0 // pred_check
    _
  $region3: #{_lambda_.1} parent=0 // pred_check_branch
    %12 = sbr.rel (0) target = $region5
  $region4: #{_lambda_.1} parent=0 // pred_region
    _
  $region5: #{_lambda_.1} parent=0 // pred_fallthru
    _
  // Predicated region
  $region6: #{_lambda_.1} parent=0 // pred_check
    _
  $region7: #{_lambda_.1} parent=0 // pred_check_branch
    %14 = sbr.rel (0) target = $region9
  $region8: #{_lambda_.1} parent=0 // pred_region
    _
  $region9: #{_lambda_.1} parent=0 // pred_fallthru
    _
  // Predicated region
  $region10: #{_lambda_.1} parent=0 // pred_check
    _
  $region11: #{_lambda_.1} parent=0 // pred_check_branch
    %16 = sbr.rel (0) target = $region13
  $region12: #{_lambda_.1} parent=0 // pred_region
    _
  $region13: #{_lambda_.1} parent=0 // pred_fallthru
    _
  // Predicated region
  $region14: #{_lambda_.1} parent=0 // pred_check
    _
  $region15: #{_lambda_.1} parent=0 // pred_check_branch
    %18 = sbr.rel (0) target = $region17
  $region16: #{_lambda_.1} parent=0 // pred_region
    _
  $region17: #{_lambda_.1} parent=0 // pred_fallthru
    _
  // Predicated region
  $region18: #{_lambda_.1} parent=0 // pred_check
    _
  $region19: #{_lambda_.1} parent=0 // pred_check_branch
    %20 = sbr.rel (0) target = $region21
  $region20: #{_lambda_.1} parent=0 // pred_region
    _
  $region21: #{_lambda_.1} parent=0 // pred_fallthru
    _
  // Predicated region
  $region22: #{_lambda_.1} parent=0 // pred_check
    _
  $region23: #{_lambda_.1} parent=0 // pred_check_branch
    %22 = sbr.rel (0) target = $region25
  $region24: #{_lambda_.1} parent=0 // pred_region
    _
  $region25: #{_lambda_.1} parent=0 // pred_fallthru
    _
  %v24 = vld [vmem:[%s0] sm:$0xf]
  %v25 = vld [vmem:[%s1] sm:$0xf]
  %v26 = vadd.f32 %v24, %v25
  %v27 = vmax.f32 %v26, 0.0
  %vm28 = vcmask 1043456
  %v29 = vsel %vm28, %v27, 0.0
  %30 = vadd.xlane.f32.xlu0 %v29
  %v31 = vpop.xlane.xlu0 %30
  %v32 = vrcp.pop 128.0
  %v33 = vmul.f32 %v31, %v32
  %v34 = vmul.f32 %v27, %v27
  %v35 = vsel %vm28, %v34, 0.0
  %36 = vadd.xlane.f32.xlu0 %v35
  %v37 = vpop.xlane.xlu0 %36
  %v38 = vmul.f32 %v37, %v32
  %v39 = vmul.f32 %v33, %v33
  %v40 = vsub.f32 %v38, %v39
  %v41 = vmax.f32 %v40, 0.0
  %v42 = vsub.f32 %v27, %v33
  %v43 = vadd.f32 %v41, 1e-05
  %v44 = vrsqrt.pop %v43
  %v45 = vmul.f32 %v42, %v44
  %v46 = vld [vmem:[%s3] sm:$0xf]
  %v47 = vld [vmem:[%s3 + $0x4] sm:$0xf]
  %v48 = vld [vmem:[%s3 + $0x8] sm:$0xf]
  %v49 = vld [vmem:[%s3 + $0xc] sm:$0xf]
  %v50 = vpack.c.bf16 %v45, %v45
  %v55 = vunpack.c.l.b16 %v46
  %v56 = vunpack.c.l.b16 %v47
  %v57 = vunpack.c.l.b16 %v48
  %v58 = vunpack.c.l.b16 %v49
  %v59 = vpack.c.b16 %v56, %v55
  %v60 = vpack.c.b16 %v58, %v57
  %vm61 = vcmask 31744
  %v63 = vsel %vm61, %v59, 0
  %v66 = vsel %vm61, %v60, 0
  %vm68 = vcmask 1041408
  %v70 = vsel %vm68, %v50, 0
  %72 = vmatprep.subr.bf16.mxu0 0
  %73 = vmatpush1.bf16.msra.mxu0 %v70
  %74 = vmatprep.subr.bf16.mxu0 0
  %75 = vmatpush1.bf16.msra.mxu0 0
  %76 = vmatprep.subr.bf16.mxu0 0
  %77 = vmatpush1.bf16.msra.mxu0 0
  %78 = vmatprep.subr.bf16.mxu0 0
  %79 = vmatpush1.bf16.msra.mxu0 0
  %80 = vmatprep.subr.bf16.mxu0 0
  %81 = vmatpush1.bf16.msra.mxu0 0
  %82 = vmatprep.subr.bf16.mxu0 0
  %83 = vmatpush1.bf16.msra.mxu0 0
  %84 = vmatprep.subr.bf16.mxu0 0
  %85 = vmatpush1.bf16.msra.mxu0 0
  %86 = vmatprep.subr.bf16.mxu0 0
  %87 = vmatpush1.bf16.msra.mxu0 0
  %88 = vmatprep.subr.bf16.mxu0 0
  %89 = vmatpush1.bf16.msra.mxu0 0
  %90 = vmatprep.subr.bf16.mxu0 0
  %91 = vmatpush1.bf16.msra.mxu0 0
  %92 = vmatprep.subr.bf16.mxu0 0
  %93 = vmatpush1.bf16.msra.mxu0 0
  %94 = vmatprep.subr.bf16.mxu0 0
  %95 = vmatpush1.bf16.msra.mxu0 0
  %96 = vmatprep.subr.bf16.mxu0 0
  %97 = vmatpush1.bf16.msra.mxu0 0
  %98 = vmatprep.subr.bf16.mxu0 0
  %99 = vmatpush1.bf16.msra.mxu0 0
  %100 = vmatprep.subr.bf16.mxu0 0
  %101 = vmatpush1.bf16.msra.mxu0 0
  %102 = vmatprep.subr.bf16.mxu0 0
  %103 = vmatpush1.bf16.msra.mxu0 0
  %104 = vmatprep.mubr.bf16.mxu0 0
  %105 = vmatmul.mubr.bf16.gmra.mrb[0].mxu0 %v63
  %v106 = vpop.f32.mrb[0].mxu0
  %v107 = vadd.f32 0.0, %v106
  %v108 = vpop.f32.mrb[0].mxu0
  %v109 = vpop.f32.mrb[0].mxu0
  %v110 = vadd.f32 0.0, %v109
  %v111 = vpop.f32.mrb[0].mxu0
  %112 = vmatprep.mubr.bf16.mxu0 0
  %113 = vmatmul.mubr.bf16.gmra.mrb[0].mxu0 %v66
  %v114 = vpop.f32.mrb[0].mxu0
  %v115 = vadd.f32 0.0, %v114
  %v116 = vpop.f32.mrb[0].mxu0
  %v117 = vpop.f32.mrb[0].mxu0
  %v118 = vadd.f32 0.0, %v117
  %v119 = vpop.f32.mrb[0].mxu0
  %120 = vdwg.mxu0
  %121 = vadd.xlane.f32.xlu0 %v107
  %v122 = vpop.xlane.xlu0 %121
  %123 = vadd.xlane.f32.xlu0 %v110
  %v124 = vpop.xlane.xlu0 %123
  %125 = vadd.xlane.f32.xlu0 %v115
  %v126 = vpop.xlane.xlu0 %125
  %127 = vadd.xlane.f32.xlu0 %v118
  %v128 = vpop.xlane.xlu0 %127
  %v129 = vmul.f32 %v122, %v32
  %v130 = vmul.f32 %v124, %v32
  %v131 = vmul.f32 %v126, %v32
  %v132 = vmul.f32 %v128, %v32
  %v133 = vmul.f32 %v107, %v107
  %v134 = vmul.f32 %v110, %v110
  %v135 = vmul.f32 %v115, %v115
  %v136 = vmul.f32 %v118, %v118
  %137 = vadd.xlane.f32.xlu0 %v133
  %v138 = vpop.xlane.xlu0 %137
  %139 = vadd.xlane.f32.xlu0 %v134
  %v140 = vpop.xlane.xlu0 %139
  %141 = vadd.xlane.f32.xlu0 %v135
  %v142 = vpop.xlane.xlu0 %141
  %143 = vadd.xlane.f32.xlu0 %v136
  %v144 = vpop.xlane.xlu0 %143
  %v145 = vmul.f32 %v138, %v32
  %v146 = vmul.f32 %v140, %v32
  %v147 = vmul.f32 %v142, %v32
  %v148 = vmul.f32 %v144, %v32
  %v149 = vmul.f32 %v129, %v129
  %v150 = vmul.f32 %v130, %v130
  %v151 = vmul.f32 %v131, %v131
  %v152 = vmul.f32 %v132, %v132
  %v153 = vsub.f32 %v145, %v149
  %v154 = vsub.f32 %v146, %v150
  %v155 = vsub.f32 %v147, %v151
  %v156 = vsub.f32 %v148, %v152
  %v157 = vmax.f32 %v153, 0.0
  %v158 = vmax.f32 %v154, 0.0
  %v159 = vmax.f32 %v155, 0.0
  %v160 = vmax.f32 %v156, 0.0
  %v161 = vsub.f32 %v107, %v129
  %v162 = vsub.f32 %v110, %v130
  %v163 = vsub.f32 %v115, %v131
  %v164 = vsub.f32 %v118, %v132
  %v165 = vadd.f32 %v157, 1e-05
  %v166 = vadd.f32 %v158, 1e-05
  %v167 = vadd.f32 %v159, 1e-05
  %v168 = vadd.f32 %v160, 1e-05
  %v169 = vrsqrt.pop %v165
  %v170 = vrsqrt.pop %v166
  %v171 = vrsqrt.pop %v167
  %v172 = vrsqrt.pop %v168
  %v173 = vmul.f32 %v161, %v169
  %v174 = vmul.f32 %v162, %v170
  %v175 = vmul.f32 %v163, %v171
  %v176 = vmul.f32 %v164, %v172
  %v177 = vmax.f32 %v173, 0.0
  %v178 = vmax.f32 %v174, 0.0
  %v179 = vmax.f32 %v175, 0.0
  %v180 = vmax.f32 %v176, 0.0
  %v181 = vld [vmem:[%s1 + $0x8] sm:$0xff]
  %v182 = vld [vmem:[%s1 + $0x10] sm:$0xff]
  %v183 = vld [vmem:[%s1 + $0x18] sm:$0xff]
  %v184 = vld [vmem:[%s1 + $0x20] sm:$0xff]
  %v185 = vadd.f32 %v177, %v181
  %v186 = vadd.f32 %v178, %v182
  %v187 = vadd.f32 %v179, %v183
  %v188 = vadd.f32 %v180, %v184
  %v189 = vmax.f32 %v185, 0.0
  %v190 = vmax.f32 %v186, 0.0
  %v191 = vmax.f32 %v187, 0.0
  %v192 = vmax.f32 %v188, 0.0
  %193 = vadd.xlane.f32.xlu0 %v189
  %v194 = vpop.xlane.xlu0 %193
  %195 = vadd.xlane.f32.xlu0 %v190
  %v196 = vpop.xlane.xlu0 %195
  %197 = vadd.xlane.f32.xlu0 %v191
  %v198 = vpop.xlane.xlu0 %197
  %199 = vadd.xlane.f32.xlu0 %v192
  %v200 = vpop.xlane.xlu0 %199
  %v201 = vmul.f32 %v194, %v32
  %v202 = vmul.f32 %v196, %v32
  %v203 = vmul.f32 %v198, %v32
  %v204 = vmul.f32 %v200, %v32
  %v205 = vmul.f32 %v189, %v189
  %v206 = vmul.f32 %v190, %v190
  %v207 = vmul.f32 %v191, %v191
  %v208 = vmul.f32 %v192, %v192
  %209 = vadd.xlane.f32.xlu0 %v205
  %v210 = vpop.xlane.xlu0 %209
  %211 = vadd.xlane.f32.xlu0 %v206
  %v212 = vpop.xlane.xlu0 %211
  %213 = vadd.xlane.f32.xlu0 %v207
  %v214 = vpop.xlane.xlu0 %213
  %215 = vadd.xlane.f32.xlu0 %v208
  %v216 = vpop.xlane.xlu0 %215
  %v217 = vmul.f32 %v210, %v32
  %v218 = vmul.f32 %v212, %v32
  %v219 = vmul.f32 %v214, %v32
  %v220 = vmul.f32 %v216, %v32
  %v221 = vmul.f32 %v201, %v201
  %v222 = vmul.f32 %v202, %v202
  %v223 = vmul.f32 %v203, %v203
  %v224 = vmul.f32 %v204, %v204
  %v225 = vsub.f32 %v217, %v221
  %v226 = vsub.f32 %v218, %v222
  %v227 = vsub.f32 %v219, %v223
  %v228 = vsub.f32 %v220, %v224
  %v229 = vmax.f32 %v225, 0.0
  %v230 = vmax.f32 %v226, 0.0
  %v231 = vmax.f32 %v227, 0.0
  %v232 = vmax.f32 %v228, 0.0
  %v233 = vsub.f32 %v189, %v201
  %v234 = vsub.f32 %v190, %v202
  %v235 = vsub.f32 %v191, %v203
  %v236 = vsub.f32 %v192, %v204
  %v237 = vadd.f32 %v229, 1e-05
  %v238 = vadd.f32 %v230, 1e-05
  %v239 = vadd.f32 %v231, 1e-05
  %v240 = vadd.f32 %v232, 1e-05
  %v241 = vrsqrt.pop %v237
  %v242 = vrsqrt.pop %v238
  %v243 = vrsqrt.pop %v239
  %v244 = vrsqrt.pop %v240
  %v245 = vmul.f32 %v233, %v241
  %v246 = vmul.f32 %v234, %v242
  %v247 = vmul.f32 %v235, %v243
  %v248 = vmul.f32 %v236, %v244
  %s249 = scalar_lea.vmem %s3, 16
  %v250 = vld [vmem:[%s249] sm:$0xf]
  %v251 = vld [vmem:[%s249 + $0x4] sm:$0xf]
  %v252 = vld [vmem:[%s249 + $0x8] sm:$0xf]
  %v253 = vld [vmem:[%s249 + $0xc] sm:$0xf]
  %v254 = vpack.c.bf16 %v246, %v245
  %v255 = vpack.c.bf16 %v248, %v247
  %v260 = vunpack.c.l.b16 %v250
  %v261 = vunpack.c.l.b16 %v251
  %v262 = vunpack.c.l.b16 %v252
  %v263 = vunpack.c.l.b16 %v253
  %v264 = vpack.c.b16 %v261, %v260
  %v265 = vpack.c.b16 %v263, %v262
  %vm266 = vcmask 261120
  %v268 = vsel %vm266, %v264, 0
  %v271 = vsel %vm266, %v265, 0
  %273 = vmatprep.subr.bf16.mxu0 0
  %274 = vmatpush1.bf16.msra.mxu0 %v254
  %275 = vmatprep.subr.bf16.mxu0 0
  %276 = vmatpush1.bf16.msra.mxu0 %v255
  %277 = vmatprep.subr.bf16.mxu0 0
  %278 = vmatpush1.bf16.msra.mxu0 0
  %279 = vmatprep.subr.bf16.mxu0 0
  %280 = vmatpush1.bf16.msra.mxu0 0
  %281 = vmatprep.subr.bf16.mxu0 0
  %282 = vmatpush1.bf16.msra.mxu0 0
  %283 = vmatprep.subr.bf16.mxu0 0
  %284 = vmatpush1.bf16.msra.mxu0 0
  %285 = vmatprep.subr.bf16.mxu0 0
  %286 = vmatpush1.bf16.msra.mxu0 0
  %287 = vmatprep.subr.bf16.mxu0 0
  %288 = vmatpush1.bf16.msra.mxu0 0
  %289 = vmatprep.subr.bf16.mxu0 0
  %290 = vmatpush1.bf16.msra.mxu0 0
  %291 = vmatprep.subr.bf16.mxu0 0
  %292 = vmatpush1.bf16.msra.mxu0 0
  %293 = vmatprep.subr.bf16.mxu0 0
  %294 = vmatpush1.bf16.msra.mxu0 0
  %295 = vmatprep.subr.bf16.mxu0 0
  %296 = vmatpush1.bf16.msra.mxu0 0
  %297 = vmatprep.subr.bf16.mxu0 0
  %298 = vmatpush1.bf16.msra.mxu0 0
  %299 = vmatprep.subr.bf16.mxu0 0
  %300 = vmatpush1.bf16.msra.mxu0 0
  %301 = vmatprep.subr.bf16.mxu0 0
  %302 = vmatpush1.bf16.msra.mxu0 0
  %303 = vmatprep.subr.bf16.mxu0 0
  %304 = vmatpush1.bf16.msra.mxu0 0
  %305 = vmatprep.mubr.bf16.mxu0 0
  %306 = vmatmul.mubr.bf16.gmra.mrb[0].mxu0 %v268
  %v307 = vpop.f32.mrb[0].mxu0
  %v308 = vadd.f32 0.0, %v307
  %v309 = vpop.f32.mrb[0].mxu0
  %v310 = vpop.f32.mrb[0].mxu0
  %v311 = vadd.f32 0.0, %v310
  %v312 = vpop.f32.mrb[0].mxu0
  %313 = vmatprep.mubr.bf16.mxu0 0
  %314 = vmatmul.mubr.bf16.gmra.mrb[0].mxu0 %v271
  %v315 = vpop.f32.mrb[0].mxu0
  %v316 = vadd.f32 0.0, %v315
  %v317 = vpop.f32.mrb[0].mxu0
  %v318 = vpop.f32.mrb[0].mxu0
  %v319 = vadd.f32 0.0, %v318
  %v320 = vpop.f32.mrb[0].mxu0
  %321 = vdwg.mxu0
  %s322 = scalar_lea.vmem %s3, 32
  %v323 = vld [vmem:[%s322] sm:$0xf]
  %v324 = vld [vmem:[%s322 + $0x4] sm:$0xf]
  %v325 = vld [vmem:[%s322 + $0x8] sm:$0xf]
  %v326 = vld [vmem:[%s322 + $0xc] sm:$0xf]
  %v327 = vpack.c.bf16 %v24, %v24
  %v332 = vunpack.c.l.b16 %v323
  %v333 = vunpack.c.l.b16 %v324
  %v334 = vunpack.c.l.b16 %v325
  %v335 = vunpack.c.l.b16 %v326
  %v336 = vpack.c.b16 %v333, %v332
  %v337 = vpack.c.b16 %v335, %v334
  %v339 = vsel %vm61, %v336, 0
  %v342 = vsel %vm61, %v337, 0
  %v345 = vsel %vm68, %v327, 0
  %347 = vmatprep.subr.bf16.mxu0 0
  %348 = vmatpush1.bf16.msra.mxu0 %v345
  %349 = vmatprep.subr.bf16.mxu0 0
  %350 = vmatpush1.bf16.msra.mxu0 0
  %351 = vmatprep.subr.bf16.mxu0 0
  %352 = vmatpush1.bf16.msra.mxu0 0
  %353 = vmatprep.subr.bf16.mxu0 0
  %354 = vmatpush1.bf16.msra.mxu0 0
  %355 = vmatprep.subr.bf16.mxu0 0
  %356 = vmatpush1.bf16.msra.mxu0 0
  %357 = vmatprep.subr.bf16.mxu0 0
  %358 = vmatpush1.bf16.msra.mxu0 0
  %359 = vmatprep.subr.bf16.mxu0 0
  %360 = vmatpush1.bf16.msra.mxu0 0
  %361 = vmatprep.subr.bf16.mxu0 0
  %362 = vmatpush1.bf16.msra.mxu0 0
  %363 = vmatprep.subr.bf16.mxu0 0
  %364 = vmatpush1.bf16.msra.mxu0 0
  %365 = vmatprep.subr.bf16.mxu0 0
  %366 = vmatpush1.bf16.msra.mxu0 0
  %367 = vmatprep.subr.bf16.mxu0 0
  %368 = vmatpush1.bf16.msra.mxu0 0
  %369 = vmatprep.subr.bf16.mxu0 0
  %370 = vmatpush1.bf16.msra.mxu0 0
  %371 = vmatprep.subr.bf16.mxu0 0
  %372 = vmatpush1.bf16.msra.mxu0 0
  %373 = vmatprep.subr.bf16.mxu0 0
  %374 = vmatpush1.bf16.msra.mxu0 0
  %375 = vmatprep.subr.bf16.mxu0 0
  %376 = vmatpush1.bf16.msra.mxu0 0
  %377 = vmatprep.subr.bf16.mxu0 0
  %378 = vmatpush1.bf16.msra.mxu0 0
  %379 = vmatprep.mubr.bf16.mxu0 0
  %380 = vmatmul.mubr.bf16.gmra.mrb[0].mxu0 %v339
  %v381 = vpop.f32.mrb[0].mxu0
  %v382 = vadd.f32 0.0, %v381
  %v383 = vpop.f32.mrb[0].mxu0
  %v384 = vpop.f32.mrb[0].mxu0
  %v385 = vadd.f32 0.0, %v384
  %v386 = vpop.f32.mrb[0].mxu0
  %387 = vmatprep.mubr.bf16.mxu0 0
  %388 = vmatmul.mubr.bf16.gmra.mrb[0].mxu0 %v342
  %v389 = vpop.f32.mrb[0].mxu0
  %v390 = vadd.f32 0.0, %v389
  %v391 = vpop.f32.mrb[0].mxu0
  %v392 = vpop.f32.mrb[0].mxu0
  %v393 = vadd.f32 0.0, %v392
  %v394 = vpop.f32.mrb[0].mxu0
  %395 = vdwg.mxu0
  %396 = vadd.xlane.f32.xlu0 %v382
  %v397 = vpop.xlane.xlu0 %396
  %398 = vadd.xlane.f32.xlu0 %v385
  %v399 = vpop.xlane.xlu0 %398
  %400 = vadd.xlane.f32.xlu0 %v390
  %v401 = vpop.xlane.xlu0 %400
  %402 = vadd.xlane.f32.xlu0 %v393
  %v403 = vpop.xlane.xlu0 %402
  %v404 = vmul.f32 %v397, %v32
  %v405 = vmul.f32 %v399, %v32
  %v406 = vmul.f32 %v401, %v32
  %v407 = vmul.f32 %v403, %v32
  %v408 = vmul.f32 %v382, %v382
  %v409 = vmul.f32 %v385, %v385
  %v410 = vmul.f32 %v390, %v390
  %v411 = vmul.f32 %v393, %v393
  %412 = vadd.xlane.f32.xlu0 %v408
  %v413 = vpop.xlane.xlu0 %412
  %414 = vadd.xlane.f32.xlu0 %v409
  %v415 = vpop.xlane.xlu0 %414
  %416 = vadd.xlane.f32.xlu0 %v410
  %v417 = vpop.xlane.xlu0 %416
  %418 = vadd.xlane.f32.xlu0 %v411
  %v419 = vpop.xlane.xlu0 %418
  %v420 = vmul.f32 %v413, %v32
  %v421 = vmul.f32 %v415, %v32
  %v422 = vmul.f32 %v417, %v32
  %v423 = vmul.f32 %v419, %v32
  %v424 = vmul.f32 %v404, %v404
  %v425 = vmul.f32 %v405, %v405
  %v426 = vmul.f32 %v406, %v406
  %v427 = vmul.f32 %v407, %v407
  %v428 = vsub.f32 %v420, %v424
  %v429 = vsub.f32 %v421, %v425
  %v430 = vsub.f32 %v422, %v426
  %v431 = vsub.f32 %v423, %v427
  %v432 = vmax.f32 %v428, 0.0
  %v433 = vmax.f32 %v429, 0.0
  %v434 = vmax.f32 %v430, 0.0
  %v435 = vmax.f32 %v431, 0.0
  %v436 = vsub.f32 %v382, %v404
  %v437 = vsub.f32 %v385, %v405
  %v438 = vsub.f32 %v390, %v406
  %v439 = vsub.f32 %v393, %v407
  %v440 = vadd.f32 %v432, 1e-05
  %v441 = vadd.f32 %v433, 1e-05
  %v442 = vadd.f32 %v434, 1e-05
  %v443 = vadd.f32 %v435, 1e-05
  %v444 = vrsqrt.pop %v440
  %v445 = vrsqrt.pop %v441
  %v446 = vrsqrt.pop %v442
  %v447 = vrsqrt.pop %v443
  %v448 = vmul.f32 %v436, %v444
  %v449 = vmul.f32 %v437, %v445
  %v450 = vmul.f32 %v438, %v446
  %v451 = vmul.f32 %v439, %v447
  %452 = vadd.xlane.f32.xlu0 %v308
  %v453 = vpop.xlane.xlu0 %452
  %454 = vadd.xlane.f32.xlu0 %v311
  %v455 = vpop.xlane.xlu0 %454
  %456 = vadd.xlane.f32.xlu0 %v316
  %v457 = vpop.xlane.xlu0 %456
  %458 = vadd.xlane.f32.xlu0 %v319
  %v459 = vpop.xlane.xlu0 %458
  %v460 = vmul.f32 %v453, %v32
  %v461 = vmul.f32 %v455, %v32
  %v462 = vmul.f32 %v457, %v32
  %v463 = vmul.f32 %v459, %v32
  %v464 = vmul.f32 %v308, %v308
  %v465 = vmul.f32 %v311, %v311
  %v466 = vmul.f32 %v316, %v316
  %v467 = vmul.f32 %v319, %v319
  %468 = vadd.xlane.f32.xlu0 %v464
  %v469 = vpop.xlane.xlu0 %468
  %470 = vadd.xlane.f32.xlu0 %v465
  %v471 = vpop.xlane.xlu0 %470
  %472 = vadd.xlane.f32.xlu0 %v466
  %v473 = vpop.xlane.xlu0 %472
  %474 = vadd.xlane.f32.xlu0 %v467
  %v475 = vpop.xlane.xlu0 %474
  %v476 = vmul.f32 %v469, %v32
  %v477 = vmul.f32 %v471, %v32
  %v478 = vmul.f32 %v473, %v32
  %v479 = vmul.f32 %v475, %v32
  %v480 = vmul.f32 %v460, %v460
  %v481 = vmul.f32 %v461, %v461
  %v482 = vmul.f32 %v462, %v462
  %v483 = vmul.f32 %v463, %v463
  %v484 = vsub.f32 %v476, %v480
  %v485 = vsub.f32 %v477, %v481
  %v486 = vsub.f32 %v478, %v482
  %v487 = vsub.f32 %v479, %v483
  %v488 = vmax.f32 %v484, 0.0
  %v489 = vmax.f32 %v485, 0.0
  %v490 = vmax.f32 %v486, 0.0
  %v491 = vmax.f32 %v487, 0.0
  %v492 = vsub.f32 %v308, %v460
  %v493 = vsub.f32 %v311, %v461
  %v494 = vsub.f32 %v316, %v462
  %v495 = vsub.f32 %v319, %v463
  %v496 = vadd.f32 %v488, 1e-05
  %v497 = vadd.f32 %v489, 1e-05
  %v498 = vadd.f32 %v490, 1e-05
  %v499 = vadd.f32 %v491, 1e-05
  %v500 = vrsqrt.pop %v496
  %v501 = vrsqrt.pop %v497
  %v502 = vrsqrt.pop %v498
  %v503 = vrsqrt.pop %v499
  %v504 = vmul.f32 %v492, %v500
  %v505 = vmul.f32 %v493, %v501
  %v506 = vmul.f32 %v494, %v502
  %v507 = vmul.f32 %v495, %v503
  %v508 = vadd.f32 %v504, %v448
  %v509 = vadd.f32 %v505, %v449
  %v510 = vadd.f32 %v506, %v450
  %v511 = vadd.f32 %v507, %v451
  %v512 = vmax.f32 %v508, 0.0
  %v513 = vmax.f32 %v509, 0.0
  %v514 = vmax.f32 %v510, 0.0
  %v515 = vmax.f32 %v511, 0.0
  %v516 = vld [vmem:[%s1 + $0x28] sm:$0xff]
  %v517 = vld [vmem:[%s1 + $0x30] sm:$0xff]
  %v518 = vld [vmem:[%s1 + $0x38] sm:$0xff]
  %v519 = vld [vmem:[%s1 + $0x40] sm:$0xff]
  %v520 = vadd.f32 %v512, %v516
  %v521 = vadd.f32 %v513, %v517
  %v522 = vadd.f32 %v514, %v518
  %v523 = vadd.f32 %v515, %v519
  %v524 = vmax.f32 %v520, 0.0
  %v525 = vmax.f32 %v521, 0.0
  %v526 = vmax.f32 %v522, 0.0
  %v527 = vmax.f32 %v523, 0.0
  %528 = vadd.xlane.f32.xlu0 %v524
  %v529 = vpop.xlane.xlu0 %528
  %530 = vadd.xlane.f32.xlu0 %v525
  %v531 = vpop.xlane.xlu0 %530
  %532 = vadd.xlane.f32.xlu0 %v526
  %v533 = vpop.xlane.xlu0 %532
  %534 = vadd.xlane.f32.xlu0 %v527
  %v535 = vpop.xlane.xlu0 %534
  %v536 = vmul.f32 %v529, %v32
  %v537 = vmul.f32 %v531, %v32
  %v538 = vmul.f32 %v533, %v32
  %v539 = vmul.f32 %v535, %v32
  %v540 = vmul.f32 %v524, %v524
  %v541 = vmul.f32 %v525, %v525
  %v542 = vmul.f32 %v526, %v526
  %v543 = vmul.f32 %v527, %v527
  %544 = vadd.xlane.f32.xlu0 %v540
  %v545 = vpop.xlane.xlu0 %544
  %546 = vadd.xlane.f32.xlu0 %v541
  %v547 = vpop.xlane.xlu0 %546
  %548 = vadd.xlane.f32.xlu0 %v542
  %v549 = vpop.xlane.xlu0 %548
  %550 = vadd.xlane.f32.xlu0 %v543
  %v551 = vpop.xlane.xlu0 %550
  %v552 = vmul.f32 %v545, %v32
  %v553 = vmul.f32 %v547, %v32
  %v554 = vmul.f32 %v549, %v32
  %v555 = vmul.f32 %v551, %v32
  %v556 = vmul.f32 %v536, %v536
  %v557 = vmul.f32 %v537, %v537
  %v558 = vmul.f32 %v538, %v538
  %v559 = vmul.f32 %v539, %v539
  %v560 = vsub.f32 %v552, %v556
  %v561 = vsub.f32 %v553, %v557
  %v562 = vsub.f32 %v554, %v558
  %v563 = vsub.f32 %v555, %v559
  %v564 = vmax.f32 %v560, 0.0
  %v565 = vmax.f32 %v561, 0.0
  %v566 = vmax.f32 %v562, 0.0
  %v567 = vmax.f32 %v563, 0.0
  %v568 = vsub.f32 %v524, %v536
  %v569 = vsub.f32 %v525, %v537
  %v570 = vsub.f32 %v526, %v538
  %v571 = vsub.f32 %v527, %v539
  %v572 = vadd.f32 %v564, 1e-05
  %v573 = vadd.f32 %v565, 1e-05
  %v574 = vadd.f32 %v566, 1e-05
  %v575 = vadd.f32 %v567, 1e-05
  %v576 = vrsqrt.pop %v572
  %v577 = vrsqrt.pop %v573
  %v578 = vrsqrt.pop %v574
  %v579 = vrsqrt.pop %v575
  %v580 = vmul.f32 %v568, %v576
  %v581 = vmul.f32 %v569, %v577
  %v582 = vmul.f32 %v570, %v578
  %v583 = vmul.f32 %v571, %v579
  %s584 = scalar_lea.vmem %s3, 48
  %v585 = vld [vmem:[%s584] sm:$0xf]
  %v586 = vld [vmem:[%s584 + $0x4] sm:$0xf]
  %v587 = vld [vmem:[%s584 + $0x8] sm:$0xf]
  %v588 = vld [vmem:[%s584 + $0xc] sm:$0xf]
  %v589 = vpack.c.bf16 %v581, %v580
  %v590 = vpack.c.bf16 %v583, %v582
  %v595 = vunpack.c.l.b16 %v585
  %v596 = vunpack.c.l.b16 %v586
  %v597 = vunpack.c.l.b16 %v587
  %v598 = vunpack.c.l.b16 %v588
  %v599 = vpack.c.b16 %v596, %v595
  %v600 = vpack.c.b16 %v598, %v597
  %v602 = vsel %vm266, %v599, 0
  %v605 = vsel %vm266, %v600, 0
  %607 = vmatprep.subr.bf16.mxu0 0
  %608 = vmatpush1.bf16.msra.mxu0 %v589
  %609 = vmatprep.subr.bf16.mxu0 0
  %610 = vmatpush1.bf16.msra.mxu0 %v590
  %611 = vmatprep.subr.bf16.mxu0 0
  %612 = vmatpush1.bf16.msra.mxu0 0
  %613 = vmatprep.subr.bf16.mxu0 0
  %614 = vmatpush1.bf16.msra.mxu0 0
  %615 = vmatprep.subr.bf16.mxu0 0
  %616 = vmatpush1.bf16.msra.mxu0 0
  %617 = vmatprep.subr.bf16.mxu0 0
  %618 = vmatpush1.bf16.msra.mxu0 0
  %619 = vmatprep.subr.bf16.mxu0 0
  %620 = vmatpush1.bf16.msra.mxu0 0
  %621 = vmatprep.subr.bf16.mxu0 0
  %622 = vmatpush1.bf16.msra.mxu0 0
  %623 = vmatprep.subr.bf16.mxu0 0
  %624 = vmatpush1.bf16.msra.mxu0 0
  %625 = vmatprep.subr.bf16.mxu0 0
  %626 = vmatpush1.bf16.msra.mxu0 0
  %627 = vmatprep.subr.bf16.mxu0 0
  %628 = vmatpush1.bf16.msra.mxu0 0
  %629 = vmatprep.subr.bf16.mxu0 0
  %630 = vmatpush1.bf16.msra.mxu0 0
  %631 = vmatprep.subr.bf16.mxu0 0
  %632 = vmatpush1.bf16.msra.mxu0 0
  %633 = vmatprep.subr.bf16.mxu0 0
  %634 = vmatpush1.bf16.msra.mxu0 0
  %635 = vmatprep.subr.bf16.mxu0 0
  %636 = vmatpush1.bf16.msra.mxu0 0
  %637 = vmatprep.subr.bf16.mxu0 0
  %638 = vmatpush1.bf16.msra.mxu0 0
  %639 = vmatprep.mubr.bf16.mxu0 0
  %640 = vmatmul.mubr.bf16.gmra.mrb[0].mxu0 %v602
  %v641 = vpop.f32.mrb[0].mxu0
  %v642 = vadd.f32 0.0, %v641
  %v643 = vpop.f32.mrb[0].mxu0
  %v644 = vpop.f32.mrb[0].mxu0
  %v645 = vadd.f32 0.0, %v644
  %v646 = vpop.f32.mrb[0].mxu0
  %647 = vmatprep.mubr.bf16.mxu0 0
  %648 = vmatmul.mubr.bf16.gmra.mrb[0].mxu0 %v605
  %v649 = vpop.f32.mrb[0].mxu0
  %v650 = vadd.f32 0.0, %v649
  %v651 = vpop.f32.mrb[0].mxu0
  %v652 = vpop.f32.mrb[0].mxu0
  %v653 = vadd.f32 0.0, %v652
  %v654 = vpop.f32.mrb[0].mxu0
  %655 = vdwg.mxu0
  %656 = vadd.xlane.f32.xlu0 %v642
  %v657 = vpop.xlane.xlu0 %656
  %658 = vadd.xlane.f32.xlu0 %v645
  %v659 = vpop.xlane.xlu0 %658
  %660 = vadd.xlane.f32.xlu0 %v650
  %v661 = vpop.xlane.xlu0 %660
  %662 = vadd.xlane.f32.xlu0 %v653
  %v663 = vpop.xlane.xlu0 %662
  %v664 = vmul.f32 %v657, %v32
  %v665 = vmul.f32 %v659, %v32
  %v666 = vmul.f32 %v661, %v32
  %v667 = vmul.f32 %v663, %v32
  %v668 = vmul.f32 %v642, %v642
  %v669 = vmul.f32 %v645, %v645
  %v670 = vmul.f32 %v650, %v650
  %v671 = vmul.f32 %v653, %v653
  %672 = vadd.xlane.f32.xlu0 %v668
  %v673 = vpop.xlane.xlu0 %672
  %674 = vadd.xlane.f32.xlu0 %v669
  %v675 = vpop.xlane.xlu0 %674
  %676 = vadd.xlane.f32.xlu0 %v670
  %v677 = vpop.xlane.xlu0 %676
  %678 = vadd.xlane.f32.xlu0 %v671
  %v679 = vpop.xlane.xlu0 %678
  %v680 = vmul.f32 %v673, %v32
  %v681 = vmul.f32 %v675, %v32
  %v682 = vmul.f32 %v677, %v32
  %v683 = vmul.f32 %v679, %v32
  %v684 = vmul.f32 %v664, %v664
  %v685 = vmul.f32 %v665, %v665
  %v686 = vmul.f32 %v666, %v666
  %v687 = vmul.f32 %v667, %v667
  %v688 = vsub.f32 %v680, %v684
  %v689 = vsub.f32 %v681, %v685
  %v690 = vsub.f32 %v682, %v686
  %v691 = vsub.f32 %v683, %v687
  %v692 = vmax.f32 %v688, 0.0
  %v693 = vmax.f32 %v689, 0.0
  %v694 = vmax.f32 %v690, 0.0
  %v695 = vmax.f32 %v691, 0.0
  %v696 = vsub.f32 %v642, %v664
  %v697 = vsub.f32 %v645, %v665
  %v698 = vsub.f32 %v650, %v666
  %v699 = vsub.f32 %v653, %v667
  %v700 = vadd.f32 %v692, 1e-05
  %v701 = vadd.f32 %v693, 1e-05
  %v702 = vadd.f32 %v694, 1e-05
  %v703 = vadd.f32 %v695, 1e-05
  %v704 = vrsqrt.pop %v700
  %v705 = vrsqrt.pop %v701
  %v706 = vrsqrt.pop %v702
  %v707 = vrsqrt.pop %v703
  %v708 = vmul.f32 %v696, %v704
  %v709 = vmul.f32 %v697, %v705
  %v710 = vmul.f32 %v698, %v706
  %v711 = vmul.f32 %v699, %v707
  %v712 = vmax.f32 %v708, 0.0
  %v713 = vmax.f32 %v709, 0.0
  %v714 = vmax.f32 %v710, 0.0
  %v715 = vmax.f32 %v711, 0.0
  %v716 = vld [vmem:[%s1 + $0x48] sm:$0xff]
  %v717 = vld [vmem:[%s1 + $0x50] sm:$0xff]
  %v718 = vld [vmem:[%s1 + $0x58] sm:$0xff]
  %v719 = vld [vmem:[%s1 + $0x60] sm:$0xff]
  %v720 = vadd.f32 %v712, %v716
  %v721 = vadd.f32 %v713, %v717
  %v722 = vadd.f32 %v714, %v718
  %v723 = vadd.f32 %v715, %v719
  %v724 = vmax.f32 %v720, 0.0
  %v725 = vmax.f32 %v721, 0.0
  %v726 = vmax.f32 %v722, 0.0
  %v727 = vmax.f32 %v723, 0.0
  %728 = vadd.xlane.f32.xlu0 %v724
  %v729 = vpop.xlane.xlu0 %728
  %730 = vadd.xlane.f32.xlu0 %v725
  %v731 = vpop.xlane.xlu0 %730
  %732 = vadd.xlane.f32.xlu0 %v726
  %v733 = vpop.xlane.xlu0 %732
  %734 = vadd.xlane.f32.xlu0 %v727
  %v735 = vpop.xlane.xlu0 %734
  %v736 = vmul.f32 %v729, %v32
  %v737 = vmul.f32 %v731, %v32
  %v738 = vmul.f32 %v733, %v32
  %v739 = vmul.f32 %v735, %v32
  %v740 = vmul.f32 %v724, %v724
  %v741 = vmul.f32 %v725, %v725
  %v742 = vmul.f32 %v726, %v726
  %v743 = vmul.f32 %v727, %v727
  %744 = vadd.xlane.f32.xlu0 %v740
  %v745 = vpop.xlane.xlu0 %744
  %746 = vadd.xlane.f32.xlu0 %v741
  %v747 = vpop.xlane.xlu0 %746
  %748 = vadd.xlane.f32.xlu0 %v742
  %v749 = vpop.xlane.xlu0 %748
  %750 = vadd.xlane.f32.xlu0 %v743
  %v751 = vpop.xlane.xlu0 %750
  %v752 = vmul.f32 %v745, %v32
  %v753 = vmul.f32 %v747, %v32
  %v754 = vmul.f32 %v749, %v32
  %v755 = vmul.f32 %v751, %v32
  %v756 = vmul.f32 %v736, %v736
  %v757 = vmul.f32 %v737, %v737
  %v758 = vmul.f32 %v738, %v738
  %v759 = vmul.f32 %v739, %v739
  %v760 = vsub.f32 %v752, %v756
  %v761 = vsub.f32 %v753, %v757
  %v762 = vsub.f32 %v754, %v758
  %v763 = vsub.f32 %v755, %v759
  %v764 = vmax.f32 %v760, 0.0
  %v765 = vmax.f32 %v761, 0.0
  %v766 = vmax.f32 %v762, 0.0
  %v767 = vmax.f32 %v763, 0.0
  %v768 = vsub.f32 %v724, %v736
  %v769 = vsub.f32 %v725, %v737
  %v770 = vsub.f32 %v726, %v738
  %v771 = vsub.f32 %v727, %v739
  %v772 = vadd.f32 %v764, 1e-05
  %v773 = vadd.f32 %v765, 1e-05
  %v774 = vadd.f32 %v766, 1e-05
  %v775 = vadd.f32 %v767, 1e-05
  %v776 = vrsqrt.pop %v772
  %v777 = vrsqrt.pop %v773
  %v778 = vrsqrt.pop %v774
  %v779 = vrsqrt.pop %v775
  %v780 = vmul.f32 %v768, %v776
  %v781 = vmul.f32 %v769, %v777
  %v782 = vmul.f32 %v770, %v778
  %v783 = vmul.f32 %v771, %v779
  %s784 = scalar_lea.vmem %s3, 64
  %v785 = vld [vmem:[%s784] sm:$0xf]
  %v786 = vld [vmem:[%s784 + $0x4] sm:$0xf]
  %v787 = vld [vmem:[%s784 + $0x8] sm:$0xf]
  %v788 = vld [vmem:[%s784 + $0xc] sm:$0xf]
  %v789 = vpack.c.bf16 %v781, %v780
  %v790 = vpack.c.bf16 %v783, %v782
  %v795 = vunpack.c.l.b16 %v785
  %v796 = vunpack.c.l.b16 %v786
  %v797 = vunpack.c.l.b16 %v787
  %v798 = vunpack.c.l.b16 %v788
  %v799 = vpack.c.b16 %v796, %v795
  %v800 = vpack.c.b16 %v798, %v797
  %v802 = vsel %vm266, %v799, 0
  %v805 = vsel %vm266, %v800, 0
  %807 = vmatprep.subr.bf16.mxu0 0
  %808 = vmatpush1.bf16.msra.mxu0 %v789
  %809 = vmatprep.subr.bf16.mxu0 0
  %810 = vmatpush1.bf16.msra.mxu0 %v790
  %811 = vmatprep.subr.bf16.mxu0 0
  %812 = vmatpush1.bf16.msra.mxu0 0
  %813 = vmatprep.subr.bf16.mxu0 0
  %814 = vmatpush1.bf16.msra.mxu0 0
  %815 = vmatprep.subr.bf16.mxu0 0
  %816 = vmatpush1.bf16.msra.mxu0 0
  %817 = vmatprep.subr.bf16.mxu0 0
  %818 = vmatpush1.bf16.msra.mxu0 0
  %819 = vmatprep.subr.bf16.mxu0 0
  %820 = vmatpush1.bf16.msra.mxu0 0
  %821 = vmatprep.subr.bf16.mxu0 0
  %822 = vmatpush1.bf16.msra.mxu0 0
  %823 = vmatprep.subr.bf16.mxu0 0
  %824 = vmatpush1.bf16.msra.mxu0 0
  %825 = vmatprep.subr.bf16.mxu0 0
  %826 = vmatpush1.bf16.msra.mxu0 0
  %827 = vmatprep.subr.bf16.mxu0 0
  %828 = vmatpush1.bf16.msra.mxu0 0
  %829 = vmatprep.subr.bf16.mxu0 0
  %830 = vmatpush1.bf16.msra.mxu0 0
  %831 = vmatprep.subr.bf16.mxu0 0
  %832 = vmatpush1.bf16.msra.mxu0 0
  %833 = vmatprep.subr.bf16.mxu0 0
  %834 = vmatpush1.bf16.msra.mxu0 0
  %835 = vmatprep.subr.bf16.mxu0 0
  %836 = vmatpush1.bf16.msra.mxu0 0
  %837 = vmatprep.subr.bf16.mxu0 0
  %838 = vmatpush1.bf16.msra.mxu0 0
  %839 = vmatprep.mubr.bf16.mxu0 0
  %840 = vmatmul.mubr.bf16.gmra.mrb[0].mxu0 %v802
  %v841 = vpop.f32.mrb[0].mxu0
  %v842 = vadd.f32 0.0, %v841
  %v843 = vpop.f32.mrb[0].mxu0
  %v844 = vpop.f32.mrb[0].mxu0
  %v845 = vadd.f32 0.0, %v844
  %v846 = vpop.f32.mrb[0].mxu0
  %847 = vmatprep.mubr.bf16.mxu0 0
  %848 = vmatmul.mubr.bf16.gmra.mrb[0].mxu0 %v805
  %v849 = vpop.f32.mrb[0].mxu0
  %v850 = vadd.f32 0.0, %v849
  %v851 = vpop.f32.mrb[0].mxu0
  %v852 = vpop.f32.mrb[0].mxu0
  %v853 = vadd.f32 0.0, %v852
  %v854 = vpop.f32.mrb[0].mxu0
  %855 = vdwg.mxu0
  %856 = vadd.xlane.f32.xlu0 %v842
  %v857 = vpop.xlane.xlu0 %856
  %858 = vadd.xlane.f32.xlu0 %v845
  %v859 = vpop.xlane.xlu0 %858
  %860 = vadd.xlane.f32.xlu0 %v850
  %v861 = vpop.xlane.xlu0 %860
  %862 = vadd.xlane.f32.xlu0 %v853
  %v863 = vpop.xlane.xlu0 %862
  %v864 = vmul.f32 %v857, %v32
  %v865 = vmul.f32 %v859, %v32
  %v866 = vmul.f32 %v861, %v32
  %v867 = vmul.f32 %v863, %v32
  %v868 = vmul.f32 %v842, %v842
  %v869 = vmul.f32 %v845, %v845
  %v870 = vmul.f32 %v850, %v850
  %v871 = vmul.f32 %v853, %v853
  %872 = vadd.xlane.f32.xlu0 %v868
  %v873 = vpop.xlane.xlu0 %872
  %874 = vadd.xlane.f32.xlu0 %v869
  %v875 = vpop.xlane.xlu0 %874
  %876 = vadd.xlane.f32.xlu0 %v870
  %v877 = vpop.xlane.xlu0 %876
  %878 = vadd.xlane.f32.xlu0 %v871
  %v879 = vpop.xlane.xlu0 %878
  %v880 = vmul.f32 %v873, %v32
  %v881 = vmul.f32 %v875, %v32
  %v882 = vmul.f32 %v877, %v32
  %v883 = vmul.f32 %v879, %v32
  %v884 = vmul.f32 %v864, %v864
  %v885 = vmul.f32 %v865, %v865
  %v886 = vmul.f32 %v866, %v866
  %v887 = vmul.f32 %v867, %v867
  %v888 = vsub.f32 %v880, %v884
  %v889 = vsub.f32 %v881, %v885
  %v890 = vsub.f32 %v882, %v886
  %v891 = vsub.f32 %v883, %v887
  %v892 = vmax.f32 %v888, 0.0
  %v893 = vmax.f32 %v889, 0.0
  %v894 = vmax.f32 %v890, 0.0
  %v895 = vmax.f32 %v891, 0.0
  %v896 = vsub.f32 %v842, %v864
  %v897 = vsub.f32 %v845, %v865
  %v898 = vsub.f32 %v850, %v866
  %v899 = vsub.f32 %v853, %v867
  %v900 = vadd.f32 %v892, 1e-05
  %v901 = vadd.f32 %v893, 1e-05
  %v902 = vadd.f32 %v894, 1e-05
  %v903 = vadd.f32 %v895, 1e-05
  %v904 = vrsqrt.pop %v900
  %v905 = vrsqrt.pop %v901
  %v906 = vrsqrt.pop %v902
  %v907 = vrsqrt.pop %v903
  %v908 = vmul.f32 %v896, %v904
  %v909 = vmul.f32 %v897, %v905
  %v910 = vmul.f32 %v898, %v906
  %v911 = vmul.f32 %v899, %v907
  %v912 = vadd.f32 %v908, %v512
  %v913 = vadd.f32 %v909, %v513
  %v914 = vadd.f32 %v910, %v514
  %v915 = vadd.f32 %v911, %v515
  %v916 = vmax.f32 %v912, 0.0
  %v917 = vmax.f32 %v913, 0.0
  %v918 = vmax.f32 %v914, 0.0
  %v919 = vmax.f32 %v915, 0.0
  %v920 = vpack.c.bf16 %v917, %v916
  %v921 = vpack.c.bf16 %v919, %v918
  %v922 = vld [vmem:[%s4] sm:$0xff]
  %v923 = vld [vmem:[%s4 + $0x8] sm:$0xff]
  %v924 = vld [vmem:[%s4 + $0x10] sm:$0xff]
  %v925 = vld [vmem:[%s4 + $0x18] sm:$0xff]
  %v926 = vld [vmem:[%s4 + $0x20] sm:$0xff]
  %v927 = vld [vmem:[%s4 + $0x28] sm:$0xff]
  %v928 = vld [vmem:[%s4 + $0x30] sm:$0xff]
  %v929 = vld [vmem:[%s4 + $0x38] sm:$0xff]
  %v930 = vld [vmem:[%s4 + $0x40] sm:$0xff]
  %v931 = vld [vmem:[%s4 + $0x48] sm:$0xff]
  %v932 = vld [vmem:[%s4 + $0x50] sm:$0xff]
  %v933 = vld [vmem:[%s4 + $0x58] sm:$0xff]
  %v934 = vld [vmem:[%s4 + $0x60] sm:$0xff]
  %v935 = vld [vmem:[%s4 + $0x68] sm:$0xff]
  %v936 = vld [vmem:[%s4 + $0x70] sm:$0xff]
  %v937 = vld [vmem:[%s4 + $0x78] sm:$0xff]
  %v938 = vld [vmem:[%s4 + $0x80] sm:$0xff]
  %v939 = vld [vmem:[%s4 + $0x88] sm:$0xff]
  %v940 = vld [vmem:[%s4 + $0x90] sm:$0xff]
  %v941 = vld [vmem:[%s4 + $0x98] sm:$0xff]
  %v942 = vld [vmem:[%s4 + $0xa0] sm:$0xff]
  %v943 = vld [vmem:[%s4 + $0xa8] sm:$0xff]
  %v944 = vld [vmem:[%s4 + $0xb0] sm:$0xff]
  %v945 = vld [vmem:[%s4 + $0xb8] sm:$0xff]
  %v946 = vld [vmem:[%s4 + $0xc0] sm:$0xff]
  %v947 = vld [vmem:[%s4 + $0xc8] sm:$0xff]
  %v948 = vld [vmem:[%s4 + $0xd0] sm:$0xff]
  %v949 = vld [vmem:[%s4 + $0xd8] sm:$0xff]
  %v950 = vld [vmem:[%s4 + $0xe0] sm:$0xff]
  %v951 = vld [vmem:[%s4 + $0xe8] sm:$0xff]
  %v952 = vld [vmem:[%s4 + $0xf0] sm:$0xff]
  %v953 = vld [vmem:[%s4 + $0xf8] sm:$0xff]
  %v954 = vld [vmem:[%s2] sm:$0xff]
  %v955 = vld [vmem:[%s2 + $0x8] sm:$0xff]
  %v956 = vld [vmem:[%s2 + $0x10] sm:$0xff]
  %v957 = vld [vmem:[%s2 + $0x18] sm:$0xff]
  %v958 = vld [vmem:[%s2 + $0x20] sm:$0xff]
  %v959 = vld [vmem:[%s2 + $0x28] sm:$0xff]
  %v960 = vld [vmem:[%s2 + $0x30] sm:$0xff]
  %v961 = vld [vmem:[%s2 + $0x38] sm:$0xff]
  %v962 = vld [vmem:[%s2 + $0x40] sm:$0xff]
  %v963 = vld [vmem:[%s2 + $0x48] sm:$0xff]
  %v964 = vld [vmem:[%s2 + $0x50] sm:$0xff]
  %v965 = vld [vmem:[%s2 + $0x58] sm:$0xff]
  %v966 = vld [vmem:[%s2 + $0x60] sm:$0xff]
  %v967 = vld [vmem:[%s2 + $0x68] sm:$0xff]
  %v968 = vld [vmem:[%s2 + $0x70] sm:$0xff]
  %v969 = vld [vmem:[%s2 + $0x78] sm:$0xff]
  %v1002 = vunpack.c.l.b16 %v922
  %v1003 = vunpack.c.h.b16 %v922
  %v1004 = vunpack.c.l.b16 %v923
  %v1005 = vunpack.c.h.b16 %v923
  %v1006 = vunpack.c.l.b16 %v924
  %v1007 = vunpack.c.h.b16 %v924
  %v1008 = vunpack.c.l.b16 %v925
  %v1009 = vunpack.c.h.b16 %v925
  %v1010 = vunpack.c.l.b16 %v926
  %v1011 = vunpack.c.h.b16 %v926
  %v1012 = vunpack.c.l.b16 %v927
  %v1013 = vunpack.c.h.b16 %v927
  %v1014 = vunpack.c.l.b16 %v928
  %v1015 = vunpack.c.h.b16 %v928
  %v1016 = vunpack.c.l.b16 %v929
  %v1017 = vunpack.c.h.b16 %v929
  %v1018 = vunpack.c.l.b16 %v930
  %v1019 = vunpack.c.h.b16 %v930
  %v1020 = vunpack.c.l.b16 %v931
  %v1021 = vunpack.c.h.b16 %v931
  %v1022 = vunpack.c.l.b16 %v932
  %v1023 = vunpack.c.h.b16 %v932
  %v1024 = vunpack.c.l.b16 %v933
  %v1025 = vunpack.c.h.b16 %v933
  %v1026 = vunpack.c.l.b16 %v934
  %v1027 = vunpack.c.h.b16 %v934
  %v1028 = vunpack.c.l.b16 %v935
  %v1029 = vunpack.c.h.b16 %v935
  %v1030 = vunpack.c.l.b16 %v936
  %v1031 = vunpack.c.h.b16 %v936
  %v1032 = vunpack.c.l.b16 %v937
  %v1033 = vunpack.c.h.b16 %v937
  %v1034 = vunpack.c.l.b16 %v938
  %v1035 = vunpack.c.h.b16 %v938
  %v1036 = vunpack.c.l.b16 %v939
  %v1037 = vunpack.c.h.b16 %v939
  %v1038 = vunpack.c.l.b16 %v940
  %v1039 = vunpack.c.h.b16 %v940
  %v1040 = vunpack.c.l.b16 %v941
  %v1041 = vunpack.c.h.b16 %v941
  %v1042 = vunpack.c.l.b16 %v942
  %v1043 = vunpack.c.h.b16 %v942
  %v1044 = vunpack.c.l.b16 %v943
  %v1045 = vunpack.c.h.b16 %v943
  %v1046 = vunpack.c.l.b16 %v944
  %v1047 = vunpack.c.h.b16 %v944
  %v1048 = vunpack.c.l.b16 %v945
  %v1049 = vunpack.c.h.b16 %v945
  %v1050 = vunpack.c.l.b16 %v946
  %v1051 = vunpack.c.h.b16 %v946
  %v1052 = vunpack.c.l.b16 %v947
  %v1053 = vunpack.c.h.b16 %v947
  %v1054 = vunpack.c.l.b16 %v948
  %v1055 = vunpack.c.h.b16 %v948
  %v1056 = vunpack.c.l.b16 %v949
  %v1057 = vunpack.c.h.b16 %v949
  %v1058 = vunpack.c.l.b16 %v950
  %v1059 = vunpack.c.h.b16 %v950
  %v1060 = vunpack.c.l.b16 %v951
  %v1061 = vunpack.c.h.b16 %v951
  %v1062 = vunpack.c.l.b16 %v952
  %v1063 = vunpack.c.h.b16 %v952
  %v1064 = vunpack.c.l.b16 %v953
  %v1065 = vunpack.c.h.b16 %v953
  %v1066 = vpack.c.b16 %v1006, %v1002
  %v1067 = vpack.c.b16 %v1007, %v1003
  %v1068 = vpack.c.b16 %v1008, %v1004
  %v1069 = vpack.c.b16 %v1009, %v1005
  %v1070 = vpack.c.b16 %v1014, %v1010
  %v1071 = vpack.c.b16 %v1015, %v1011
  %v1072 = vpack.c.b16 %v1016, %v1012
  %v1073 = vpack.c.b16 %v1017, %v1013
  %v1074 = vpack.c.b16 %v1022, %v1018
  %v1075 = vpack.c.b16 %v1023, %v1019
  %v1076 = vpack.c.b16 %v1024, %v1020
  %v1077 = vpack.c.b16 %v1025, %v1021
  %v1078 = vpack.c.b16 %v1030, %v1026
  %v1079 = vpack.c.b16 %v1031, %v1027
  %v1080 = vpack.c.b16 %v1032, %v1028
  %v1081 = vpack.c.b16 %v1033, %v1029
  %v1082 = vpack.c.b16 %v1038, %v1034
  %v1083 = vpack.c.b16 %v1039, %v1035
  %v1084 = vpack.c.b16 %v1040, %v1036
  %v1085 = vpack.c.b16 %v1041, %v1037
  %v1086 = vpack.c.b16 %v1046, %v1042
  %v1087 = vpack.c.b16 %v1047, %v1043
  %v1088 = vpack.c.b16 %v1048, %v1044
  %v1089 = vpack.c.b16 %v1049, %v1045
  %v1090 = vpack.c.b16 %v1054, %v1050
  %v1091 = vpack.c.b16 %v1055, %v1051
  %v1092 = vpack.c.b16 %v1056, %v1052
  %v1093 = vpack.c.b16 %v1057, %v1053
  %v1094 = vpack.c.b16 %v1062, %v1058
  %v1095 = vpack.c.b16 %v1063, %v1059
  %v1096 = vpack.c.b16 %v1064, %v1060
  %v1097 = vpack.c.b16 %v1065, %v1061
  %1130 = vmatprep.subr.bf16.mxu0 %v1067
  %1131 = vmatpush1.bf16.msra.mxu0 %v1066
  %1132 = vmatprep.subr.bf16.mxu0 %v1071
  %1133 = vmatpush1.bf16.msra.mxu0 %v1070
  %1134 = vmatprep.subr.bf16.mxu0 %v1075
  %1135 = vmatpush1.bf16.msra.mxu0 %v1074
  %1136 = vmatprep.subr.bf16.mxu0 %v1079
  %1137 = vmatpush1.bf16.msra.mxu0 %v1078
  %1138 = vmatprep.subr.bf16.mxu0 %v1083
  %1139 = vmatpush1.bf16.msra.mxu0 %v1082
  %1140 = vmatprep.subr.bf16.mxu0 %v1087
  %1141 = vmatpush1.bf16.msra.mxu0 %v1086
  %1142 = vmatprep.subr.bf16.mxu0 %v1091
  %1143 = vmatpush1.bf16.msra.mxu0 %v1090
  %1144 = vmatprep.subr.bf16.mxu0 %v1095
  %1145 = vmatpush1.bf16.msra.mxu0 %v1094
  %1146 = vmatprep.subr.bf16.mxu0 0
  %1147 = vmatpush1.bf16.msra.mxu0 0
  %1148 = vmatprep.subr.bf16.mxu0 0
  %1149 = vmatpush1.bf16.msra.mxu0 0
  %1150 = vmatprep.subr.bf16.mxu0 0
  %1151 = vmatpush1.bf16.msra.mxu0 0
  %1152 = vmatprep.subr.bf16.mxu0 0
  %1153 = vmatpush1.bf16.msra.mxu0 0
  %1154 = vmatprep.subr.bf16.mxu0 0
  %1155 = vmatpush1.bf16.msra.mxu0 0
  %1156 = vmatprep.subr.bf16.mxu0 0
  %1157 = vmatpush1.bf16.msra.mxu0 0
  %1158 = vmatprep.subr.bf16.mxu0 0
  %1159 = vmatpush1.bf16.msra.mxu0 0
  %1160 = vmatprep.subr.bf16.mxu0 0
  %1161 = vmatpush1.bf16.msra.mxu0 0
  %1162 = vmatprep.mubr.bf16.mxu0 0
  %1163 = vmatmul.mubr.bf16.gmra.mrb[0].mxu0 %v920
  %v1164 = vpop.f32.mrb[0].mxu0
  %v1165 = vadd.f32 %v954, %v1164
  %v1166 = vpop.f32.mrb[0].mxu0
  %v1167 = vadd.f32 %v955, %v1166
  %v1168 = vpop.f32.mrb[0].mxu0
  %v1169 = vadd.f32 %v958, %v1168
  %v1170 = vpop.f32.mrb[0].mxu0
  %v1171 = vadd.f32 %v959, %v1170
  %1172 = vmatprep.mubr.bf16.mxu0 0
  %1173 = vmatmul.mubr.bf16.gmra.mrb[0].mxu0 %v921
  %v1174 = vpop.f32.mrb[0].mxu0
  %v1175 = vadd.f32 %v962, %v1174
  %v1176 = vpop.f32.mrb[0].mxu0
  %v1177 = vadd.f32 %v963, %v1176
  %v1178 = vpop.f32.mrb[0].mxu0
  %v1179 = vadd.f32 %v966, %v1178
  %v1180 = vpop.f32.mrb[0].mxu0
  %v1181 = vadd.f32 %v967, %v1180
  %1182 = vdwg.mxu0
  %1183 = vmatprep.subr.bf16.mxu0 %v1069
  %1184 = vmatpush1.bf16.msra.mxu0 %v1068
  %1185 = vmatprep.subr.bf16.mxu0 %v1073
  %1186 = vmatpush1.bf16.msra.mxu0 %v1072
  %1187 = vmatprep.subr.bf16.mxu0 %v1077
  %1188 = vmatpush1.bf16.msra.mxu0 %v1076
  %1189 = vmatprep.subr.bf16.mxu0 %v1081
  %1190 = vmatpush1.bf16.msra.mxu0 %v1080
  %1191 = vmatprep.subr.bf16.mxu0 %v1085
  %1192 = vmatpush1.bf16.msra.mxu0 %v1084
  %1193 = vmatprep.subr.bf16.mxu0 %v1089
  %1194 = vmatpush1.bf16.msra.mxu0 %v1088
  %1195 = vmatprep.subr.bf16.mxu0 %v1093
  %1196 = vmatpush1.bf16.msra.mxu0 %v1092
  %1197 = vmatprep.subr.bf16.mxu0 %v1097
  %1198 = vmatpush1.bf16.msra.mxu0 %v1096
  %1199 = vmatprep.subr.bf16.mxu0 0
  %1200 = vmatpush1.bf16.msra.mxu0 0
  %1201 = vmatprep.subr.bf16.mxu0 0
  %1202 = vmatpush1.bf16.msra.mxu0 0
  %1203 = vmatprep.subr.bf16.mxu0 0
  %1204 = vmatpush1.bf16.msra.mxu0 0
  %1205 = vmatprep.subr.bf16.mxu0 0
  %1206 = vmatpush1.bf16.msra.mxu0 0
  %1207 = vmatprep.subr.bf16.mxu0 0
  %1208 = vmatpush1.bf16.msra.mxu0 0
  %1209 = vmatprep.subr.bf16.mxu0 0
  %1210 = vmatpush1.bf16.msra.mxu0 0
  %1211 = vmatprep.subr.bf16.mxu0 0
  %1212 = vmatpush1.bf16.msra.mxu0 0
  %1213 = vmatprep.subr.bf16.mxu0 0
  %1214 = vmatpush1.bf16.msra.mxu0 0
  %1215 = vmatprep.mubr.bf16.mxu0 0
  %1216 = vmatmul.mubr.bf16.gmra.mrb[0].mxu0 %v920
  %v1217 = vpop.f32.mrb[0].mxu0
  %v1218 = vadd.f32 %v956, %v1217
  %v1219 = vpop.f32.mrb[0].mxu0
  %v1220 = vadd.f32 %v957, %v1219
  %v1221 = vpop.f32.mrb[0].mxu0
  %v1222 = vadd.f32 %v960, %v1221
  %v1223 = vpop.f32.mrb[0].mxu0
  %v1224 = vadd.f32 %v961, %v1223
  %1225 = vmatprep.mubr.bf16.mxu0 0
  %1226 = vmatmul.mubr.bf16.gmra.mrb[0].mxu0 %v921
  %v1227 = vpop.f32.mrb[0].mxu0
  %v1228 = vadd.f32 %v964, %v1227
  %v1229 = vpop.f32.mrb[0].mxu0
  %v1230 = vadd.f32 %v965, %v1229
  %v1231 = vpop.f32.mrb[0].mxu0
  %v1232 = vadd.f32 %v968, %v1231
  %v1233 = vpop.f32.mrb[0].mxu0
  %v1234 = vadd.f32 %v969, %v1233
  %1235 = vdwg.mxu0
  %v1236 = vmax.f32 %v1165, 0.0
  %v1237 = vmax.f32 %v1167, 0.0
  %v1238 = vmax.f32 %v1218, 0.0
  %v1239 = vmax.f32 %v1220, 0.0
  %v1240 = vmax.f32 %v1169, 0.0
  %v1241 = vmax.f32 %v1171, 0.0
  %v1242 = vmax.f32 %v1222, 0.0
  %v1243 = vmax.f32 %v1224, 0.0
  %v1244 = vmax.f32 %v1175, 0.0
  %v1245 = vmax.f32 %v1177, 0.0
  %v1246 = vmax.f32 %v1228, 0.0
  %v1247 = vmax.f32 %v1230, 0.0
  %v1248 = vmax.f32 %v1179, 0.0
  %v1249 = vmax.f32 %v1181, 0.0
  %v1250 = vmax.f32 %v1232, 0.0
  %v1251 = vmax.f32 %v1234, 0.0
  %v1252 = vadd.f32 %v1236, %v1237
  %v1253 = vadd.f32 %v1252, %v1238
  %v1254 = vadd.f32 %v1253, %v1239
  %1255 = vadd.xlane.f32.xlu0 %v1254
  %v1256 = vpop.xlane.xlu0 %1255
  %v1257 = vadd.f32 %v1240, %v1241
  %v1258 = vadd.f32 %v1257, %v1242
  %v1259 = vadd.f32 %v1258, %v1243
  %1260 = vadd.xlane.f32.xlu0 %v1259
  %v1261 = vpop.xlane.xlu0 %1260
  %v1262 = vadd.f32 %v1244, %v1245
  %v1263 = vadd.f32 %v1262, %v1246
  %v1264 = vadd.f32 %v1263, %v1247
  %1265 = vadd.xlane.f32.xlu0 %v1264
  %v1266 = vpop.xlane.xlu0 %1265
  %v1267 = vadd.f32 %v1248, %v1249
  %v1268 = vadd.f32 %v1267, %v1250
  %v1269 = vadd.f32 %v1268, %v1251
  %1270 = vadd.xlane.f32.xlu0 %v1269
  %v1271 = vpop.xlane.xlu0 %1270
  %v1272 = vrcp.pop 512.0
  %v1273 = vmul.f32 %v1256, %v1272
  %v1274 = vmul.f32 %v1261, %v1272
  %v1275 = vmul.f32 %v1266, %v1272
  %v1276 = vmul.f32 %v1271, %v1272
  %v1277 = vmul.f32 %v1236, %v1236
  %v1278 = vmul.f32 %v1237, %v1237
  %v1279 = vmul.f32 %v1238, %v1238
  %v1280 = vmul.f32 %v1239, %v1239
  %v1281 = vmul.f32 %v1240, %v1240
  %v1282 = vmul.f32 %v1241, %v1241
  %v1283 = vmul.f32 %v1242, %v1242
  %v1284 = vmul.f32 %v1243, %v1243
  %v1285 = vmul.f32 %v1244, %v1244
  %v1286 = vmul.f32 %v1245, %v1245
  %v1287 = vmul.f32 %v1246, %v1246
  %v1288 = vmul.f32 %v1247, %v1247
  %v1289 = vmul.f32 %v1248, %v1248
  %v1290 = vmul.f32 %v1249, %v1249
  %v1291 = vmul.f32 %v1250, %v1250
  %v1292 = vmul.f32 %v1251, %v1251
  %v1293 = vadd.f32 %v1277, %v1278
  %v1294 = vadd.f32 %v1293, %v1279
  %v1295 = vadd.f32 %v1294, %v1280
  %1296 = vadd.xlane.f32.xlu0 %v1295
  %v1297 = vpop.xlane.xlu0 %1296
  %v1298 = vadd.f32 %v1281, %v1282
  %v1299 = vadd.f32 %v1298, %v1283
  %v1300 = vadd.f32 %v1299, %v1284
  %1301 = vadd.xlane.f32.xlu0 %v1300
  %v1302 = vpop.xlane.xlu0 %1301
  %v1303 = vadd.f32 %v1285, %v1286
  %v1304 = vadd.f32 %v1303, %v1287
  %v1305 = vadd.f32 %v1304, %v1288
  %1306 = vadd.xlane.f32.xlu0 %v1305
  %v1307 = vpop.xlane.xlu0 %1306
  %v1308 = vadd.f32 %v1289, %v1290
  %v1309 = vadd.f32 %v1308, %v1291
  %v1310 = vadd.f32 %v1309, %v1292
  %1311 = vadd.xlane.f32.xlu0 %v1310
  %v1312 = vpop.xlane.xlu0 %1311
  %v1313 = vmul.f32 %v1297, %v1272
  %v1314 = vmul.f32 %v1302, %v1272
  %v1315 = vmul.f32 %v1307, %v1272
  %v1316 = vmul.f32 %v1312, %v1272
  %v1317 = vmul.f32 %v1273, %v1273
  %v1318 = vmul.f32 %v1274, %v1274
  %v1319 = vmul.f32 %v1275, %v1275
  %v1320 = vmul.f32 %v1276, %v1276
  %v1321 = vsub.f32 %v1313, %v1317
  %v1322 = vsub.f32 %v1314, %v1318
  %v1323 = vsub.f32 %v1315, %v1319
  %v1324 = vsub.f32 %v1316, %v1320
  %v1325 = vmax.f32 %v1321, 0.0
  %v1326 = vmax.f32 %v1322, 0.0
  %v1327 = vmax.f32 %v1323, 0.0
  %v1328 = vmax.f32 %v1324, 0.0
  %v1329 = vsub.f32 %v1236, %v1273
  %v1330 = vsub.f32 %v1237, %v1273
  %v1331 = vsub.f32 %v1238, %v1273
  %v1332 = vsub.f32 %v1239, %v1273
  %v1333 = vsub.f32 %v1240, %v1274
  %v1334 = vsub.f32 %v1241, %v1274
  %v1335 = vsub.f32 %v1242, %v1274
  %v1336 = vsub.f32 %v1243, %v1274
  %v1337 = vsub.f32 %v1244, %v1275
  %v1338 = vsub.f32 %v1245, %v1275
  %v1339 = vsub.f32 %v1246, %v1275
  %v1340 = vsub.f32 %v1247, %v1275
  %v1341 = vsub.f32 %v1248, %v1276
  %v1342 = vsub.f32 %v1249, %v1276
  %v1343 = vsub.f32 %v1250, %v1276
  %v1344 = vsub.f32 %v1251, %v1276
  %v1345 = vadd.f32 %v1325, 1e-05
  %v1346 = vadd.f32 %v1326, 1e-05
  %v1347 = vadd.f32 %v1327, 1e-05
  %v1348 = vadd.f32 %v1328, 1e-05
  %v1349 = vrsqrt.pop %v1345
  %v1350 = vrsqrt.pop %v1346
  %v1351 = vrsqrt.pop %v1347
  %v1352 = vrsqrt.pop %v1348
  %v1353 = vmul.f32 %v1329, %v1349
  %v1354 = vmul.f32 %v1330, %v1349
  %v1355 = vmul.f32 %v1331, %v1349
  %v1356 = vmul.f32 %v1332, %v1349
  %v1357 = vmul.f32 %v1333, %v1350
  %v1358 = vmul.f32 %v1334, %v1350
  %v1359 = vmul.f32 %v1335, %v1350
  %v1360 = vmul.f32 %v1336, %v1350
  %v1361 = vmul.f32 %v1337, %v1351
  %v1362 = vmul.f32 %v1338, %v1351
  %v1363 = vmul.f32 %v1339, %v1351
  %v1364 = vmul.f32 %v1340, %v1351
  %v1365 = vmul.f32 %v1341, %v1352
  %v1366 = vmul.f32 %v1342, %v1352
  %v1367 = vmul.f32 %v1343, %v1352
  %v1368 = vmul.f32 %v1344, %v1352
  %s1369 = scalar_lea.vmem %s3, 80
  %v1370 = vld [vmem:[%s1369] sm:$0xf]
  %v1371 = vld [vmem:[%s1369 + $0x4] sm:$0xf]
  %v1372 = vpack.c.bf16 %v1357, %v1353
  %v1373 = vpack.c.bf16 %v1358, %v1354
  %v1374 = vpack.c.bf16 %v1359, %v1355
  %v1375 = vpack.c.bf16 %v1360, %v1356
  %v1376 = vpack.c.bf16 %v1365, %v1361
  %v1377 = vpack.c.bf16 %v1366, %v1362
  %v1378 = vpack.c.bf16 %v1367, %v1363
  %v1379 = vpack.c.bf16 %v1368, %v1364
  %v1382 = vunpack.c.l.b16 %v1370
  %v1383 = vunpack.c.l.b16 %v1371
  %v1384 = vpack.c.b16 %v1383, %v1382
  %v1386 = vsel %vm266, %v1384, 0
  %1388 = vmatprep.subr.bf16.mxu0 %v1373
  %1389 = vmatpush1.bf16.msra.mxu0 %v1372
  %1390 = vmatprep.subr.bf16.mxu0 %v1377
  %1391 = vmatpush1.bf16.msra.mxu0 %v1376
  %1392 = vmatprep.subr.bf16.mxu0 0
  %1393 = vmatpush1.bf16.msra.mxu0 0
  %1394 = vmatprep.subr.bf16.mxu0 0
  %1395 = vmatpush1.bf16.msra.mxu0 0
  %1396 = vmatprep.subr.bf16.mxu0 0
  %1397 = vmatpush1.bf16.msra.mxu0 0
  %1398 = vmatprep.subr.bf16.mxu0 0
  %1399 = vmatpush1.bf16.msra.mxu0 0
  %1400 = vmatprep.subr.bf16.mxu0 0
  %1401 = vmatpush1.bf16.msra.mxu0 0
  %1402 = vmatprep.subr.bf16.mxu0 0
  %1403 = vmatpush1.bf16.msra.mxu0 0
  %1404 = vmatprep.subr.bf16.mxu0 0
  %1405 = vmatpush1.bf16.msra.mxu0 0
  %1406 = vmatprep.subr.bf16.mxu0 0
  %1407 = vmatpush1.bf16.msra.mxu0 0
  %1408 = vmatprep.subr.bf16.mxu0 0
  %1409 = vmatpush1.bf16.msra.mxu0 0
  %1410 = vmatprep.subr.bf16.mxu0 0
  %1411 = vmatpush1.bf16.msra.mxu0 0
  %1412 = vmatprep.subr.bf16.mxu0 0
  %1413 = vmatpush1.bf16.msra.mxu0 0
  %1414 = vmatprep.subr.bf16.mxu0 0
  %1415 = vmatpush1.bf16.msra.mxu0 0
  %1416 = vmatprep.subr.bf16.mxu0 0
  %1417 = vmatpush1.bf16.msra.mxu0 0
  %1418 = vmatprep.subr.bf16.mxu0 0
  %1419 = vmatpush1.bf16.msra.mxu0 0
  %1420 = vmatprep.mubr.bf16.mxu0 0
  %1421 = vmatmul.mubr.bf16.gmra.mrb[0].mxu0 %v1386
  %v1422 = vpop.f32.mrb[0].mxu0
  %v1423 = vadd.f32 0.0, %v1422
  %v1424 = vpop.f32.mrb[0].mxu0
  %v1425 = vadd.f32 0.0, %v1424
  %v1426 = vpop.f32.mrb[0].mxu0
  %v1427 = vadd.f32 0.0, %v1426
  %v1428 = vpop.f32.mrb[0].mxu0
  %v1429 = vadd.f32 0.0, %v1428
  %1430 = vdwg.mxu0
  %1431 = vmatprep.subr.bf16.mxu0 %v1375
  %1432 = vmatpush1.bf16.msra.mxu0 %v1374
  %1433 = vmatprep.subr.bf16.mxu0 %v1379
  %1434 = vmatpush1.bf16.msra.mxu0 %v1378
  %1435 = vmatprep.subr.bf16.mxu0 0
  %1436 = vmatpush1.bf16.msra.mxu0 0
  %1437 = vmatprep.subr.bf16.mxu0 0
  %1438 = vmatpush1.bf16.msra.mxu0 0
  %1439 = vmatprep.subr.bf16.mxu0 0
  %1440 = vmatpush1.bf16.msra.mxu0 0
  %1441 = vmatprep.subr.bf16.mxu0 0
  %1442 = vmatpush1.bf16.msra.mxu0 0
  %1443 = vmatprep.subr.bf16.mxu0 0
  %1444 = vmatpush1.bf16.msra.mxu0 0
  %1445 = vmatprep.subr.bf16.mxu0 0
  %1446 = vmatpush1.bf16.msra.mxu0 0
  %1447 = vmatprep.subr.bf16.mxu0 0
  %1448 = vmatpush1.bf16.msra.mxu0 0
  %1449 = vmatprep.subr.bf16.mxu0 0
  %1450 = vmatpush1.bf16.msra.mxu0 0
  %1451 = vmatprep.subr.bf16.mxu0 0
  %1452 = vmatpush1.bf16.msra.mxu0 0
  %1453 = vmatprep.subr.bf16.mxu0 0
  %1454 = vmatpush1.bf16.msra.mxu0 0
  %1455 = vmatprep.subr.bf16.mxu0 0
  %1456 = vmatpush1.bf16.msra.mxu0 0
  %1457 = vmatprep.subr.bf16.mxu0 0
  %1458 = vmatpush1.bf16.msra.mxu0 0
  %1459 = vmatprep.subr.bf16.mxu0 0
  %1460 = vmatpush1.bf16.msra.mxu0 0
  %1461 = vmatprep.subr.bf16.mxu0 0
  %1462 = vmatpush1.bf16.msra.mxu0 0
  %1463 = vmatprep.mubr.bf16.mxu0 0
  %1464 = vmatmul.mubr.bf16.gmra.mrb[0].mxu0 %v1386
  %v1465 = vpop.f32.mrb[0].mxu0
  %v1466 = vadd.f32 0.0, %v1465
  %v1467 = vpop.f32.mrb[0].mxu0
  %v1468 = vadd.f32 0.0, %v1467
  %v1469 = vpop.f32.mrb[0].mxu0
  %v1470 = vadd.f32 0.0, %v1469
  %v1471 = vpop.f32.mrb[0].mxu0
  %v1472 = vadd.f32 0.0, %v1471
  %1473 = vdwg.mxu0
  %v1474 = vpack.c.bf16 %v1427, %v1423
  %v1475 = vpack.c.bf16 %v1429, %v1425
  %v1476 = vpack.c.bf16 %v1470, %v1466
  %v1477 = vpack.c.bf16 %v1472, %v1468
  %v1478 = vld [vmem:[%s5] sm:$0xff]
  %v1479 = vld [vmem:[%s5 + $0x8] sm:$0xff]
  %v1480 = vld [vmem:[%s5 + $0x10] sm:$0xff]
  %v1481 = vld [vmem:[%s5 + $0x18] sm:$0xff]
  %v1482 = vld [vmem:[%s5 + $0x20] sm:$0xff]
  %v1483 = vld [vmem:[%s5 + $0x28] sm:$0xff]
  %v1484 = vld [vmem:[%s5 + $0x30] sm:$0xff]
  %v1485 = vld [vmem:[%s5 + $0x38] sm:$0xff]
  %v1486 = vld [vmem:[%s5 + $0x40] sm:$0xff]
  %v1487 = vld [vmem:[%s5 + $0x48] sm:$0xff]
  %v1488 = vld [vmem:[%s5 + $0x50] sm:$0xff]
  %v1489 = vld [vmem:[%s5 + $0x58] sm:$0xff]
  %v1490 = vld [vmem:[%s5 + $0x60] sm:$0xff]
  %v1491 = vld [vmem:[%s5 + $0x68] sm:$0xff]
  %v1492 = vld [vmem:[%s5 + $0x70] sm:$0xff]
  %v1493 = vld [vmem:[%s5 + $0x78] sm:$0xff]
  %v1494 = vld [vmem:[%s5 + $0x80] sm:$0xff]
  %v1495 = vld [vmem:[%s5 + $0x88] sm:$0xff]
  %v1496 = vld [vmem:[%s5 + $0x90] sm:$0xff]
  %v1497 = vld [vmem:[%s5 + $0x98] sm:$0xff]
  %v1498 = vld [vmem:[%s5 + $0xa0] sm:$0xff]
  %v1499 = vld [vmem:[%s5 + $0xa8] sm:$0xff]
  %v1500 = vld [vmem:[%s5 + $0xb0] sm:$0xff]
  %v1501 = vld [vmem:[%s5 + $0xb8] sm:$0xff]
  %v1502 = vld [vmem:[%s5 + $0xc0] sm:$0xff]
  %v1503 = vld [vmem:[%s5 + $0xc8] sm:$0xff]
  %v1504 = vld [vmem:[%s5 + $0xd0] sm:$0xff]
  %v1505 = vld [vmem:[%s5 + $0xd8] sm:$0xff]
  %v1506 = vld [vmem:[%s5 + $0xe0] sm:$0xff]
  %v1507 = vld [vmem:[%s5 + $0xe8] sm:$0xff]
  %v1508 = vld [vmem:[%s5 + $0xf0] sm:$0xff]
  %v1509 = vld [vmem:[%s5 + $0xf8] sm:$0xff]
  %v1510 = vld [vmem:[%s5 + $0x100] sm:$0xff]
  %v1511 = vld [vmem:[%s5 + $0x108] sm:$0xff]
  %v1512 = vld [vmem:[%s5 + $0x110] sm:$0xff]
  %v1513 = vld [vmem:[%s5 + $0x118] sm:$0xff]
  %v1514 = vld [vmem:[%s5 + $0x120] sm:$0xff]
  %v1515 = vld [vmem:[%s5 + $0x128] sm:$0xff]
  %v1516 = vld [vmem:[%s5 + $0x130] sm:$0xff]
  %v1517 = vld [vmem:[%s5 + $0x138] sm:$0xff]
  %v1518 = vld [vmem:[%s5 + $0x140] sm:$0xff]
  %v1519 = vld [vmem:[%s5 + $0x148] sm:$0xff]
  %v1520 = vld [vmem:[%s5 + $0x150] sm:$0xff]
  %v1521 = vld [vmem:[%s5 + $0x158] sm:$0xff]
  %v1522 = vld [vmem:[%s5 + $0x160] sm:$0xff]
  %v1523 = vld [vmem:[%s5 + $0x168] sm:$0xff]
  %v1524 = vld [vmem:[%s5 + $0x170] sm:$0xff]
  %v1525 = vld [vmem:[%s5 + $0x178] sm:$0xff]
  %v1526 = vld [vmem:[%s5 + $0x180] sm:$0xff]
  %v1527 = vld [vmem:[%s5 + $0x188] sm:$0xff]
  %v1528 = vld [vmem:[%s5 + $0x190] sm:$0xff]
  %v1529 = vld [vmem:[%s5 + $0x198] sm:$0xff]
  %v1530 = vld [vmem:[%s5 + $0x1a0] sm:$0xff]
  %v1531 = vld [vmem:[%s5 + $0x1a8] sm:$0xff]
  %v1532 = vld [vmem:[%s5 + $0x1b0] sm:$0xff]
  %v1533 = vld [vmem:[%s5 + $0x1b8] sm:$0xff]
  %v1534 = vld [vmem:[%s5 + $0x1c0] sm:$0xff]
  %v1535 = vld [vmem:[%s5 + $0x1c8] sm:$0xff]
  %v1536 = vld [vmem:[%s5 + $0x1d0] sm:$0xff]
  %v1537 = vld [vmem:[%s5 + $0x1d8] sm:$0xff]
  %v1538 = vld [vmem:[%s5 + $0x1e0] sm:$0xff]
  %v1539 = vld [vmem:[%s5 + $0x1e8] sm:$0xff]
  %v1540 = vld [vmem:[%s5 + $0x1f0] sm:$0xff]
  %v1541 = vld [vmem:[%s5 + $0x1f8] sm:$0xff]
  %v1542 = vld [vmem:[%s5 + $0x200] sm:$0xff]
  %v1543 = vld [vmem:[%s5 + $0x208] sm:$0xff]
  %v1544 = vld [vmem:[%s5 + $0x210] sm:$0xff]
  %v1545 = vld [vmem:[%s5 + $0x218] sm:$0xff]
  %v1546 = vld [vmem:[%s5 + $0x220] sm:$0xff]
  %v1547 = vld [vmem:[%s5 + $0x228] sm:$0xff]
  %v1548 = vld [vmem:[%s5 + $0x230] sm:$0xff]
  %v1549 = vld [vmem:[%s5 + $0x238] sm:$0xff]
  %v1550 = vld [vmem:[%s5 + $0x240] sm:$0xff]
  %v1551 = vld [vmem:[%s5 + $0x248] sm:$0xff]
  %v1552 = vld [vmem:[%s5 + $0x250] sm:$0xff]
  %v1553 = vld [vmem:[%s5 + $0x258] sm:$0xff]
  %v1554 = vld [vmem:[%s5 + $0x260] sm:$0xff]
  %v1555 = vld [vmem:[%s5 + $0x268] sm:$0xff]
  %v1556 = vld [vmem:[%s5 + $0x270] sm:$0xff]
  %v1557 = vld [vmem:[%s5 + $0x278] sm:$0xff]
  %v1558 = vld [vmem:[%s5 + $0x280] sm:$0xff]
  %v1559 = vld [vmem:[%s5 + $0x288] sm:$0xff]
  %v1560 = vld [vmem:[%s5 + $0x290] sm:$0xff]
  %v1561 = vld [vmem:[%s5 + $0x298] sm:$0xff]
  %v1562 = vld [vmem:[%s5 + $0x2a0] sm:$0xff]
  %v1563 = vld [vmem:[%s5 + $0x2a8] sm:$0xff]
  %v1564 = vld [vmem:[%s5 + $0x2b0] sm:$0xff]
  %v1565 = vld [vmem:[%s5 + $0x2b8] sm:$0xff]
  %v1566 = vld [vmem:[%s5 + $0x2c0] sm:$0xff]
  %v1567 = vld [vmem:[%s5 + $0x2c8] sm:$0xff]
  %v1568 = vld [vmem:[%s5 + $0x2d0] sm:$0xff]
  %v1569 = vld [vmem:[%s5 + $0x2d8] sm:$0xff]
  %v1570 = vld [vmem:[%s5 + $0x2e0] sm:$0xff]
  %v1571 = vld [vmem:[%s5 + $0x2e8] sm:$0xff]
  %v1572 = vld [vmem:[%s5 + $0x2f0] sm:$0xff]
  %v1573 = vld [vmem:[%s5 + $0x2f8] sm:$0xff]
  %v1574 = vld [vmem:[%s5 + $0x300] sm:$0xff]
  %v1575 = vld [vmem:[%s5 + $0x308] sm:$0xff]
  %v1576 = vld [vmem:[%s5 + $0x310] sm:$0xff]
  %v1577 = vld [vmem:[%s5 + $0x318] sm:$0xff]
  %v1578 = vld [vmem:[%s5 + $0x320] sm:$0xff]
  %v1579 = vld [vmem:[%s5 + $0x328] sm:$0xff]
  %v1580 = vld [vmem:[%s5 + $0x330] sm:$0xff]
  %v1581 = vld [vmem:[%s5 + $0x338] sm:$0xff]
  %v1582 = vld [vmem:[%s5 + $0x340] sm:$0xff]
  %v1583 = vld [vmem:[%s5 + $0x348] sm:$0xff]
  %v1584 = vld [vmem:[%s5 + $0x350] sm:$0xff]
  %v1585 = vld [vmem:[%s5 + $0x358] sm:$0xff]
  %v1586 = vld [vmem:[%s5 + $0x360] sm:$0xff]
  %v1587 = vld [vmem:[%s5 + $0x368] sm:$0xff]
  %v1588 = vld [vmem:[%s5 + $0x370] sm:$0xff]
  %v1589 = vld [vmem:[%s5 + $0x378] sm:$0xff]
  %v1590 = vld [vmem:[%s5 + $0x380] sm:$0xff]
  %v1591 = vld [vmem:[%s5 + $0x388] sm:$0xff]
  %v1592 = vld [vmem:[%s5 + $0x390] sm:$0xff]
  %v1593 = vld [vmem:[%s5 + $0x398] sm:$0xff]
  %v1594 = vld [vmem:[%s5 + $0x3a0] sm:$0xff]
  %v1595 = vld [vmem:[%s5 + $0x3a8] sm:$0xff]
  %v1596 = vld [vmem:[%s5 + $0x3b0] sm:$0xff]
  %v1597 = vld [vmem:[%s5 + $0x3b8] sm:$0xff]
  %v1598 = vld [vmem:[%s5 + $0x3c0] sm:$0xff]
  %v1599 = vld [vmem:[%s5 + $0x3c8] sm:$0xff]
  %v1600 = vld [vmem:[%s5 + $0x3d0] sm:$0xff]
  %v1601 = vld [vmem:[%s5 + $0x3d8] sm:$0xff]
  %v1602 = vld [vmem:[%s5 + $0x3e0] sm:$0xff]
  %v1603 = vld [vmem:[%s5 + $0x3e8] sm:$0xff]
  %v1604 = vld [vmem:[%s5 + $0x3f0] sm:$0xff]
  %v1605 = vld [vmem:[%s5 + $0x3f8] sm:$0xff]
  %v1734 = vunpack.c.l.b16 %v1478
  %v1735 = vunpack.c.h.b16 %v1478
  %v1736 = vunpack.c.l.b16 %v1479
  %v1737 = vunpack.c.h.b16 %v1479
  %v1738 = vunpack.c.l.b16 %v1480
  %v1739 = vunpack.c.h.b16 %v1480
  %v1740 = vunpack.c.l.b16 %v1481
  %v1741 = vunpack.c.h.b16 %v1481
  %v1742 = vunpack.c.l.b16 %v1482
  %v1743 = vunpack.c.h.b16 %v1482
  %v1744 = vunpack.c.l.b16 %v1483
  %v1745 = vunpack.c.h.b16 %v1483
  %v1746 = vunpack.c.l.b16 %v1484
  %v1747 = vunpack.c.h.b16 %v1484
  %v1748 = vunpack.c.l.b16 %v1485
  %v1749 = vunpack.c.h.b16 %v1485
  %v1750 = vunpack.c.l.b16 %v1486
  %v1751 = vunpack.c.h.b16 %v1486
  %v1752 = vunpack.c.l.b16 %v1487
  %v1753 = vunpack.c.h.b16 %v1487
  %v1754 = vunpack.c.l.b16 %v1488
  %v1755 = vunpack.c.h.b16 %v1488
  %v1756 = vunpack.c.l.b16 %v1489
  %v1757 = vunpack.c.h.b16 %v1489
  %v1758 = vunpack.c.l.b16 %v1490
  %v1759 = vunpack.c.h.b16 %v1490
  %v1760 = vunpack.c.l.b16 %v1491
  %v1761 = vunpack.c.h.b16 %v1491
  %v1762 = vunpack.c.l.b16 %v1492
  %v1763 = vunpack.c.h.b16 %v1492
  %v1764 = vunpack.c.l.b16 %v1493
  %v1765 = vunpack.c.h.b16 %v1493
  %v1766 = vunpack.c.l.b16 %v1494
  %v1767 = vunpack.c.h.b16 %v1494
  %v1768 = vunpack.c.l.b16 %v1495
  %v1769 = vunpack.c.h.b16 %v1495
  %v1770 = vunpack.c.l.b16 %v1496
  %v1771 = vunpack.c.h.b16 %v1496
  %v1772 = vunpack.c.l.b16 %v1497
  %v1773 = vunpack.c.h.b16 %v1497
  %v1774 = vunpack.c.l.b16 %v1498
  %v1775 = vunpack.c.h.b16 %v1498
  %v1776 = vunpack.c.l.b16 %v1499
  %v1777 = vunpack.c.h.b16 %v1499
  %v1778 = vunpack.c.l.b16 %v1500
  %v1779 = vunpack.c.h.b16 %v1500
  %v1780 = vunpack.c.l.b16 %v1501
  %v1781 = vunpack.c.h.b16 %v1501
  %v1782 = vunpack.c.l.b16 %v1502
  %v1783 = vunpack.c.h.b16 %v1502
  %v1784 = vunpack.c.l.b16 %v1503
  %v1785 = vunpack.c.h.b16 %v1503
  %v1786 = vunpack.c.l.b16 %v1504
  %v1787 = vunpack.c.h.b16 %v1504
  %v1788 = vunpack.c.l.b16 %v1505
  %v1789 = vunpack.c.h.b16 %v1505
  %v1790 = vunpack.c.l.b16 %v1506
  %v1791 = vunpack.c.h.b16 %v1506
  %v1792 = vunpack.c.l.b16 %v1507
  %v1793 = vunpack.c.h.b16 %v1507
  %v1794 = vunpack.c.l.b16 %v1508
  %v1795 = vunpack.c.h.b16 %v1508
  %v1796 = vunpack.c.l.b16 %v1509
  %v1797 = vunpack.c.h.b16 %v1509
  %v1798 = vunpack.c.l.b16 %v1510
  %v1799 = vunpack.c.h.b16 %v1510
  %v1800 = vunpack.c.l.b16 %v1511
  %v1801 = vunpack.c.h.b16 %v1511
  %v1802 = vunpack.c.l.b16 %v1512
  %v1803 = vunpack.c.h.b16 %v1512
  %v1804 = vunpack.c.l.b16 %v1513
  %v1805 = vunpack.c.h.b16 %v1513
  %v1806 = vunpack.c.l.b16 %v1514
  %v1807 = vunpack.c.h.b16 %v1514
  %v1808 = vunpack.c.l.b16 %v1515
  %v1809 = vunpack.c.h.b16 %v1515
  %v1810 = vunpack.c.l.b16 %v1516
  %v1811 = vunpack.c.h.b16 %v1516
  %v1812 = vunpack.c.l.b16 %v1517
  %v1813 = vunpack.c.h.b16 %v1517
  %v1814 = vunpack.c.l.b16 %v1518
  %v1815 = vunpack.c.h.b16 %v1518
  %v1816 = vunpack.c.l.b16 %v1519
  %v1817 = vunpack.c.h.b16 %v1519
  %v1818 = vunpack.c.l.b16 %v1520
  %v1819 = vunpack.c.h.b16 %v1520
  %v1820 = vunpack.c.l.b16 %v1521
  %v1821 = vunpack.c.h.b16 %v1521
  %v1822 = vunpack.c.l.b16 %v1522
  %v1823 = vunpack.c.h.b16 %v1522
  %v1824 = vunpack.c.l.b16 %v1523
  %v1825 = vunpack.c.h.b16 %v1523
  %v1826 = vunpack.c.l.b16 %v1524
  %v1827 = vunpack.c.h.b16 %v1524
  %v1828 = vunpack.c.l.b16 %v1525
  %v1829 = vunpack.c.h.b16 %v1525
  %v1830 = vunpack.c.l.b16 %v1526
  %v1831 = vunpack.c.h.b16 %v1526
  %v1832 = vunpack.c.l.b16 %v1527
  %v1833 = vunpack.c.h.b16 %v1527
  %v1834 = vunpack.c.l.b16 %v1528
  %v1835 = vunpack.c.h.b16 %v1528
  %v1836 = vunpack.c.l.b16 %v1529
  %v1837 = vunpack.c.h.b16 %v1529
  %v1838 = vunpack.c.l.b16 %v1530
  %v1839 = vunpack.c.h.b16 %v1530
  %v1840 = vunpack.c.l.b16 %v1531
  %v1841 = vunpack.c.h.b16 %v1531
  %v1842 = vunpack.c.l.b16 %v1532
  %v1843 = vunpack.c.h.b16 %v1532
  %v1844 = vunpack.c.l.b16 %v1533
  %v1845 = vunpack.c.h.b16 %v1533
  %v1846 = vunpack.c.l.b16 %v1534
  %v1847 = vunpack.c.h.b16 %v1534
  %v1848 = vunpack.c.l.b16 %v1535
  %v1849 = vunpack.c.h.b16 %v1535
  %v1850 = vunpack.c.l.b16 %v1536
  %v1851 = vunpack.c.h.b16 %v1536
  %v1852 = vunpack.c.l.b16 %v1537
  %v1853 = vunpack.c.h.b16 %v1537
  %v1854 = vunpack.c.l.b16 %v1538
  %v1855 = vunpack.c.h.b16 %v1538
  %v1856 = vunpack.c.l.b16 %v1539
  %v1857 = vunpack.c.h.b16 %v1539
  %v1858 = vunpack.c.l.b16 %v1540
  %v1859 = vunpack.c.h.b16 %v1540
  %v1860 = vunpack.c.l.b16 %v1541
  %v1861 = vunpack.c.h.b16 %v1541
  %v1862 = vunpack.c.l.b16 %v1542
  %v1863 = vunpack.c.h.b16 %v1542
  %v1864 = vunpack.c.l.b16 %v1543
  %v1865 = vunpack.c.h.b16 %v1543
  %v1866 = vunpack.c.l.b16 %v1544
  %v1867 = vunpack.c.h.b16 %v1544
  %v1868 = vunpack.c.l.b16 %v1545
  %v1869 = vunpack.c.h.b16 %v1545
  %v1870 = vunpack.c.l.b16 %v1546
  %v1871 = vunpack.c.h.b16 %v1546
  %v1872 = vunpack.c.l.b16 %v1547
  %v1873 = vunpack.c.h.b16 %v1547
  %v1874 = vunpack.c.l.b16 %v1548
  %v1875 = vunpack.c.h.b16 %v1548
  %v1876 = vunpack.c.l.b16 %v1549
  %v1877 = vunpack.c.h.b16 %v1549
  %v1878 = vunpack.c.l.b16 %v1550
  %v1879 = vunpack.c.h.b16 %v1550
  %v1880 = vunpack.c.l.b16 %v1551
  %v1881 = vunpack.c.h.b16 %v1551
  %v1882 = vunpack.c.l.b16 %v1552
  %v1883 = vunpack.c.h.b16 %v1552
  %v1884 = vunpack.c.l.b16 %v1553
  %v1885 = vunpack.c.h.b16 %v1553
  %v1886 = vunpack.c.l.b16 %v1554
  %v1887 = vunpack.c.h.b16 %v1554
  %v1888 = vunpack.c.l.b16 %v1555
  %v1889 = vunpack.c.h.b16 %v1555
  %v1890 = vunpack.c.l.b16 %v1556
  %v1891 = vunpack.c.h.b16 %v1556
  %v1892 = vunpack.c.l.b16 %v1557
  %v1893 = vunpack.c.h.b16 %v1557
  %v1894 = vunpack.c.l.b16 %v1558
  %v1895 = vunpack.c.h.b16 %v1558
  %v1896 = vunpack.c.l.b16 %v1559
  %v1897 = vunpack.c.h.b16 %v1559
  %v1898 = vunpack.c.l.b16 %v1560
  %v1899 = vunpack.c.h.b16 %v1560
  %v1900 = vunpack.c.l.b16 %v1561
  %v1901 = vunpack.c.h.b16 %v1561
  %v1902 = vunpack.c.l.b16 %v1562
  %v1903 = vunpack.c.h.b16 %v1562
  %v1904 = vunpack.c.l.b16 %v1563
  %v1905 = vunpack.c.h.b16 %v1563
  %v1906 = vunpack.c.l.b16 %v1564
  %v1907 = vunpack.c.h.b16 %v1564
  %v1908 = vunpack.c.l.b16 %v1565
  %v1909 = vunpack.c.h.b16 %v1565
  %v1910 = vunpack.c.l.b16 %v1566
  %v1911 = vunpack.c.h.b16 %v1566
  %v1912 = vunpack.c.l.b16 %v1567
  %v1913 = vunpack.c.h.b16 %v1567
  %v1914 = vunpack.c.l.b16 %v1568
  %v1915 = vunpack.c.h.b16 %v1568
  %v1916 = vunpack.c.l.b16 %v1569
  %v1917 = vunpack.c.h.b16 %v1569
  %v1918 = vunpack.c.l.b16 %v1570
  %v1919 = vunpack.c.h.b16 %v1570
  %v1920 = vunpack.c.l.b16 %v1571
  %v1921 = vunpack.c.h.b16 %v1571
  %v1922 = vunpack.c.l.b16 %v1572
  %v1923 = vunpack.c.h.b16 %v1572
  %v1924 = vunpack.c.l.b16 %v1573
  %v1925 = vunpack.c.h.b16 %v1573
  %v1926 = vunpack.c.l.b16 %v1574
  %v1927 = vunpack.c.h.b16 %v1574
  %v1928 = vunpack.c.l.b16 %v1575
  %v1929 = vunpack.c.h.b16 %v1575
  %v1930 = vunpack.c.l.b16 %v1576
  %v1931 = vunpack.c.h.b16 %v1576
  %v1932 = vunpack.c.l.b16 %v1577
  %v1933 = vunpack.c.h.b16 %v1577
  %v1934 = vunpack.c.l.b16 %v1578
  %v1935 = vunpack.c.h.b16 %v1578
  %v1936 = vunpack.c.l.b16 %v1579
  %v1937 = vunpack.c.h.b16 %v1579
  %v1938 = vunpack.c.l.b16 %v1580
  %v1939 = vunpack.c.h.b16 %v1580
  %v1940 = vunpack.c.l.b16 %v1581
  %v1941 = vunpack.c.h.b16 %v1581
  %v1942 = vunpack.c.l.b16 %v1582
  %v1943 = vunpack.c.h.b16 %v1582
  %v1944 = vunpack.c.l.b16 %v1583
  %v1945 = vunpack.c.h.b16 %v1583
  %v1946 = vunpack.c.l.b16 %v1584
  %v1947 = vunpack.c.h.b16 %v1584
  %v1948 = vunpack.c.l.b16 %v1585
  %v1949 = vunpack.c.h.b16 %v1585
  %v1950 = vunpack.c.l.b16 %v1586
  %v1951 = vunpack.c.h.b16 %v1586
  %v1952 = vunpack.c.l.b16 %v1587
  %v1953 = vunpack.c.h.b16 %v1587
  %v1954 = vunpack.c.l.b16 %v1588
  %v1955 = vunpack.c.h.b16 %v1588
  %v1956 = vunpack.c.l.b16 %v1589
  %v1957 = vunpack.c.h.b16 %v1589
  %v1958 = vunpack.c.l.b16 %v1590
  %v1959 = vunpack.c.h.b16 %v1590
  %v1960 = vunpack.c.l.b16 %v1591
  %v1961 = vunpack.c.h.b16 %v1591
  %v1962 = vunpack.c.l.b16 %v1592
  %v1963 = vunpack.c.h.b16 %v1592
  %v1964 = vunpack.c.l.b16 %v1593
  %v1965 = vunpack.c.h.b16 %v1593
  %v1966 = vunpack.c.l.b16 %v1594
  %v1967 = vunpack.c.h.b16 %v1594
  %v1968 = vunpack.c.l.b16 %v1595
  %v1969 = vunpack.c.h.b16 %v1595
  %v1970 = vunpack.c.l.b16 %v1596
  %v1971 = vunpack.c.h.b16 %v1596
  %v1972 = vunpack.c.l.b16 %v1597
  %v1973 = vunpack.c.h.b16 %v1597
  %v1974 = vunpack.c.l.b16 %v1598
  %v1975 = vunpack.c.h.b16 %v1598
  %v1976 = vunpack.c.l.b16 %v1599
  %v1977 = vunpack.c.h.b16 %v1599
  %v1978 = vunpack.c.l.b16 %v1600
  %v1979 = vunpack.c.h.b16 %v1600
  %v1980 = vunpack.c.l.b16 %v1601
  %v1981 = vunpack.c.h.b16 %v1601
  %v1982 = vunpack.c.l.b16 %v1602
  %v1983 = vunpack.c.h.b16 %v1602
  %v1984 = vunpack.c.l.b16 %v1603
  %v1985 = vunpack.c.h.b16 %v1603
  %v1986 = vunpack.c.l.b16 %v1604
  %v1987 = vunpack.c.h.b16 %v1604
  %v1988 = vunpack.c.l.b16 %v1605
  %v1989 = vunpack.c.h.b16 %v1605
  %v1990 = vpack.c.b16 %v1738, %v1734
  %v1991 = vpack.c.b16 %v1739, %v1735
  %v1992 = vpack.c.b16 %v1740, %v1736
  %v1993 = vpack.c.b16 %v1741, %v1737
  %v1994 = vpack.c.b16 %v1746, %v1742
  %v1995 = vpack.c.b16 %v1747, %v1743
  %v1996 = vpack.c.b16 %v1748, %v1744
  %v1997 = vpack.c.b16 %v1749, %v1745
  %v1998 = vpack.c.b16 %v1754, %v1750
  %v1999 = vpack.c.b16 %v1755, %v1751
  %v2000 = vpack.c.b16 %v1756, %v1752
  %v2001 = vpack.c.b16 %v1757, %v1753
  %v2002 = vpack.c.b16 %v1762, %v1758
  %v2003 = vpack.c.b16 %v1763, %v1759
  %v2004 = vpack.c.b16 %v1764, %v1760
  %v2005 = vpack.c.b16 %v1765, %v1761
  %v2006 = vpack.c.b16 %v1770, %v1766
  %v2007 = vpack.c.b16 %v1771, %v1767
  %v2008 = vpack.c.b16 %v1772, %v1768
  %v2009 = vpack.c.b16 %v1773, %v1769
  %v2010 = vpack.c.b16 %v1778, %v1774
  %v2011 = vpack.c.b16 %v1779, %v1775
  %v2012 = vpack.c.b16 %v1780, %v1776
  %v2013 = vpack.c.b16 %v1781, %v1777
  %v2014 = vpack.c.b16 %v1786, %v1782
  %v2015 = vpack.c.b16 %v1787, %v1783
  %v2016 = vpack.c.b16 %v1788, %v1784
  %v2017 = vpack.c.b16 %v1789, %v1785
  %v2018 = vpack.c.b16 %v1794, %v1790
  %v2019 = vpack.c.b16 %v1795, %v1791
  %v2020 = vpack.c.b16 %v1796, %v1792
  %v2021 = vpack.c.b16 %v1797, %v1793
  %v2022 = vpack.c.b16 %v1802, %v1798
  %v2023 = vpack.c.b16 %v1803, %v1799
  %v2024 = vpack.c.b16 %v1804, %v1800
  %v2025 = vpack.c.b16 %v1805, %v1801
  %v2026 = vpack.c.b16 %v1810, %v1806
  %v2027 = vpack.c.b16 %v1811, %v1807
  %v2028 = vpack.c.b16 %v1812, %v1808
  %v2029 = vpack.c.b16 %v1813, %v1809
  %v2030 = vpack.c.b16 %v1818, %v1814
  %v2031 = vpack.c.b16 %v1819, %v1815
  %v2032 = vpack.c.b16 %v1820, %v1816
  %v2033 = vpack.c.b16 %v1821, %v1817
  %v2034 = vpack.c.b16 %v1826, %v1822
  %v2035 = vpack.c.b16 %v1827, %v1823
  %v2036 = vpack.c.b16 %v1828, %v1824
  %v2037 = vpack.c.b16 %v1829, %v1825
  %v2038 = vpack.c.b16 %v1834, %v1830
  %v2039 = vpack.c.b16 %v1835, %v1831
  %v2040 = vpack.c.b16 %v1836, %v1832
  %v2041 = vpack.c.b16 %v1837, %v1833
  %v2042 = vpack.c.b16 %v1842, %v1838
  %v2043 = vpack.c.b16 %v1843, %v1839
  %v2044 = vpack.c.b16 %v1844, %v1840
  %v2045 = vpack.c.b16 %v1845, %v1841
  %v2046 = vpack.c.b16 %v1850, %v1846
  %v2047 = vpack.c.b16 %v1851, %v1847
  %v2048 = vpack.c.b16 %v1852, %v1848
  %v2049 = vpack.c.b16 %v1853, %v1849
  %v2050 = vpack.c.b16 %v1858, %v1854
  %v2051 = vpack.c.b16 %v1859, %v1855
  %v2052 = vpack.c.b16 %v1860, %v1856
  %v2053 = vpack.c.b16 %v1861, %v1857
  %v2054 = vpack.c.b16 %v1866, %v1862
  %v2055 = vpack.c.b16 %v1867, %v1863
  %v2056 = vpack.c.b16 %v1868, %v1864
  %v2057 = vpack.c.b16 %v1869, %v1865
  %v2058 = vpack.c.b16 %v1874, %v1870
  %v2059 = vpack.c.b16 %v1875, %v1871
  %v2060 = vpack.c.b16 %v1876, %v1872
  %v2061 = vpack.c.b16 %v1877, %v1873
  %v2062 = vpack.c.b16 %v1882, %v1878
  %v2063 = vpack.c.b16 %v1883, %v1879
  %v2064 = vpack.c.b16 %v1884, %v1880
  %v2065 = vpack.c.b16 %v1885, %v1881
  %v2066 = vpack.c.b16 %v1890, %v1886
  %v2067 = vpack.c.b16 %v1891, %v1887
  %v2068 = vpack.c.b16 %v1892, %v1888
  %v2069 = vpack.c.b16 %v1893, %v1889
  %v2070 = vpack.c.b16 %v1898, %v1894
  %v2071 = vpack.c.b16 %v1899, %v1895
  %v2072 = vpack.c.b16 %v1900, %v1896
  %v2073 = vpack.c.b16 %v1901, %v1897
  %v2074 = vpack.c.b16 %v1906, %v1902
  %v2075 = vpack.c.b16 %v1907, %v1903
  %v2076 = vpack.c.b16 %v1908, %v1904
  %v2077 = vpack.c.b16 %v1909, %v1905
  %v2078 = vpack.c.b16 %v1914, %v1910
  %v2079 = vpack.c.b16 %v1915, %v1911
  %v2080 = vpack.c.b16 %v1916, %v1912
  %v2081 = vpack.c.b16 %v1917, %v1913
  %v2082 = vpack.c.b16 %v1922, %v1918
  %v2083 = vpack.c.b16 %v1923, %v1919
  %v2084 = vpack.c.b16 %v1924, %v1920
  %v2085 = vpack.c.b16 %v1925, %v1921
  %v2086 = vpack.c.b16 %v1930, %v1926
  %v2087 = vpack.c.b16 %v1931, %v1927
  %v2088 = vpack.c.b16 %v1932, %v1928
  %v2089 = vpack.c.b16 %v1933, %v1929
  %v2090 = vpack.c.b16 %v1938, %v1934
  %v2091 = vpack.c.b16 %v1939, %v1935
  %v2092 = vpack.c.b16 %v1940, %v1936
  %v2093 = vpack.c.b16 %v1941, %v1937
  %v2094 = vpack.c.b16 %v1946, %v1942
  %v2095 = vpack.c.b16 %v1947, %v1943
  %v2096 = vpack.c.b16 %v1948, %v1944
  %v2097 = vpack.c.b16 %v1949, %v1945
  %v2098 = vpack.c.b16 %v1954, %v1950
  %v2099 = vpack.c.b16 %v1955, %v1951
  %v2100 = vpack.c.b16 %v1956, %v1952
  %v2101 = vpack.c.b16 %v1957, %v1953
  %v2102 = vpack.c.b16 %v1962, %v1958
  %v2103 = vpack.c.b16 %v1963, %v1959
  %v2104 = vpack.c.b16 %v1964, %v1960
  %v2105 = vpack.c.b16 %v1965, %v1961
  %v2106 = vpack.c.b16 %v1970, %v1966
  %v2107 = vpack.c.b16 %v1971, %v1967
  %v2108 = vpack.c.b16 %v1972, %v1968
  %v2109 = vpack.c.b16 %v1973, %v1969
  %v2110 = vpack.c.b16 %v1978, %v1974
  %v2111 = vpack.c.b16 %v1979, %v1975
  %v2112 = vpack.c.b16 %v1980, %v1976
  %v2113 = vpack.c.b16 %v1981, %v1977
  %v2114 = vpack.c.b16 %v1986, %v1982
  %v2115 = vpack.c.b16 %v1987, %v1983
  %v2116 = vpack.c.b16 %v1988, %v1984
  %v2117 = vpack.c.b16 %v1989, %v1985
  %2246 = vmatprep.subr.bf16.mxu0 %v1991
  %2247 = vmatpush1.bf16.msra.mxu0 %v1990
  %2248 = vmatprep.subr.bf16.mxu0 %v1995
  %2249 = vmatpush1.bf16.msra.mxu0 %v1994
  %2250 = vmatprep.subr.bf16.mxu0 %v1999
  %2251 = vmatpush1.bf16.msra.mxu0 %v1998
  %2252 = vmatprep.subr.bf16.mxu0 %v2003
  %2253 = vmatpush1.bf16.msra.mxu0 %v2002
  %2254 = vmatprep.subr.bf16.mxu0 %v2007
  %2255 = vmatpush1.bf16.msra.mxu0 %v2006
  %2256 = vmatprep.subr.bf16.mxu0 %v2011
  %2257 = vmatpush1.bf16.msra.mxu0 %v2010
  %2258 = vmatprep.subr.bf16.mxu0 %v2015
  %2259 = vmatpush1.bf16.msra.mxu0 %v2014
  %2260 = vmatprep.subr.bf16.mxu0 %v2019
  %2261 = vmatpush1.bf16.msra.mxu0 %v2018
  %2262 = vmatprep.subr.bf16.mxu0 %v2023
  %2263 = vmatpush1.bf16.msra.mxu0 %v2022
  %2264 = vmatprep.subr.bf16.mxu0 %v2027
  %2265 = vmatpush1.bf16.msra.mxu0 %v2026
  %2266 = vmatprep.subr.bf16.mxu0 %v2031
  %2267 = vmatpush1.bf16.msra.mxu0 %v2030
  %2268 = vmatprep.subr.bf16.mxu0 %v2035
  %2269 = vmatpush1.bf16.msra.mxu0 %v2034
  %2270 = vmatprep.subr.bf16.mxu0 %v2039
  %2271 = vmatpush1.bf16.msra.mxu0 %v2038
  %2272 = vmatprep.subr.bf16.mxu0 %v2043
  %2273 = vmatpush1.bf16.msra.mxu0 %v2042
  %2274 = vmatprep.subr.bf16.mxu0 %v2047
  %2275 = vmatpush1.bf16.msra.mxu0 %v2046
  %2276 = vmatprep.subr.bf16.mxu0 %v2051
  %2277 = vmatpush1.bf16.msra.mxu0 %v2050
  %2278 = vmatprep.mubr.bf16.mxu0 %v1475
  %2279 = vmatmul.mubr.bf16.gmra.mrb[0].mxu0 %v1474
  %v2280 = vpop.f32.mrb[0].mxu0
  %v2281 = vadd.f32 0.0, %v2280
  %v2282 = vpop.f32.mrb[0].mxu0
  %v2283 = vadd.f32 0.0, %v2282
  %v2284 = vpop.f32.mrb[0].mxu0
  %v2285 = vadd.f32 0.0, %v2284
  %v2286 = vpop.f32.mrb[0].mxu0
  %v2287 = vadd.f32 0.0, %v2286
  %2288 = vdwg.mxu0
  %2289 = vmatprep.subr.bf16.mxu0 %v2055
  %2290 = vmatpush1.bf16.msra.mxu0 %v2054
  %2291 = vmatprep.subr.bf16.mxu0 %v2059
  %2292 = vmatpush1.bf16.msra.mxu0 %v2058
  %2293 = vmatprep.subr.bf16.mxu0 %v2063
  %2294 = vmatpush1.bf16.msra.mxu0 %v2062
  %2295 = vmatprep.subr.bf16.mxu0 %v2067
  %2296 = vmatpush1.bf16.msra.mxu0 %v2066
  %2297 = vmatprep.subr.bf16.mxu0 %v2071
  %2298 = vmatpush1.bf16.msra.mxu0 %v2070
  %2299 = vmatprep.subr.bf16.mxu0 %v2075
  %2300 = vmatpush1.bf16.msra.mxu0 %v2074
  %2301 = vmatprep.subr.bf16.mxu0 %v2079
  %2302 = vmatpush1.bf16.msra.mxu0 %v2078
  %2303 = vmatprep.subr.bf16.mxu0 %v2083
  %2304 = vmatpush1.bf16.msra.mxu0 %v2082
  %2305 = vmatprep.subr.bf16.mxu0 %v2087
  %2306 = vmatpush1.bf16.msra.mxu0 %v2086
  %2307 = vmatprep.subr.bf16.mxu0 %v2091
  %2308 = vmatpush1.bf16.msra.mxu0 %v2090
  %2309 = vmatprep.subr.bf16.mxu0 %v2095
  %2310 = vmatpush1.bf16.msra.mxu0 %v2094
  %2311 = vmatprep.subr.bf16.mxu0 %v2099
  %2312 = vmatpush1.bf16.msra.mxu0 %v2098
  %2313 = vmatprep.subr.bf16.mxu0 %v2103
  %2314 = vmatpush1.bf16.msra.mxu0 %v2102
  %2315 = vmatprep.subr.bf16.mxu0 %v2107
  %2316 = vmatpush1.bf16.msra.mxu0 %v2106
  %2317 = vmatprep.subr.bf16.mxu0 %v2111
  %2318 = vmatpush1.bf16.msra.mxu0 %v2110
  %2319 = vmatprep.subr.bf16.mxu0 %v2115
  %2320 = vmatpush1.bf16.msra.mxu0 %v2114
  %2321 = vmatprep.mubr.bf16.mxu0 %v1477
  %2322 = vmatmul.mubr.bf16.gmra.mrb[0].mxu0 %v1476
  %v2323 = vpop.f32.mrb[0].mxu0
  %v2324 = vadd.f32 %v2281, %v2323
  %v2325 = vpop.f32.mrb[0].mxu0
  %v2326 = vadd.f32 %v2283, %v2325
  %v2327 = vpop.f32.mrb[0].mxu0
  %v2328 = vadd.f32 %v2285, %v2327
  %v2329 = vpop.f32.mrb[0].mxu0
  %v2330 = vadd.f32 %v2287, %v2329
  %2331 = vdwg.mxu0
  %2332 = vmatprep.subr.bf16.mxu0 %v1993
  %2333 = vmatpush1.bf16.msra.mxu0 %v1992
  %2334 = vmatprep.subr.bf16.mxu0 %v1997
  %2335 = vmatpush1.bf16.msra.mxu0 %v1996
  %2336 = vmatprep.subr.bf16.mxu0 %v2001
  %2337 = vmatpush1.bf16.msra.mxu0 %v2000
  %2338 = vmatprep.subr.bf16.mxu0 %v2005
  %2339 = vmatpush1.bf16.msra.mxu0 %v2004
  %2340 = vmatprep.subr.bf16.mxu0 %v2009
  %2341 = vmatpush1.bf16.msra.mxu0 %v2008
  %2342 = vmatprep.subr.bf16.mxu0 %v2013
  %2343 = vmatpush1.bf16.msra.mxu0 %v2012
  %2344 = vmatprep.subr.bf16.mxu0 %v2017
  %2345 = vmatpush1.bf16.msra.mxu0 %v2016
  %2346 = vmatprep.subr.bf16.mxu0 %v2021
  %2347 = vmatpush1.bf16.msra.mxu0 %v2020
  %2348 = vmatprep.subr.bf16.mxu0 %v2025
  %2349 = vmatpush1.bf16.msra.mxu0 %v2024
  %2350 = vmatprep.subr.bf16.mxu0 %v2029
  %2351 = vmatpush1.bf16.msra.mxu0 %v2028
  %2352 = vmatprep.subr.bf16.mxu0 %v2033
  %2353 = vmatpush1.bf16.msra.mxu0 %v2032
  %2354 = vmatprep.subr.bf16.mxu0 %v2037
  %2355 = vmatpush1.bf16.msra.mxu0 %v2036
  %2356 = vmatprep.subr.bf16.mxu0 %v2041
  %2357 = vmatpush1.bf16.msra.mxu0 %v2040
  %2358 = vmatprep.subr.bf16.mxu0 %v2045
  %2359 = vmatpush1.bf16.msra.mxu0 %v2044
  %2360 = vmatprep.subr.bf16.mxu0 %v2049
  %2361 = vmatpush1.bf16.msra.mxu0 %v2048
  %2362 = vmatprep.subr.bf16.mxu0 %v2053
  %2363 = vmatpush1.bf16.msra.mxu0 %v2052
  %2364 = vmatprep.mubr.bf16.mxu0 %v1475
  %2365 = vmatmul.mubr.bf16.gmra.mrb[0].mxu0 %v1474
  %v2366 = vpop.f32.mrb[0].mxu0
  %v2367 = vadd.f32 0.0, %v2366
  %v2368 = vpop.f32.mrb[0].mxu0
  %v2369 = vadd.f32 0.0, %v2368
  %v2370 = vpop.f32.mrb[0].mxu0
  %v2371 = vadd.f32 0.0, %v2370
  %v2372 = vpop.f32.mrb[0].mxu0
  %v2373 = vadd.f32 0.0, %v2372
  %2374 = vdwg.mxu0
  %2375 = vmatprep.subr.bf16.mxu0 %v2057
  %2376 = vmatpush1.bf16.msra.mxu0 %v2056
  %2377 = vmatprep.subr.bf16.mxu0 %v2061
  %2378 = vmatpush1.bf16.msra.mxu0 %v2060
  %2379 = vmatprep.subr.bf16.mxu0 %v2065
  %2380 = vmatpush1.bf16.msra.mxu0 %v2064
  %2381 = vmatprep.subr.bf16.mxu0 %v2069
  %2382 = vmatpush1.bf16.msra.mxu0 %v2068
  %2383 = vmatprep.subr.bf16.mxu0 %v2073
  %2384 = vmatpush1.bf16.msra.mxu0 %v2072
  %2385 = vmatprep.subr.bf16.mxu0 %v2077
  %2386 = vmatpush1.bf16.msra.mxu0 %v2076
  %2387 = vmatprep.subr.bf16.mxu0 %v2081
  %2388 = vmatpush1.bf16.msra.mxu0 %v2080
  %2389 = vmatprep.subr.bf16.mxu0 %v2085
  %2390 = vmatpush1.bf16.msra.mxu0 %v2084
  %2391 = vmatprep.subr.bf16.mxu0 %v2089
  %2392 = vmatpush1.bf16.msra.mxu0 %v2088
  %2393 = vmatprep.subr.bf16.mxu0 %v2093
  %2394 = vmatpush1.bf16.msra.mxu0 %v2092
  %2395 = vmatprep.subr.bf16.mxu0 %v2097
  %2396 = vmatpush1.bf16.msra.mxu0 %v2096
  %2397 = vmatprep.subr.bf16.mxu0 %v2101
  %2398 = vmatpush1.bf16.msra.mxu0 %v2100
  %2399 = vmatprep.subr.bf16.mxu0 %v2105
  %2400 = vmatpush1.bf16.msra.mxu0 %v2104
  %2401 = vmatprep.subr.bf16.mxu0 %v2109
  %2402 = vmatpush1.bf16.msra.mxu0 %v2108
  %2403 = vmatprep.subr.bf16.mxu0 %v2113
  %2404 = vmatpush1.bf16.msra.mxu0 %v2112
  %2405 = vmatprep.subr.bf16.mxu0 %v2117
  %2406 = vmatpush1.bf16.msra.mxu0 %v2116
  %2407 = vmatprep.mubr.bf16.mxu0 %v1477
  %2408 = vmatmul.mubr.bf16.gmra.mrb[0].mxu0 %v1476
  %v2409 = vpop.f32.mrb[0].mxu0
  %v2410 = vadd.f32 %v2367, %v2409
  %v2411 = vpop.f32.mrb[0].mxu0
  %v2412 = vadd.f32 %v2369, %v2411
  %v2413 = vpop.f32.mrb[0].mxu0
  %v2414 = vadd.f32 %v2371, %v2413
  %v2415 = vpop.f32.mrb[0].mxu0
  %v2416 = vadd.f32 %v2373, %v2415
  %2417 = vdwg.mxu0
  %v2418 = vmax.f32 %v2324, %v2326
  %v2419 = vmax.f32 %v2328, %v2330
  %v2420 = vmax.f32 %v2410, %v2412
  %v2421 = vmax.f32 %v2414, %v2416
  %v2422 = vmax.f32 %v2418, %v2420
  %v2423 = vmax.f32 %v2419, %v2421
  %2424 = vadd.xlane.f32.xlu0 %v2422
  %v2425 = vpop.xlane.xlu0 %2424
  %2426 = vadd.xlane.f32.xlu0 %v2423
  %v2427 = vpop.xlane.xlu0 %2426
  %v2428 = vmul.f32 %v2425, %v32
  %v2429 = vmul.f32 %v2427, %v32
  %v2430 = vmul.f32 %v2422, %v2422
  %v2431 = vmul.f32 %v2423, %v2423
  %2432 = vadd.xlane.f32.xlu0 %v2430
  %v2433 = vpop.xlane.xlu0 %2432
  %2434 = vadd.xlane.f32.xlu0 %v2431
  %v2435 = vpop.xlane.xlu0 %2434
  %v2436 = vmul.f32 %v2433, %v32
  %v2437 = vmul.f32 %v2435, %v32
  %v2438 = vmul.f32 %v2428, %v2428
  %v2439 = vmul.f32 %v2429, %v2429
  %v2440 = vsub.f32 %v2436, %v2438
  %v2441 = vsub.f32 %v2437, %v2439
  %v2442 = vmax.f32 %v2440, 0.0
  %v2443 = vmax.f32 %v2441, 0.0
  %v2444 = vsub.f32 %v2422, %v2428
  %v2445 = vsub.f32 %v2423, %v2429
  %v2446 = vadd.f32 %v2442, 1e-05
  %v2447 = vadd.f32 %v2443, 1e-05
  %v2448 = vrsqrt.pop %v2446
  %v2449 = vrsqrt.pop %v2447
  %v2450 = vmul.f32 %v2444, %v2448
  %v2451 = vmul.f32 %v2445, %v2449
  %v2452 = vmax.f32 %v2450, 0.0
  %v2453 = vmax.f32 %v2451, 0.0
  %v2454 = vld [vmem:[%s1 + $0x68] sm:$0xff]
  %v2455 = vld [vmem:[%s1 + $0x70] sm:$0xff]
  %v2456 = vadd.f32 %v2452, %v2454
  %v2457 = vadd.f32 %v2453, %v2455
  %v2458 = vmax.f32 %v2456, 0.0
  %v2459 = vmax.f32 %v2457, 0.0
  %2460 = vadd.xlane.f32.xlu0 %v2458
  %v2461 = vpop.xlane.xlu0 %2460
  %2462 = vadd.xlane.f32.xlu0 %v2459
  %v2463 = vpop.xlane.xlu0 %2462
  %v2464 = vmul.f32 %v2461, %v32
  %v2465 = vmul.f32 %v2463, %v32
  %v2466 = vmul.f32 %v2458, %v2458
  %v2467 = vmul.f32 %v2459, %v2459
  %2468 = vadd.xlane.f32.xlu0 %v2466
  %v2469 = vpop.xlane.xlu0 %2468
  %2470 = vadd.xlane.f32.xlu0 %v2467
  %v2471 = vpop.xlane.xlu0 %2470
  %v2472 = vmul.f32 %v2469, %v32
  %v2473 = vmul.f32 %v2471, %v32
  %v2474 = vmul.f32 %v2464, %v2464
  %v2475 = vmul.f32 %v2465, %v2465
  %v2476 = vsub.f32 %v2472, %v2474
  %v2477 = vsub.f32 %v2473, %v2475
  %v2478 = vmax.f32 %v2476, 0.0
  %v2479 = vmax.f32 %v2477, 0.0
  %v2480 = vsub.f32 %v2458, %v2464
  %v2481 = vsub.f32 %v2459, %v2465
  %v2482 = vadd.f32 %v2478, 1e-05
  %v2483 = vadd.f32 %v2479, 1e-05
  %v2484 = vrsqrt.pop %v2482
  %v2485 = vrsqrt.pop %v2483
  %v2486 = vmul.f32 %v2480, %v2484
  %v2487 = vmul.f32 %v2481, %v2485
  %s2488 = scalar_lea.vmem %s3, 96
  %v2489 = vld [vmem:[%s2488] sm:$0xf]
  %v2490 = vld [vmem:[%s2488 + $0x4] sm:$0xf]
  %v2491 = vpack.c.bf16 %v2487, %v2486
  %v2494 = vunpack.c.l.b16 %v2489
  %v2495 = vunpack.c.l.b16 %v2490
  %v2496 = vpack.c.b16 %v2495, %v2494
  %vm2497 = vcmask 130048
  %v2499 = vsel %vm2497, %v2496, 0
  %2501 = vmatprep.subr.bf16.mxu0 0
  %2502 = vmatpush1.bf16.msra.mxu0 %v2491
  %2503 = vmatprep.subr.bf16.mxu0 0
  %2504 = vmatpush1.bf16.msra.mxu0 0
  %2505 = vmatprep.subr.bf16.mxu0 0
  %2506 = vmatpush1.bf16.msra.mxu0 0
  %2507 = vmatprep.subr.bf16.mxu0 0
  %2508 = vmatpush1.bf16.msra.mxu0 0
  %2509 = vmatprep.subr.bf16.mxu0 0
  %2510 = vmatpush1.bf16.msra.mxu0 0
  %2511 = vmatprep.subr.bf16.mxu0 0
  %2512 = vmatpush1.bf16.msra.mxu0 0
  %2513 = vmatprep.subr.bf16.mxu0 0
  %2514 = vmatpush1.bf16.msra.mxu0 0
  %2515 = vmatprep.subr.bf16.mxu0 0
  %2516 = vmatpush1.bf16.msra.mxu0 0
  %2517 = vmatprep.subr.bf16.mxu0 0
  %2518 = vmatpush1.bf16.msra.mxu0 0
  %2519 = vmatprep.subr.bf16.mxu0 0
  %2520 = vmatpush1.bf16.msra.mxu0 0
  %2521 = vmatprep.subr.bf16.mxu0 0
  %2522 = vmatpush1.bf16.msra.mxu0 0
  %2523 = vmatprep.subr.bf16.mxu0 0
  %2524 = vmatpush1.bf16.msra.mxu0 0
  %2525 = vmatprep.subr.bf16.mxu0 0
  %2526 = vmatpush1.bf16.msra.mxu0 0
  %2527 = vmatprep.subr.bf16.mxu0 0
  %2528 = vmatpush1.bf16.msra.mxu0 0
  %2529 = vmatprep.subr.bf16.mxu0 0
  %2530 = vmatpush1.bf16.msra.mxu0 0
  %2531 = vmatprep.subr.bf16.mxu0 0
  %2532 = vmatpush1.bf16.msra.mxu0 0
  %2533 = vmatprep.mubr.bf16.mxu0 0
  %2534 = vmatmul.mubr.bf16.gmra.mrb[0].mxu0 %v2499
  %v2535 = vpop.f32.mrb[0].mxu0
  %v2536 = vadd.f32 0.0, %v2535
  %v2537 = vpop.f32.mrb[0].mxu0
  %v2538 = vpop.f32.mrb[0].mxu0
  %v2539 = vadd.f32 0.0, %v2538
  %v2540 = vpop.f32.mrb[0].mxu0
  %2541 = vdwg.mxu0
  %s2542 = scalar_lea.vmem %s3, 112
  %v2543 = vld [vmem:[%s2542] sm:$0xf]
  %v2544 = vld [vmem:[%s2542 + $0x4] sm:$0xf]
  %v2547 = vunpack.c.l.b16 %v2543
  %v2548 = vunpack.c.l.b16 %v2544
  %v2549 = vpack.c.b16 %v2548, %v2547
  %v2551 = vsel %vm266, %v2549, 0
  %2553 = vmatprep.subr.bf16.mxu0 0
  %2554 = vmatpush1.bf16.msra.mxu0 %v920
  %2555 = vmatprep.subr.bf16.mxu0 0
  %2556 = vmatpush1.bf16.msra.mxu0 %v921
  %2557 = vmatprep.subr.bf16.mxu0 0
  %2558 = vmatpush1.bf16.msra.mxu0 0
  %2559 = vmatprep.subr.bf16.mxu0 0
  %2560 = vmatpush1.bf16.msra.mxu0 0
  %2561 = vmatprep.subr.bf16.mxu0 0
  %2562 = vmatpush1.bf16.msra.mxu0 0
  %2563 = vmatprep.subr.bf16.mxu0 0
  %2564 = vmatpush1.bf16.msra.mxu0 0
  %2565 = vmatprep.subr.bf16.mxu0 0
  %2566 = vmatpush1.bf16.msra.mxu0 0
  %2567 = vmatprep.subr.bf16.mxu0 0
  %2568 = vmatpush1.bf16.msra.mxu0 0
  %2569 = vmatprep.subr.bf16.mxu0 0
  %2570 = vmatpush1.bf16.msra.mxu0 0
  %2571 = vmatprep.subr.bf16.mxu0 0
  %2572 = vmatpush1.bf16.msra.mxu0 0
  %2573 = vmatprep.subr.bf16.mxu0 0
  %2574 = vmatpush1.bf16.msra.mxu0 0
  %2575 = vmatprep.subr.bf16.mxu0 0
  %2576 = vmatpush1.bf16.msra.mxu0 0
  %2577 = vmatprep.subr.bf16.mxu0 0
  %2578 = vmatpush1.bf16.msra.mxu0 0
  %2579 = vmatprep.subr.bf16.mxu0 0
  %2580 = vmatpush1.bf16.msra.mxu0 0
  %2581 = vmatprep.subr.bf16.mxu0 0
  %2582 = vmatpush1.bf16.msra.mxu0 0
  %2583 = vmatprep.subr.bf16.mxu0 0
  %2584 = vmatpush1.bf16.msra.mxu0 0
  %2585 = vmatprep.mubr.bf16.mxu0 0
  %2586 = vmatmul.mubr.bf16.gmra.mrb[0].mxu0 %v2551
  %v2587 = vpop.f32.mrb[0].mxu0
  %v2588 = vadd.f32 0.0, %v2587
  %v2589 = vpop.f32.mrb[0].mxu0
  %v2590 = vpop.f32.mrb[0].mxu0
  %v2591 = vadd.f32 0.0, %v2590
  %v2592 = vpop.f32.mrb[0].mxu0
  %2593 = vdwg.mxu0
  %2594 = vadd.xlane.f32.xlu0 %v2588
  %v2595 = vpop.xlane.xlu0 %2594
  %2596 = vadd.xlane.f32.xlu0 %v2591
  %v2597 = vpop.xlane.xlu0 %2596
  %v2598 = vmul.f32 %v2595, %v32
  %v2599 = vmul.f32 %v2597, %v32
  %v2600 = vmul.f32 %v2588, %v2588
  %v2601 = vmul.f32 %v2591, %v2591
  %2602 = vadd.xlane.f32.xlu0 %v2600
  %v2603 = vpop.xlane.xlu0 %2602
  %2604 = vadd.xlane.f32.xlu0 %v2601
  %v2605 = vpop.xlane.xlu0 %2604
  %v2606 = vmul.f32 %v2603, %v32
  %v2607 = vmul.f32 %v2605, %v32
  %v2608 = vmul.f32 %v2598, %v2598
  %v2609 = vmul.f32 %v2599, %v2599
  %v2610 = vsub.f32 %v2606, %v2608
  %v2611 = vsub.f32 %v2607, %v2609
  %v2612 = vmax.f32 %v2610, 0.0
  %v2613 = vmax.f32 %v2611, 0.0
  %v2614 = vsub.f32 %v2588, %v2598
  %v2615 = vsub.f32 %v2591, %v2599
  %v2616 = vadd.f32 %v2612, 1e-05
  %v2617 = vadd.f32 %v2613, 1e-05
  %v2618 = vrsqrt.pop %v2616
  %v2619 = vrsqrt.pop %v2617
  %v2620 = vmul.f32 %v2614, %v2618
  %v2621 = vmul.f32 %v2615, %v2619
  %2622 = vadd.xlane.f32.xlu0 %v2536
  %v2623 = vpop.xlane.xlu0 %2622
  %2624 = vadd.xlane.f32.xlu0 %v2539
  %v2625 = vpop.xlane.xlu0 %2624
  %v2626 = vmul.f32 %v2623, %v32
  %v2627 = vmul.f32 %v2625, %v32
  %v2628 = vmul.f32 %v2536, %v2536
  %v2629 = vmul.f32 %v2539, %v2539
  %2630 = vadd.xlane.f32.xlu0 %v2628
  %v2631 = vpop.xlane.xlu0 %2630
  %2632 = vadd.xlane.f32.xlu0 %v2629
  %v2633 = vpop.xlane.xlu0 %2632
  %v2634 = vmul.f32 %v2631, %v32
  %v2635 = vmul.f32 %v2633, %v32
  %v2636 = vmul.f32 %v2626, %v2626
  %v2637 = vmul.f32 %v2627, %v2627
  %v2638 = vsub.f32 %v2634, %v2636
  %v2639 = vsub.f32 %v2635, %v2637
  %v2640 = vmax.f32 %v2638, 0.0
  %v2641 = vmax.f32 %v2639, 0.0
  %v2642 = vsub.f32 %v2536, %v2626
  %v2643 = vsub.f32 %v2539, %v2627
  %v2644 = vadd.f32 %v2640, 1e-05
  %v2645 = vadd.f32 %v2641, 1e-05
  %v2646 = vrsqrt.pop %v2644
  %v2647 = vrsqrt.pop %v2645
  %v2648 = vmul.f32 %v2642, %v2646
  %v2649 = vmul.f32 %v2643, %v2647
  %v2650 = vadd.f32 %v2648, %v2620
  %v2651 = vadd.f32 %v2649, %v2621
  %v2652 = vmax.f32 %v2650, 0.0
  %v2653 = vmax.f32 %v2651, 0.0
  %v2654 = vpack.c.bf16 %v2653, %v2652
  %v2655 = vld [vmem:[%s2 + $0x80] sm:$0xff]
  %v2656 = vld [vmem:[%s2 + $0x88] sm:$0xff]
  %v2657 = vld [vmem:[%s2 + $0x90] sm:$0xff]
  %v2658 = vld [vmem:[%s2 + $0x98] sm:$0xff]
  %v2659 = vld [vmem:[%s2 + $0xa0] sm:$0xff]
  %v2660 = vld [vmem:[%s2 + $0xa8] sm:$0xff]
  %v2661 = vld [vmem:[%s2 + $0xb0] sm:$0xff]
  %v2662 = vld [vmem:[%s2 + $0xb8] sm:$0xff]
  %2663 = vmatprep.subr.bf16.mxu0 %v1067
  %2664 = vmatpush1.bf16.msra.mxu0 %v1066
  %2665 = vmatprep.subr.bf16.mxu0 %v1071
  %2666 = vmatpush1.bf16.msra.mxu0 %v1070
  %2667 = vmatprep.subr.bf16.mxu0 %v1075
  %2668 = vmatpush1.bf16.msra.mxu0 %v1074
  %2669 = vmatprep.subr.bf16.mxu0 %v1079
  %2670 = vmatpush1.bf16.msra.mxu0 %v1078
  %2671 = vmatprep.subr.bf16.mxu0 %v1083
  %2672 = vmatpush1.bf16.msra.mxu0 %v1082
  %2673 = vmatprep.subr.bf16.mxu0 %v1087
  %2674 = vmatpush1.bf16.msra.mxu0 %v1086
  %2675 = vmatprep.subr.bf16.mxu0 %v1091
  %2676 = vmatpush1.bf16.msra.mxu0 %v1090
  %2677 = vmatprep.subr.bf16.mxu0 %v1095
  %2678 = vmatpush1.bf16.msra.mxu0 %v1094
  %2679 = vmatprep.subr.bf16.mxu0 0
  %2680 = vmatpush1.bf16.msra.mxu0 0
  %2681 = vmatprep.subr.bf16.mxu0 0
  %2682 = vmatpush1.bf16.msra.mxu0 0
  %2683 = vmatprep.subr.bf16.mxu0 0
  %2684 = vmatpush1.bf16.msra.mxu0 0
  %2685 = vmatprep.subr.bf16.mxu0 0
  %2686 = vmatpush1.bf16.msra.mxu0 0
  %2687 = vmatprep.subr.bf16.mxu0 0
  %2688 = vmatpush1.bf16.msra.mxu0 0
  %2689 = vmatprep.subr.bf16.mxu0 0
  %2690 = vmatpush1.bf16.msra.mxu0 0
  %2691 = vmatprep.subr.bf16.mxu0 0
  %2692 = vmatpush1.bf16.msra.mxu0 0
  %2693 = vmatprep.subr.bf16.mxu0 0
  %2694 = vmatpush1.bf16.msra.mxu0 0
  %2695 = vmatprep.mubr.bf16.mxu0 0
  %2696 = vmatmul.mubr.bf16.gmra.mrb[0].mxu0 %v2654
  %v2697 = vpop.f32.mrb[0].mxu0
  %v2698 = vadd.f32 %v2655, %v2697
  %v2699 = vpop.f32.mrb[0].mxu0
  %v2700 = vadd.f32 %v2656, %v2699
  %v2701 = vpop.f32.mrb[0].mxu0
  %v2702 = vadd.f32 %v2659, %v2701
  %v2703 = vpop.f32.mrb[0].mxu0
  %v2704 = vadd.f32 %v2660, %v2703
  %2705 = vdwg.mxu0
  %2706 = vmatprep.subr.bf16.mxu0 %v1069
  %2707 = vmatpush1.bf16.msra.mxu0 %v1068
  %2708 = vmatprep.subr.bf16.mxu0 %v1073
  %2709 = vmatpush1.bf16.msra.mxu0 %v1072
  %2710 = vmatprep.subr.bf16.mxu0 %v1077
  %2711 = vmatpush1.bf16.msra.mxu0 %v1076
  %2712 = vmatprep.subr.bf16.mxu0 %v1081
  %2713 = vmatpush1.bf16.msra.mxu0 %v1080
  %2714 = vmatprep.subr.bf16.mxu0 %v1085
  %2715 = vmatpush1.bf16.msra.mxu0 %v1084
  %2716 = vmatprep.subr.bf16.mxu0 %v1089
  %2717 = vmatpush1.bf16.msra.mxu0 %v1088
  %2718 = vmatprep.subr.bf16.mxu0 %v1093
  %2719 = vmatpush1.bf16.msra.mxu0 %v1092
  %2720 = vmatprep.subr.bf16.mxu0 %v1097
  %2721 = vmatpush1.bf16.msra.mxu0 %v1096
  %2722 = vmatprep.subr.bf16.mxu0 0
  %2723 = vmatpush1.bf16.msra.mxu0 0
  %2724 = vmatprep.subr.bf16.mxu0 0
  %2725 = vmatpush1.bf16.msra.mxu0 0
  %2726 = vmatprep.subr.bf16.mxu0 0
  %2727 = vmatpush1.bf16.msra.mxu0 0
  %2728 = vmatprep.subr.bf16.mxu0 0
  %2729 = vmatpush1.bf16.msra.mxu0 0
  %2730 = vmatprep.subr.bf16.mxu0 0
  %2731 = vmatpush1.bf16.msra.mxu0 0
  %2732 = vmatprep.subr.bf16.mxu0 0
  %2733 = vmatpush1.bf16.msra.mxu0 0
  %2734 = vmatprep.subr.bf16.mxu0 0
  %2735 = vmatpush1.bf16.msra.mxu0 0
  %2736 = vmatprep.subr.bf16.mxu0 0
  %2737 = vmatpush1.bf16.msra.mxu0 0
  %2738 = vmatprep.mubr.bf16.mxu0 0
  %2739 = vmatmul.mubr.bf16.gmra.mrb[0].mxu0 %v2654
  %v2740 = vpop.f32.mrb[0].mxu0
  %v2741 = vadd.f32 %v2657, %v2740
  %v2742 = vpop.f32.mrb[0].mxu0
  %v2743 = vadd.f32 %v2658, %v2742
  %v2744 = vpop.f32.mrb[0].mxu0
  %v2745 = vadd.f32 %v2661, %v2744
  %v2746 = vpop.f32.mrb[0].mxu0
  %v2747 = vadd.f32 %v2662, %v2746
  %2748 = vdwg.mxu0
  %v2749 = vmax.f32 %v2698, 0.0
  %v2750 = vmax.f32 %v2700, 0.0
  %v2751 = vmax.f32 %v2741, 0.0
  %v2752 = vmax.f32 %v2743, 0.0
  %v2753 = vmax.f32 %v2702, 0.0
  %v2754 = vmax.f32 %v2704, 0.0
  %v2755 = vmax.f32 %v2745, 0.0
  %v2756 = vmax.f32 %v2747, 0.0
  %v2757 = vadd.f32 %v2749, %v2750
  %v2758 = vadd.f32 %v2757, %v2751
  %v2759 = vadd.f32 %v2758, %v2752
  %2760 = vadd.xlane.f32.xlu0 %v2759
  %v2761 = vpop.xlane.xlu0 %2760
  %v2762 = vadd.f32 %v2753, %v2754
  %v2763 = vadd.f32 %v2762, %v2755
  %v2764 = vadd.f32 %v2763, %v2756
  %2765 = vadd.xlane.f32.xlu0 %v2764
  %v2766 = vpop.xlane.xlu0 %2765
  %v2767 = vmul.f32 %v2761, %v1272
  %v2768 = vmul.f32 %v2766, %v1272
  %v2769 = vmul.f32 %v2749, %v2749
  %v2770 = vmul.f32 %v2750, %v2750
  %v2771 = vmul.f32 %v2751, %v2751
  %v2772 = vmul.f32 %v2752, %v2752
  %v2773 = vmul.f32 %v2753, %v2753
  %v2774 = vmul.f32 %v2754, %v2754
  %v2775 = vmul.f32 %v2755, %v2755
  %v2776 = vmul.f32 %v2756, %v2756
  %v2777 = vadd.f32 %v2769, %v2770
  %v2778 = vadd.f32 %v2777, %v2771
  %v2779 = vadd.f32 %v2778, %v2772
  %2780 = vadd.xlane.f32.xlu0 %v2779
  %v2781 = vpop.xlane.xlu0 %2780
  %v2782 = vadd.f32 %v2773, %v2774
  %v2783 = vadd.f32 %v2782, %v2775
  %v2784 = vadd.f32 %v2783, %v2776
  %2785 = vadd.xlane.f32.xlu0 %v2784
  %v2786 = vpop.xlane.xlu0 %2785
  %v2787 = vmul.f32 %v2781, %v1272
  %v2788 = vmul.f32 %v2786, %v1272
  %v2789 = vmul.f32 %v2767, %v2767
  %v2790 = vmul.f32 %v2768, %v2768
  %v2791 = vsub.f32 %v2787, %v2789
  %v2792 = vsub.f32 %v2788, %v2790
  %v2793 = vmax.f32 %v2791, 0.0
  %v2794 = vmax.f32 %v2792, 0.0
  %v2795 = vsub.f32 %v2749, %v2767
  %v2796 = vsub.f32 %v2750, %v2767
  %v2797 = vsub.f32 %v2751, %v2767
  %v2798 = vsub.f32 %v2752, %v2767
  %v2799 = vsub.f32 %v2753, %v2768
  %v2800 = vsub.f32 %v2754, %v2768
  %v2801 = vsub.f32 %v2755, %v2768
  %v2802 = vsub.f32 %v2756, %v2768
  %v2803 = vadd.f32 %v2793, 1e-05
  %v2804 = vadd.f32 %v2794, 1e-05
  %v2805 = vrsqrt.pop %v2803
  %v2806 = vrsqrt.pop %v2804
  %v2807 = vmul.f32 %v2795, %v2805
  %v2808 = vmul.f32 %v2796, %v2805
  %v2809 = vmul.f32 %v2797, %v2805
  %v2810 = vmul.f32 %v2798, %v2805
  %v2811 = vmul.f32 %v2799, %v2806
  %v2812 = vmul.f32 %v2800, %v2806
  %v2813 = vmul.f32 %v2801, %v2806
  %v2814 = vmul.f32 %v2802, %v2806
  %s2815 = scalar_lea.vmem %s3, 128
  %v2816 = vld [vmem:[%s2815] sm:$0xf]
  %v2817 = vpack.c.bf16 %v2811, %v2807
  %v2818 = vpack.c.bf16 %v2812, %v2808
  %v2819 = vpack.c.bf16 %v2813, %v2809
  %v2820 = vpack.c.bf16 %v2814, %v2810
  %v2822 = vsel %vm2497, %v2816, 0
  %2824 = vmatprep.subr.bf16.mxu0 %v2818
  %2825 = vmatpush1.bf16.msra.mxu0 %v2817
  %2826 = vmatprep.subr.bf16.mxu0 0
  %2827 = vmatpush1.bf16.msra.mxu0 0
  %2828 = vmatprep.subr.bf16.mxu0 0
  %2829 = vmatpush1.bf16.msra.mxu0 0
  %2830 = vmatprep.subr.bf16.mxu0 0
  %2831 = vmatpush1.bf16.msra.mxu0 0
  %2832 = vmatprep.subr.bf16.mxu0 0
  %2833 = vmatpush1.bf16.msra.mxu0 0
  %2834 = vmatprep.subr.bf16.mxu0 0
  %2835 = vmatpush1.bf16.msra.mxu0 0
  %2836 = vmatprep.subr.bf16.mxu0 0
  %2837 = vmatpush1.bf16.msra.mxu0 0
  %2838 = vmatprep.subr.bf16.mxu0 0
  %2839 = vmatpush1.bf16.msra.mxu0 0
  %2840 = vmatprep.subr.bf16.mxu0 0
  %2841 = vmatpush1.bf16.msra.mxu0 0
  %2842 = vmatprep.subr.bf16.mxu0 0
  %2843 = vmatpush1.bf16.msra.mxu0 0
  %2844 = vmatprep.subr.bf16.mxu0 0
  %2845 = vmatpush1.bf16.msra.mxu0 0
  %2846 = vmatprep.subr.bf16.mxu0 0
  %2847 = vmatpush1.bf16.msra.mxu0 0
  %2848 = vmatprep.subr.bf16.mxu0 0
  %2849 = vmatpush1.bf16.msra.mxu0 0
  %2850 = vmatprep.subr.bf16.mxu0 0
  %2851 = vmatpush1.bf16.msra.mxu0 0
  %2852 = vmatprep.subr.bf16.mxu0 0
  %2853 = vmatpush1.bf16.msra.mxu0 0
  %2854 = vmatprep.subr.bf16.mxu0 0
  %2855 = vmatpush1.bf16.msra.mxu0 0
  %2856 = vmatprep.mubr.bf16.mxu0 0
  %2857 = vmatmul.mubr.bf16.gmra.mrb[0].mxu0 %v2822
  %v2858 = vpop.f32.mrb[0].mxu0
  %v2859 = vadd.f32 0.0, %v2858
  %v2860 = vpop.f32.mrb[0].mxu0
  %v2861 = vadd.f32 0.0, %v2860
  %v2862 = vpop.f32.mrb[0].mxu0
  %v2863 = vpop.f32.mrb[0].mxu0
  %2864 = vdwg.mxu0
  %2865 = vmatprep.subr.bf16.mxu0 %v2820
  %2866 = vmatpush1.bf16.msra.mxu0 %v2819
  %2867 = vmatprep.subr.bf16.mxu0 0
  %2868 = vmatpush1.bf16.msra.mxu0 0
  %2869 = vmatprep.subr.bf16.mxu0 0
  %2870 = vmatpush1.bf16.msra.mxu0 0
  %2871 = vmatprep.subr.bf16.mxu0 0
  %2872 = vmatpush1.bf16.msra.mxu0 0
  %2873 = vmatprep.subr.bf16.mxu0 0
  %2874 = vmatpush1.bf16.msra.mxu0 0
  %2875 = vmatprep.subr.bf16.mxu0 0
  %2876 = vmatpush1.bf16.msra.mxu0 0
  %2877 = vmatprep.subr.bf16.mxu0 0
  %2878 = vmatpush1.bf16.msra.mxu0 0
  %2879 = vmatprep.subr.bf16.mxu0 0
  %2880 = vmatpush1.bf16.msra.mxu0 0
  %2881 = vmatprep.subr.bf16.mxu0 0
  %2882 = vmatpush1.bf16.msra.mxu0 0
  %2883 = vmatprep.subr.bf16.mxu0 0
  %2884 = vmatpush1.bf16.msra.mxu0 0
  %2885 = vmatprep.subr.bf16.mxu0 0
  %2886 = vmatpush1.bf16.msra.mxu0 0
  %2887 = vmatprep.subr.bf16.mxu0 0
  %2888 = vmatpush1.bf16.msra.mxu0 0
  %2889 = vmatprep.subr.bf16.mxu0 0
  %2890 = vmatpush1.bf16.msra.mxu0 0
  %2891 = vmatprep.subr.bf16.mxu0 0
  %2892 = vmatpush1.bf16.msra.mxu0 0
  %2893 = vmatprep.subr.bf16.mxu0 0
  %2894 = vmatpush1.bf16.msra.mxu0 0
  %2895 = vmatprep.subr.bf16.mxu0 0
  %2896 = vmatpush1.bf16.msra.mxu0 0
  %2897 = vmatprep.mubr.bf16.mxu0 0
  %2898 = vmatmul.mubr.bf16.gmra.mrb[0].mxu0 %v2822
  %v2899 = vpop.f32.mrb[0].mxu0
  %v2900 = vadd.f32 0.0, %v2899
  %v2901 = vpop.f32.mrb[0].mxu0
  %v2902 = vadd.f32 0.0, %v2901
  %v2903 = vpop.f32.mrb[0].mxu0
  %v2904 = vpop.f32.mrb[0].mxu0
  %2905 = vdwg.mxu0
  %v2906 = vpack.c.bf16 %v2859, %v2859
  %v2907 = vpack.c.bf16 %v2861, %v2861
  %v2908 = vpack.c.bf16 %v2900, %v2900
  %v2909 = vpack.c.bf16 %v2902, %v2902
  %2910 = vmatprep.subr.bf16.mxu0 %v1991
  %2911 = vmatpush1.bf16.msra.mxu0 %v1990
  %2912 = vmatprep.subr.bf16.mxu0 %v1995
  %2913 = vmatpush1.bf16.msra.mxu0 %v1994
  %2914 = vmatprep.subr.bf16.mxu0 %v1999
  %2915 = vmatpush1.bf16.msra.mxu0 %v1998
  %2916 = vmatprep.subr.bf16.mxu0 %v2003
  %2917 = vmatpush1.bf16.msra.mxu0 %v2002
  %2918 = vmatprep.subr.bf16.mxu0 %v2007
  %2919 = vmatpush1.bf16.msra.mxu0 %v2006
  %2920 = vmatprep.subr.bf16.mxu0 %v2011
  %2921 = vmatpush1.bf16.msra.mxu0 %v2010
  %2922 = vmatprep.subr.bf16.mxu0 %v2015
  %2923 = vmatpush1.bf16.msra.mxu0 %v2014
  %2924 = vmatprep.subr.bf16.mxu0 %v2019
  %2925 = vmatpush1.bf16.msra.mxu0 %v2018
  %2926 = vmatprep.subr.bf16.mxu0 %v2023
  %2927 = vmatpush1.bf16.msra.mxu0 %v2022
  %2928 = vmatprep.subr.bf16.mxu0 %v2027
  %2929 = vmatpush1.bf16.msra.mxu0 %v2026
  %2930 = vmatprep.subr.bf16.mxu0 %v2031
  %2931 = vmatpush1.bf16.msra.mxu0 %v2030
  %2932 = vmatprep.subr.bf16.mxu0 %v2035
  %2933 = vmatpush1.bf16.msra.mxu0 %v2034
  %2934 = vmatprep.subr.bf16.mxu0 %v2039
  %2935 = vmatpush1.bf16.msra.mxu0 %v2038
  %2936 = vmatprep.subr.bf16.mxu0 %v2043
  %2937 = vmatpush1.bf16.msra.mxu0 %v2042
  %2938 = vmatprep.subr.bf16.mxu0 %v2047
  %2939 = vmatpush1.bf16.msra.mxu0 %v2046
  %2940 = vmatprep.subr.bf16.mxu0 %v2051
  %2941 = vmatpush1.bf16.msra.mxu0 %v2050
  %2942 = vmatprep.mubr.bf16.mxu0 %v2907
  %2943 = vmatmul.mubr.bf16.gmra.mrb[0].mxu0 %v2906
  %v2944 = vpop.f32.mrb[0].mxu0
  %v2945 = vadd.f32 0.0, %v2944
  %v2946 = vpop.f32.mrb[0].mxu0
  %v2947 = vadd.f32 0.0, %v2946
  %v2948 = vpop.f32.mrb[0].mxu0
  %v2949 = vpop.f32.mrb[0].mxu0
  %2950 = vdwg.mxu0
  %2951 = vmatprep.subr.bf16.mxu0 %v2055
  %2952 = vmatpush1.bf16.msra.mxu0 %v2054
  %2953 = vmatprep.subr.bf16.mxu0 %v2059
  %2954 = vmatpush1.bf16.msra.mxu0 %v2058
  %2955 = vmatprep.subr.bf16.mxu0 %v2063
  %2956 = vmatpush1.bf16.msra.mxu0 %v2062
  %2957 = vmatprep.subr.bf16.mxu0 %v2067
  %2958 = vmatpush1.bf16.msra.mxu0 %v2066
  %2959 = vmatprep.subr.bf16.mxu0 %v2071
  %2960 = vmatpush1.bf16.msra.mxu0 %v2070
  %2961 = vmatprep.subr.bf16.mxu0 %v2075
  %2962 = vmatpush1.bf16.msra.mxu0 %v2074
  %2963 = vmatprep.subr.bf16.mxu0 %v2079
  %2964 = vmatpush1.bf16.msra.mxu0 %v2078
  %2965 = vmatprep.subr.bf16.mxu0 %v2083
  %2966 = vmatpush1.bf16.msra.mxu0 %v2082
  %2967 = vmatprep.subr.bf16.mxu0 %v2087
  %2968 = vmatpush1.bf16.msra.mxu0 %v2086
  %2969 = vmatprep.subr.bf16.mxu0 %v2091
  %2970 = vmatpush1.bf16.msra.mxu0 %v2090
  %2971 = vmatprep.subr.bf16.mxu0 %v2095
  %2972 = vmatpush1.bf16.msra.mxu0 %v2094
  %2973 = vmatprep.subr.bf16.mxu0 %v2099
  %2974 = vmatpush1.bf16.msra.mxu0 %v2098
  %2975 = vmatprep.subr.bf16.mxu0 %v2103
  %2976 = vmatpush1.bf16.msra.mxu0 %v2102
  %2977 = vmatprep.subr.bf16.mxu0 %v2107
  %2978 = vmatpush1.bf16.msra.mxu0 %v2106
  %2979 = vmatprep.subr.bf16.mxu0 %v2111
  %2980 = vmatpush1.bf16.msra.mxu0 %v2110
  %2981 = vmatprep.subr.bf16.mxu0 %v2115
  %2982 = vmatpush1.bf16.msra.mxu0 %v2114
  %2983 = vmatprep.mubr.bf16.mxu0 %v2909
  %2984 = vmatmul.mubr.bf16.gmra.mrb[0].mxu0 %v2908
  %v2985 = vpop.f32.mrb[0].mxu0
  %v2986 = vadd.f32 %v2945, %v2985
  %v2987 = vpop.f32.mrb[0].mxu0
  %v2988 = vadd.f32 %v2947, %v2987
  %v2989 = vpop.f32.mrb[0].mxu0
  %v2990 = vpop.f32.mrb[0].mxu0
  %2991 = vdwg.mxu0
  %2992 = vmatprep.subr.bf16.mxu0 %v1993
  %2993 = vmatpush1.bf16.msra.mxu0 %v1992
  %2994 = vmatprep.subr.bf16.mxu0 %v1997
  %2995 = vmatpush1.bf16.msra.mxu0 %v1996
  %2996 = vmatprep.subr.bf16.mxu0 %v2001
  %2997 = vmatpush1.bf16.msra.mxu0 %v2000
  %2998 = vmatprep.subr.bf16.mxu0 %v2005
  %2999 = vmatpush1.bf16.msra.mxu0 %v2004
  %3000 = vmatprep.subr.bf16.mxu0 %v2009
  %3001 = vmatpush1.bf16.msra.mxu0 %v2008
  %3002 = vmatprep.subr.bf16.mxu0 %v2013
  %3003 = vmatpush1.bf16.msra.mxu0 %v2012
  %3004 = vmatprep.subr.bf16.mxu0 %v2017
  %3005 = vmatpush1.bf16.msra.mxu0 %v2016
  %3006 = vmatprep.subr.bf16.mxu0 %v2021
  %3007 = vmatpush1.bf16.msra.mxu0 %v2020
  %3008 = vmatprep.subr.bf16.mxu0 %v2025
  %3009 = vmatpush1.bf16.msra.mxu0 %v2024
  %3010 = vmatprep.subr.bf16.mxu0 %v2029
  %3011 = vmatpush1.bf16.msra.mxu0 %v2028
  %3012 = vmatprep.subr.bf16.mxu0 %v2033
  %3013 = vmatpush1.bf16.msra.mxu0 %v2032
  %3014 = vmatprep.subr.bf16.mxu0 %v2037
  %3015 = vmatpush1.bf16.msra.mxu0 %v2036
  %3016 = vmatprep.subr.bf16.mxu0 %v2041
  %3017 = vmatpush1.bf16.msra.mxu0 %v2040
  %3018 = vmatprep.subr.bf16.mxu0 %v2045
  %3019 = vmatpush1.bf16.msra.mxu0 %v2044
  %3020 = vmatprep.subr.bf16.mxu0 %v2049
  %3021 = vmatpush1.bf16.msra.mxu0 %v2048
  %3022 = vmatprep.subr.bf16.mxu0 %v2053
  %3023 = vmatpush1.bf16.msra.mxu0 %v2052
  %3024 = vmatprep.mubr.bf16.mxu0 %v2907
  %3025 = vmatmul.mubr.bf16.gmra.mrb[0].mxu0 %v2906
  %v3026 = vpop.f32.mrb[0].mxu0
  %v3027 = vadd.f32 0.0, %v3026
  %v3028 = vpop.f32.mrb[0].mxu0
  %v3029 = vadd.f32 0.0, %v3028
  %v3030 = vpop.f32.mrb[0].mxu0
  %v3031 = vpop.f32.mrb[0].mxu0
  %3032 = vdwg.mxu0
  %3033 = vmatprep.subr.bf16.mxu0 %v2057
  %3034 = vmatpush1.bf16.msra.mxu0 %v2056
  %3035 = vmatprep.subr.bf16.mxu0 %v2061
  %3036 = vmatpush1.bf16.msra.mxu0 %v2060
  %3037 = vmatprep.subr.bf16.mxu0 %v2065
  %3038 = vmatpush1.bf16.msra.mxu0 %v2064
  %3039 = vmatprep.subr.bf16.mxu0 %v2069
  %3040 = vmatpush1.bf16.msra.mxu0 %v2068
  %3041 = vmatprep.subr.bf16.mxu0 %v2073
  %3042 = vmatpush1.bf16.msra.mxu0 %v2072
  %3043 = vmatprep.subr.bf16.mxu0 %v2077
  %3044 = vmatpush1.bf16.msra.mxu0 %v2076
  %3045 = vmatprep.subr.bf16.mxu0 %v2081
  %3046 = vmatpush1.bf16.msra.mxu0 %v2080
  %3047 = vmatprep.subr.bf16.mxu0 %v2085
  %3048 = vmatpush1.bf16.msra.mxu0 %v2084
  %3049 = vmatprep.subr.bf16.mxu0 %v2089
  %3050 = vmatpush1.bf16.msra.mxu0 %v2088
  %3051 = vmatprep.subr.bf16.mxu0 %v2093
  %3052 = vmatpush1.bf16.msra.mxu0 %v2092
  %3053 = vmatprep.subr.bf16.mxu0 %v2097
  %3054 = vmatpush1.bf16.msra.mxu0 %v2096
  %3055 = vmatprep.subr.bf16.mxu0 %v2101
  %3056 = vmatpush1.bf16.msra.mxu0 %v2100
  %3057 = vmatprep.subr.bf16.mxu0 %v2105
  %3058 = vmatpush1.bf16.msra.mxu0 %v2104
  %3059 = vmatprep.subr.bf16.mxu0 %v2109
  %3060 = vmatpush1.bf16.msra.mxu0 %v2108
  %3061 = vmatprep.subr.bf16.mxu0 %v2113
  %3062 = vmatpush1.bf16.msra.mxu0 %v2112
  %3063 = vmatprep.subr.bf16.mxu0 %v2117
  %3064 = vmatpush1.bf16.msra.mxu0 %v2116
  %3065 = vmatprep.mubr.bf16.mxu0 %v2909
  %3066 = vmatmul.mubr.bf16.gmra.mrb[0].mxu0 %v2908
  %v3067 = vpop.f32.mrb[0].mxu0
  %v3068 = vadd.f32 %v3027, %v3067
  %v3069 = vpop.f32.mrb[0].mxu0
  %v3070 = vadd.f32 %v3029, %v3069
  %v3071 = vpop.f32.mrb[0].mxu0
  %v3072 = vpop.f32.mrb[0].mxu0
  %3073 = vdwg.mxu0
  %v3074 = vmax.f32 %v2986, %v2988
  %v3075 = vmax.f32 %v3068, %v3070
  %v3076 = vmax.f32 %v3074, %v3075
  %3077 = vadd.xlane.f32.xlu0 %v3076
  %v3078 = vpop.xlane.xlu0 %3077
  %v3079 = vmul.f32 %v3078, %v32
  %v3080 = vmul.f32 %v3076, %v3076
  %3081 = vadd.xlane.f32.xlu0 %v3080
  %v3082 = vpop.xlane.xlu0 %3081
  %v3083 = vmul.f32 %v3082, %v32
  %v3084 = vmul.f32 %v3079, %v3079
  %v3085 = vsub.f32 %v3083, %v3084
  %v3086 = vmax.f32 %v3085, 0.0
  %v3087 = vsub.f32 %v3076, %v3079
  %v3088 = vadd.f32 %v3086, 1e-05
  %v3089 = vrsqrt.pop %v3088
  %v3090 = vmul.f32 %v3087, %v3089
  %v3091 = vmax.f32 %v3090, 0.0
  %v3092 = vld [vmem:[%s1 + $0x78] sm:$0xff]
  %v3093 = vadd.f32 %v3091, %v3092
  %v3094 = vmax.f32 %v3093, 0.0
  %3095 = vadd.xlane.f32.xlu0 %v3094
  %v3096 = vpop.xlane.xlu0 %3095
  %v3097 = vmul.f32 %v3096, %v32
  %v3098 = vmul.f32 %v3094, %v3094
  %3099 = vadd.xlane.f32.xlu0 %v3098
  %v3100 = vpop.xlane.xlu0 %3099
  %v3101 = vmul.f32 %v3100, %v32
  %v3102 = vmul.f32 %v3097, %v3097
  %v3103 = vsub.f32 %v3101, %v3102
  %v3104 = vmax.f32 %v3103, 0.0
  %v3105 = vsub.f32 %v3094, %v3097
  %v3106 = vadd.f32 %v3104, 1e-05
  %v3107 = vrsqrt.pop %v3106
  %v3108 = vmul.f32 %v3105, %v3107
  %s3109 = scalar_lea.vmem %s3, 144
  %v3110 = vld [vmem:[%s3109] sm:$0xf]
  %v3111 = vpack.c.bf16 %v3108, %v3108
  %vm3112 = vcmask 64512
  %v3114 = vsel %vm3112, %v3110, 0
  %v3117 = vsel %vm28, %v3111, 0
  %3119 = vmatprep.subr.bf16.mxu0 0
  %3120 = vmatpush1.bf16.msra.mxu0 %v3117
  %3121 = vmatprep.subr.bf16.mxu0 0
  %3122 = vmatpush1.bf16.msra.mxu0 0
  %3123 = vmatprep.subr.bf16.mxu0 0
  %3124 = vmatpush1.bf16.msra.mxu0 0
  %3125 = vmatprep.subr.bf16.mxu0 0
  %3126 = vmatpush1.bf16.msra.mxu0 0
  %3127 = vmatprep.subr.bf16.mxu0 0
  %3128 = vmatpush1.bf16.msra.mxu0 0
  %3129 = vmatprep.subr.bf16.mxu0 0
  %3130 = vmatpush1.bf16.msra.mxu0 0
  %3131 = vmatprep.subr.bf16.mxu0 0
  %3132 = vmatpush1.bf16.msra.mxu0 0
  %3133 = vmatprep.subr.bf16.mxu0 0
  %3134 = vmatpush1.bf16.msra.mxu0 0
  %3135 = vmatprep.subr.bf16.mxu0 0
  %3136 = vmatpush1.bf16.msra.mxu0 0
  %3137 = vmatprep.subr.bf16.mxu0 0
  %3138 = vmatpush1.bf16.msra.mxu0 0
  %3139 = vmatprep.subr.bf16.mxu0 0
  %3140 = vmatpush1.bf16.msra.mxu0 0
  %3141 = vmatprep.subr.bf16.mxu0 0
  %3142 = vmatpush1.bf16.msra.mxu0 0
  %3143 = vmatprep.subr.bf16.mxu0 0
  %3144 = vmatpush1.bf16.msra.mxu0 0
  %3145 = vmatprep.subr.bf16.mxu0 0
  %3146 = vmatpush1.bf16.msra.mxu0 0
  %3147 = vmatprep.subr.bf16.mxu0 0
  %3148 = vmatpush1.bf16.msra.mxu0 0
  %3149 = vmatprep.subr.bf16.mxu0 0
  %3150 = vmatpush1.bf16.msra.mxu0 0
  %3151 = vmatprep.mubr.bf16.mxu0 0
  %3152 = vmatmul.mubr.bf16.gmra.mrb[0].mxu0 %v3114
  %v3153 = vpop.f32.mrb[0].mxu0
  %v3154 = vadd.f32 0.0, %v3153
  %v3155 = vpop.f32.mrb[0].mxu0
  %v3156 = vpop.f32.mrb[0].mxu0
  %v3157 = vpop.f32.mrb[0].mxu0
  %3158 = vdwg.mxu0
  %s3159 = scalar_lea.vmem %s3, 160
  %v3160 = vld [vmem:[%s3159] sm:$0xf]
  %v3162 = vsel %vm2497, %v3160, 0
  %3164 = vmatprep.subr.bf16.mxu0 0
  %3165 = vmatpush1.bf16.msra.mxu0 %v2654
  %3166 = vmatprep.subr.bf16.mxu0 0
  %3167 = vmatpush1.bf16.msra.mxu0 0
  %3168 = vmatprep.subr.bf16.mxu0 0
  %3169 = vmatpush1.bf16.msra.mxu0 0
  %3170 = vmatprep.subr.bf16.mxu0 0
  %3171 = vmatpush1.bf16.msra.mxu0 0
  %3172 = vmatprep.subr.bf16.mxu0 0
  %3173 = vmatpush1.bf16.msra.mxu0 0
  %3174 = vmatprep.subr.bf16.mxu0 0
  %3175 = vmatpush1.bf16.msra.mxu0 0
  %3176 = vmatprep.subr.bf16.mxu0 0
  %3177 = vmatpush1.bf16.msra.mxu0 0
  %3178 = vmatprep.subr.bf16.mxu0 0
  %3179 = vmatpush1.bf16.msra.mxu0 0
  %3180 = vmatprep.subr.bf16.mxu0 0
  %3181 = vmatpush1.bf16.msra.mxu0 0
  %3182 = vmatprep.subr.bf16.mxu0 0
  %3183 = vmatpush1.bf16.msra.mxu0 0
  %3184 = vmatprep.subr.bf16.mxu0 0
  %3185 = vmatpush1.bf16.msra.mxu0 0
  %3186 = vmatprep.subr.bf16.mxu0 0
  %3187 = vmatpush1.bf16.msra.mxu0 0
  %3188 = vmatprep.subr.bf16.mxu0 0
  %3189 = vmatpush1.bf16.msra.mxu0 0
  %3190 = vmatprep.subr.bf16.mxu0 0
  %3191 = vmatpush1.bf16.msra.mxu0 0
  %3192 = vmatprep.subr.bf16.mxu0 0
  %3193 = vmatpush1.bf16.msra.mxu0 0
  %3194 = vmatprep.subr.bf16.mxu0 0
  %3195 = vmatpush1.bf16.msra.mxu0 0
  %3196 = vmatprep.mubr.bf16.mxu0 0
  %3197 = vmatmul.mubr.bf16.gmra.mrb[0].mxu0 %v3162
  %v3198 = vpop.f32.mrb[0].mxu0
  %v3199 = vadd.f32 0.0, %v3198
  %v3200 = vpop.f32.mrb[0].mxu0
  %v3201 = vpop.f32.mrb[0].mxu0
  %v3202 = vpop.f32.mrb[0].mxu0
  %3203 = vdwg.mxu0
  %3204 = vadd.xlane.f32.xlu0 %v3199
  %v3205 = vpop.xlane.xlu0 %3204
  %v3206 = vmul.f32 %v3205, %v32
  %v3207 = vmul.f32 %v3199, %v3199
  %3208 = vadd.xlane.f32.xlu0 %v3207
  %v3209 = vpop.xlane.xlu0 %3208
  %v3210 = vmul.f32 %v3209, %v32
  %v3211 = vmul.f32 %v3206, %v3206
  %v3212 = vsub.f32 %v3210, %v3211
  %v3213 = vmax.f32 %v3212, 0.0
  %v3214 = vsub.f32 %v3199, %v3206
  %v3215 = vadd.f32 %v3213, 1e-05
  %v3216 = vrsqrt.pop %v3215
  %v3217 = vmul.f32 %v3214, %v3216
  %3218 = vadd.xlane.f32.xlu0 %v3154
  %v3219 = vpop.xlane.xlu0 %3218
  %v3220 = vmul.f32 %v3219, %v32
  %v3221 = vmul.f32 %v3154, %v3154
  %3222 = vadd.xlane.f32.xlu0 %v3221
  %v3223 = vpop.xlane.xlu0 %3222
  %v3224 = vmul.f32 %v3223, %v32
  %v3225 = vmul.f32 %v3220, %v3220
  %v3226 = vsub.f32 %v3224, %v3225
  %v3227 = vmax.f32 %v3226, 0.0
  %v3228 = vsub.f32 %v3154, %v3220
  %v3229 = vadd.f32 %v3227, 1e-05
  %v3230 = vrsqrt.pop %v3229
  %v3231 = vmul.f32 %v3228, %v3230
  %v3232 = vadd.f32 %v3231, %v3217
  %v3233 = vmax.f32 %v3232, 0.0
  %v3234 = vpack.c.bf16 %v3233, %v3233
  %v3235 = vld [vmem:[%s2 + $0xc0] sm:$0xff]
  %v3236 = vld [vmem:[%s2 + $0xc8] sm:$0xff]
  %v3237 = vld [vmem:[%s2 + $0xd0] sm:$0xff]
  %v3238 = vld [vmem:[%s2 + $0xd8] sm:$0xff]
  %3239 = vmatprep.subr.bf16.mxu0 %v1067
  %3240 = vmatpush1.bf16.msra.mxu0 %v1066
  %3241 = vmatprep.subr.bf16.mxu0 %v1071
  %3242 = vmatpush1.bf16.msra.mxu0 %v1070
  %3243 = vmatprep.subr.bf16.mxu0 %v1075
  %3244 = vmatpush1.bf16.msra.mxu0 %v1074
  %3245 = vmatprep.subr.bf16.mxu0 %v1079
  %3246 = vmatpush1.bf16.msra.mxu0 %v1078
  %3247 = vmatprep.subr.bf16.mxu0 %v1083
  %3248 = vmatpush1.bf16.msra.mxu0 %v1082
  %3249 = vmatprep.subr.bf16.mxu0 %v1087
  %3250 = vmatpush1.bf16.msra.mxu0 %v1086
  %3251 = vmatprep.subr.bf16.mxu0 %v1091
  %3252 = vmatpush1.bf16.msra.mxu0 %v1090
  %3253 = vmatprep.subr.bf16.mxu0 %v1095
  %3254 = vmatpush1.bf16.msra.mxu0 %v1094
  %3255 = vmatprep.subr.bf16.mxu0 0
  %3256 = vmatpush1.bf16.msra.mxu0 0
  %3257 = vmatprep.subr.bf16.mxu0 0
  %3258 = vmatpush1.bf16.msra.mxu0 0
  %3259 = vmatprep.subr.bf16.mxu0 0
  %3260 = vmatpush1.bf16.msra.mxu0 0
  %3261 = vmatprep.subr.bf16.mxu0 0
  %3262 = vmatpush1.bf16.msra.mxu0 0
  %3263 = vmatprep.subr.bf16.mxu0 0
  %3264 = vmatpush1.bf16.msra.mxu0 0
  %3265 = vmatprep.subr.bf16.mxu0 0
  %3266 = vmatpush1.bf16.msra.mxu0 0
  %3267 = vmatprep.subr.bf16.mxu0 0
  %3268 = vmatpush1.bf16.msra.mxu0 0
  %3269 = vmatprep.subr.bf16.mxu0 0
  %3270 = vmatpush1.bf16.msra.mxu0 0
  %3271 = vmatprep.mubr.bf16.mxu0 0
  %3272 = vmatmul.mubr.bf16.gmra.mrb[0].mxu0 %v3234
  %v3273 = vpop.f32.mrb[0].mxu0
  %v3274 = vadd.f32 %v3235, %v3273
  %v3275 = vpop.f32.mrb[0].mxu0
  %v3276 = vadd.f32 %v3236, %v3275
  %v3277 = vpop.f32.mrb[0].mxu0
  %v3278 = vpop.f32.mrb[0].mxu0
  %3279 = vdwg.mxu0
  %3280 = vmatprep.subr.bf16.mxu0 %v1069
  %3281 = vmatpush1.bf16.msra.mxu0 %v1068
  %3282 = vmatprep.subr.bf16.mxu0 %v1073
  %3283 = vmatpush1.bf16.msra.mxu0 %v1072
  %3284 = vmatprep.subr.bf16.mxu0 %v1077
  %3285 = vmatpush1.bf16.msra.mxu0 %v1076
  %3286 = vmatprep.subr.bf16.mxu0 %v1081
  %3287 = vmatpush1.bf16.msra.mxu0 %v1080
  %3288 = vmatprep.subr.bf16.mxu0 %v1085
  %3289 = vmatpush1.bf16.msra.mxu0 %v1084
  %3290 = vmatprep.subr.bf16.mxu0 %v1089
  %3291 = vmatpush1.bf16.msra.mxu0 %v1088
  %3292 = vmatprep.subr.bf16.mxu0 %v1093
  %3293 = vmatpush1.bf16.msra.mxu0 %v1092
  %3294 = vmatprep.subr.bf16.mxu0 %v1097
  %3295 = vmatpush1.bf16.msra.mxu0 %v1096
  %3296 = vmatprep.subr.bf16.mxu0 0
  %3297 = vmatpush1.bf16.msra.mxu0 0
  %3298 = vmatprep.subr.bf16.mxu0 0
  %3299 = vmatpush1.bf16.msra.mxu0 0
  %3300 = vmatprep.subr.bf16.mxu0 0
  %3301 = vmatpush1.bf16.msra.mxu0 0
  %3302 = vmatprep.subr.bf16.mxu0 0
  %3303 = vmatpush1.bf16.msra.mxu0 0
  %3304 = vmatprep.subr.bf16.mxu0 0
  %3305 = vmatpush1.bf16.msra.mxu0 0
  %3306 = vmatprep.subr.bf16.mxu0 0
  %3307 = vmatpush1.bf16.msra.mxu0 0
  %3308 = vmatprep.subr.bf16.mxu0 0
  %3309 = vmatpush1.bf16.msra.mxu0 0
  %3310 = vmatprep.subr.bf16.mxu0 0
  %3311 = vmatpush1.bf16.msra.mxu0 0
  %3312 = vmatprep.mubr.bf16.mxu0 0
  %3313 = vmatmul.mubr.bf16.gmra.mrb[0].mxu0 %v3234
  %v3314 = vpop.f32.mrb[0].mxu0
  %v3315 = vadd.f32 %v3237, %v3314
  %v3316 = vpop.f32.mrb[0].mxu0
  %v3317 = vadd.f32 %v3238, %v3316
  %v3318 = vpop.f32.mrb[0].mxu0
  %v3319 = vpop.f32.mrb[0].mxu0
  %3320 = vdwg.mxu0
  %v3321 = vmax.f32 %v3274, 0.0
  %v3322 = vmax.f32 %v3276, 0.0
  %v3323 = vmax.f32 %v3315, 0.0
  %v3324 = vmax.f32 %v3317, 0.0
  %v3325 = vadd.f32 %v3321, %v3322
  %v3326 = vadd.f32 %v3325, %v3323
  %v3327 = vadd.f32 %v3326, %v3324
  %3328 = vadd.xlane.f32.xlu0 %v3327
  %v3329 = vpop.xlane.xlu0 %3328
  %v3330 = vmul.f32 %v3329, %v1272
  %v3331 = vmul.f32 %v3321, %v3321
  %v3332 = vmul.f32 %v3322, %v3322
  %v3333 = vmul.f32 %v3323, %v3323
  %v3334 = vmul.f32 %v3324, %v3324
  %v3335 = vadd.f32 %v3331, %v3332
  %v3336 = vadd.f32 %v3335, %v3333
  %v3337 = vadd.f32 %v3336, %v3334
  %3338 = vadd.xlane.f32.xlu0 %v3337
  %v3339 = vpop.xlane.xlu0 %3338
  %v3340 = vmul.f32 %v3339, %v1272
  %v3341 = vmul.f32 %v3330, %v3330
  %v3342 = vsub.f32 %v3340, %v3341
  %v3343 = vmax.f32 %v3342, 0.0
  %v3344 = vsub.f32 %v3321, %v3330
  %v3345 = vsub.f32 %v3322, %v3330
  %v3346 = vsub.f32 %v3323, %v3330
  %v3347 = vsub.f32 %v3324, %v3330
  %v3348 = vadd.f32 %v3343, 1e-05
  %v3349 = vrsqrt.pop %v3348
  %v3350 = vmul.f32 %v3344, %v3349
  %v3351 = vmul.f32 %v3345, %v3349
  %v3352 = vmul.f32 %v3346, %v3349
  %v3353 = vmul.f32 %v3347, %v3349
  %s3354 = scalar_lea.vmem %s3, 176
  %v3355 = vld [vmem:[%s3354] sm:$0xf]
  %v3356 = vpack.c.bf16 %v3350, %v3350
  %v3357 = vpack.c.bf16 %v3351, %v3351
  %v3358 = vpack.c.bf16 %v3352, %v3352
  %v3359 = vpack.c.bf16 %v3353, %v3353
  %v3361 = vsel %vm3112, %v3355, 0
  %v3364 = vsel %vm28, %v3356, 0
  %v3367 = vsel %vm28, %v3357, 0
  %v3370 = vsel %vm28, %v3358, 0
  %v3373 = vsel %vm28, %v3359, 0
  %3375 = vmatprep.subr.bf16.mxu0 %v3367
  %3376 = vmatpush1.bf16.msra.mxu0 %v3364
  %3377 = vmatprep.subr.bf16.mxu0 0
  %3378 = vmatpush1.bf16.msra.mxu0 0
  %3379 = vmatprep.subr.bf16.mxu0 0
  %3380 = vmatpush1.bf16.msra.mxu0 0
  %3381 = vmatprep.subr.bf16.mxu0 0
  %3382 = vmatpush1.bf16.msra.mxu0 0
  %3383 = vmatprep.subr.bf16.mxu0 0
  %3384 = vmatpush1.bf16.msra.mxu0 0
  %3385 = vmatprep.subr.bf16.mxu0 0
  %3386 = vmatpush1.bf16.msra.mxu0 0
  %3387 = vmatprep.subr.bf16.mxu0 0
  %3388 = vmatpush1.bf16.msra.mxu0 0
  %3389 = vmatprep.subr.bf16.mxu0 0
  %3390 = vmatpush1.bf16.msra.mxu0 0
  %3391 = vmatprep.subr.bf16.mxu0 0
  %3392 = vmatpush1.bf16.msra.mxu0 0
  %3393 = vmatprep.subr.bf16.mxu0 0
  %3394 = vmatpush1.bf16.msra.mxu0 0
  %3395 = vmatprep.subr.bf16.mxu0 0
  %3396 = vmatpush1.bf16.msra.mxu0 0
  %3397 = vmatprep.subr.bf16.mxu0 0
  %3398 = vmatpush1.bf16.msra.mxu0 0
  %3399 = vmatprep.subr.bf16.mxu0 0
  %3400 = vmatpush1.bf16.msra.mxu0 0
  %3401 = vmatprep.subr.bf16.mxu0 0
  %3402 = vmatpush1.bf16.msra.mxu0 0
  %3403 = vmatprep.subr.bf16.mxu0 0
  %3404 = vmatpush1.bf16.msra.mxu0 0
  %3405 = vmatprep.subr.bf16.mxu0 0
  %3406 = vmatpush1.bf16.msra.mxu0 0
  %3407 = vmatprep.mubr.bf16.mxu0 0
  %3408 = vmatmul.mubr.bf16.gmra.mrb[0].mxu0 %v3361
  %v3409 = vpop.f32.mrb[0].mxu0
  %v3410 = vadd.f32 0.0, %v3409
  %v3411 = vpop.f32.mrb[0].mxu0
  %v3412 = vadd.f32 0.0, %v3411
  %v3413 = vpop.f32.mrb[0].mxu0
  %v3414 = vpop.f32.mrb[0].mxu0
  %3415 = vdwg.mxu0
  %3416 = vmatprep.subr.bf16.mxu0 %v3373
  %3417 = vmatpush1.bf16.msra.mxu0 %v3370
  %3418 = vmatprep.subr.bf16.mxu0 0
  %3419 = vmatpush1.bf16.msra.mxu0 0
  %3420 = vmatprep.subr.bf16.mxu0 0
  %3421 = vmatpush1.bf16.msra.mxu0 0
  %3422 = vmatprep.subr.bf16.mxu0 0
  %3423 = vmatpush1.bf16.msra.mxu0 0
  %3424 = vmatprep.subr.bf16.mxu0 0
  %3425 = vmatpush1.bf16.msra.mxu0 0
  %3426 = vmatprep.subr.bf16.mxu0 0
  %3427 = vmatpush1.bf16.msra.mxu0 0
  %3428 = vmatprep.subr.bf16.mxu0 0
  %3429 = vmatpush1.bf16.msra.mxu0 0
  %3430 = vmatprep.subr.bf16.mxu0 0
  %3431 = vmatpush1.bf16.msra.mxu0 0
  %3432 = vmatprep.subr.bf16.mxu0 0
  %3433 = vmatpush1.bf16.msra.mxu0 0
  %3434 = vmatprep.subr.bf16.mxu0 0
  %3435 = vmatpush1.bf16.msra.mxu0 0
  %3436 = vmatprep.subr.bf16.mxu0 0
  %3437 = vmatpush1.bf16.msra.mxu0 0
  %3438 = vmatprep.subr.bf16.mxu0 0
  %3439 = vmatpush1.bf16.msra.mxu0 0
  %3440 = vmatprep.subr.bf16.mxu0 0
  %3441 = vmatpush1.bf16.msra.mxu0 0
  %3442 = vmatprep.subr.bf16.mxu0 0
  %3443 = vmatpush1.bf16.msra.mxu0 0
  %3444 = vmatprep.subr.bf16.mxu0 0
  %3445 = vmatpush1.bf16.msra.mxu0 0
  %3446 = vmatprep.subr.bf16.mxu0 0
  %3447 = vmatpush1.bf16.msra.mxu0 0
  %3448 = vmatprep.mubr.bf16.mxu0 0
  %3449 = vmatmul.mubr.bf16.gmra.mrb[0].mxu0 %v3361
  %v3450 = vpop.f32.mrb[0].mxu0
  %v3451 = vadd.f32 0.0, %v3450
  %v3452 = vpop.f32.mrb[0].mxu0
  %v3453 = vadd.f32 0.0, %v3452
  %v3454 = vpop.f32.mrb[0].mxu0
  %v3455 = vpop.f32.mrb[0].mxu0
  %3456 = vdwg.mxu0
  %v3457 = vpack.c.bf16 %v3410, %v3410
  %v3458 = vpack.c.bf16 %v3412, %v3412
  %v3459 = vpack.c.bf16 %v3451, %v3451
  %v3460 = vpack.c.bf16 %v3453, %v3453
  %3461 = vmatprep.subr.bf16.mxu0 %v1991
  %3462 = vmatpush1.bf16.msra.mxu0 %v1990
  %3463 = vmatprep.subr.bf16.mxu0 %v1995
  %3464 = vmatpush1.bf16.msra.mxu0 %v1994
  %3465 = vmatprep.subr.bf16.mxu0 %v1999
  %3466 = vmatpush1.bf16.msra.mxu0 %v1998
  %3467 = vmatprep.subr.bf16.mxu0 %v2003
  %3468 = vmatpush1.bf16.msra.mxu0 %v2002
  %3469 = vmatprep.subr.bf16.mxu0 %v2007
  %3470 = vmatpush1.bf16.msra.mxu0 %v2006
  %3471 = vmatprep.subr.bf16.mxu0 %v2011
  %3472 = vmatpush1.bf16.msra.mxu0 %v2010
  %3473 = vmatprep.subr.bf16.mxu0 %v2015
  %3474 = vmatpush1.bf16.msra.mxu0 %v2014
  %3475 = vmatprep.subr.bf16.mxu0 %v2019
  %3476 = vmatpush1.bf16.msra.mxu0 %v2018
  %3477 = vmatprep.subr.bf16.mxu0 %v2023
  %3478 = vmatpush1.bf16.msra.mxu0 %v2022
  %3479 = vmatprep.subr.bf16.mxu0 %v2027
  %3480 = vmatpush1.bf16.msra.mxu0 %v2026
  %3481 = vmatprep.subr.bf16.mxu0 %v2031
  %3482 = vmatpush1.bf16.msra.mxu0 %v2030
  %3483 = vmatprep.subr.bf16.mxu0 %v2035
  %3484 = vmatpush1.bf16.msra.mxu0 %v2034
  %3485 = vmatprep.subr.bf16.mxu0 %v2039
  %3486 = vmatpush1.bf16.msra.mxu0 %v2038
  %3487 = vmatprep.subr.bf16.mxu0 %v2043
  %3488 = vmatpush1.bf16.msra.mxu0 %v2042
  %3489 = vmatprep.subr.bf16.mxu0 %v2047
  %3490 = vmatpush1.bf16.msra.mxu0 %v2046
  %3491 = vmatprep.subr.bf16.mxu0 %v2051
  %3492 = vmatpush1.bf16.msra.mxu0 %v2050
  %3493 = vmatprep.mubr.bf16.mxu0 %v3458
  %3494 = vmatmul.mubr.bf16.gmra.mrb[0].mxu0 %v3457
  %v3495 = vpop.f32.mrb[0].mxu0
  %v3496 = vadd.f32 0.0, %v3495
  %v3497 = vpop.f32.mrb[0].mxu0
  %v3498 = vadd.f32 0.0, %v3497
  %v3499 = vpop.f32.mrb[0].mxu0
  %v3500 = vpop.f32.mrb[0].mxu0
  %3501 = vdwg.mxu0
  %3502 = vmatprep.subr.bf16.mxu0 %v2055
  %3503 = vmatpush1.bf16.msra.mxu0 %v2054
  %3504 = vmatprep.subr.bf16.mxu0 %v2059
  %3505 = vmatpush1.bf16.msra.mxu0 %v2058
  %3506 = vmatprep.subr.bf16.mxu0 %v2063
  %3507 = vmatpush1.bf16.msra.mxu0 %v2062
  %3508 = vmatprep.subr.bf16.mxu0 %v2067
  %3509 = vmatpush1.bf16.msra.mxu0 %v2066
  %3510 = vmatprep.subr.bf16.mxu0 %v2071
  %3511 = vmatpush1.bf16.msra.mxu0 %v2070
  %3512 = vmatprep.subr.bf16.mxu0 %v2075
  %3513 = vmatpush1.bf16.msra.mxu0 %v2074
  %3514 = vmatprep.subr.bf16.mxu0 %v2079
  %3515 = vmatpush1.bf16.msra.mxu0 %v2078
  %3516 = vmatprep.subr.bf16.mxu0 %v2083
  %3517 = vmatpush1.bf16.msra.mxu0 %v2082
  %3518 = vmatprep.subr.bf16.mxu0 %v2087
  %3519 = vmatpush1.bf16.msra.mxu0 %v2086
  %3520 = vmatprep.subr.bf16.mxu0 %v2091
  %3521 = vmatpush1.bf16.msra.mxu0 %v2090
  %3522 = vmatprep.subr.bf16.mxu0 %v2095
  %3523 = vmatpush1.bf16.msra.mxu0 %v2094
  %3524 = vmatprep.subr.bf16.mxu0 %v2099
  %3525 = vmatpush1.bf16.msra.mxu0 %v2098
  %3526 = vmatprep.subr.bf16.mxu0 %v2103
  %3527 = vmatpush1.bf16.msra.mxu0 %v2102
  %3528 = vmatprep.subr.bf16.mxu0 %v2107
  %3529 = vmatpush1.bf16.msra.mxu0 %v2106
  %3530 = vmatprep.subr.bf16.mxu0 %v2111
  %3531 = vmatpush1.bf16.msra.mxu0 %v2110
  %3532 = vmatprep.subr.bf16.mxu0 %v2115
  %3533 = vmatpush1.bf16.msra.mxu0 %v2114
  %3534 = vmatprep.mubr.bf16.mxu0 %v3460
  %3535 = vmatmul.mubr.bf16.gmra.mrb[0].mxu0 %v3459
  %v3536 = vpop.f32.mrb[0].mxu0
  %v3537 = vadd.f32 %v3496, %v3536
  %v3538 = vpop.f32.mrb[0].mxu0
  %v3539 = vadd.f32 %v3498, %v3538
  %v3540 = vpop.f32.mrb[0].mxu0
  %v3541 = vpop.f32.mrb[0].mxu0
  %3542 = vdwg.mxu0
  %3543 = vmatprep.subr.bf16.mxu0 %v1993
  %3544 = vmatpush1.bf16.msra.mxu0 %v1992
  %3545 = vmatprep.subr.bf16.mxu0 %v1997
  %3546 = vmatpush1.bf16.msra.mxu0 %v1996
  %3547 = vmatprep.subr.bf16.mxu0 %v2001
  %3548 = vmatpush1.bf16.msra.mxu0 %v2000
  %3549 = vmatprep.subr.bf16.mxu0 %v2005
  %3550 = vmatpush1.bf16.msra.mxu0 %v2004
  %3551 = vmatprep.subr.bf16.mxu0 %v2009
  %3552 = vmatpush1.bf16.msra.mxu0 %v2008
  %3553 = vmatprep.subr.bf16.mxu0 %v2013
  %3554 = vmatpush1.bf16.msra.mxu0 %v2012
  %3555 = vmatprep.subr.bf16.mxu0 %v2017
  %3556 = vmatpush1.bf16.msra.mxu0 %v2016
  %3557 = vmatprep.subr.bf16.mxu0 %v2021
  %3558 = vmatpush1.bf16.msra.mxu0 %v2020
  %3559 = vmatprep.subr.bf16.mxu0 %v2025
  %3560 = vmatpush1.bf16.msra.mxu0 %v2024
  %3561 = vmatprep.subr.bf16.mxu0 %v2029
  %3562 = vmatpush1.bf16.msra.mxu0 %v2028
  %3563 = vmatprep.subr.bf16.mxu0 %v2033
  %3564 = vmatpush1.bf16.msra.mxu0 %v2032
  %3565 = vmatprep.subr.bf16.mxu0 %v2037
  %3566 = vmatpush1.bf16.msra.mxu0 %v2036
  %3567 = vmatprep.subr.bf16.mxu0 %v2041
  %3568 = vmatpush1.bf16.msra.mxu0 %v2040
  %3569 = vmatprep.subr.bf16.mxu0 %v2045
  %3570 = vmatpush1.bf16.msra.mxu0 %v2044
  %3571 = vmatprep.subr.bf16.mxu0 %v2049
  %3572 = vmatpush1.bf16.msra.mxu0 %v2048
  %3573 = vmatprep.subr.bf16.mxu0 %v2053
  %3574 = vmatpush1.bf16.msra.mxu0 %v2052
  %3575 = vmatprep.mubr.bf16.mxu0 %v3458
  %3576 = vmatmul.mubr.bf16.gmra.mrb[0].mxu0 %v3457
  %v3577 = vpop.f32.mrb[0].mxu0
  %v3578 = vadd.f32 0.0, %v3577
  %v3579 = vpop.f32.mrb[0].mxu0
  %v3580 = vadd.f32 0.0, %v3579
  %v3581 = vpop.f32.mrb[0].mxu0
  %v3582 = vpop.f32.mrb[0].mxu0
  %3583 = vdwg.mxu0
  %3584 = vmatprep.subr.bf16.mxu0 %v2057
  %3585 = vmatpush1.bf16.msra.mxu0 %v2056
  %3586 = vmatprep.subr.bf16.mxu0 %v2061
  %3587 = vmatpush1.bf16.msra.mxu0 %v2060
  %3588 = vmatprep.subr.bf16.mxu0 %v2065
  %3589 = vmatpush1.bf16.msra.mxu0 %v2064
  %3590 = vmatprep.subr.bf16.mxu0 %v2069
  %3591 = vmatpush1.bf16.msra.mxu0 %v2068
  %3592 = vmatprep.subr.bf16.mxu0 %v2073
  %3593 = vmatpush1.bf16.msra.mxu0 %v2072
  %3594 = vmatprep.subr.bf16.mxu0 %v2077
  %3595 = vmatpush1.bf16.msra.mxu0 %v2076
  %3596 = vmatprep.subr.bf16.mxu0 %v2081
  %3597 = vmatpush1.bf16.msra.mxu0 %v2080
  %3598 = vmatprep.subr.bf16.mxu0 %v2085
  %3599 = vmatpush1.bf16.msra.mxu0 %v2084
  %3600 = vmatprep.subr.bf16.mxu0 %v2089
  %3601 = vmatpush1.bf16.msra.mxu0 %v2088
  %3602 = vmatprep.subr.bf16.mxu0 %v2093
  %3603 = vmatpush1.bf16.msra.mxu0 %v2092
  %3604 = vmatprep.subr.bf16.mxu0 %v2097
  %3605 = vmatpush1.bf16.msra.mxu0 %v2096
  %3606 = vmatprep.subr.bf16.mxu0 %v2101
  %3607 = vmatpush1.bf16.msra.mxu0 %v2100
  %3608 = vmatprep.subr.bf16.mxu0 %v2105
  %3609 = vmatpush1.bf16.msra.mxu0 %v2104
  %3610 = vmatprep.subr.bf16.mxu0 %v2109
  %3611 = vmatpush1.bf16.msra.mxu0 %v2108
  %3612 = vmatprep.subr.bf16.mxu0 %v2113
  %3613 = vmatpush1.bf16.msra.mxu0 %v2112
  %3614 = vmatprep.subr.bf16.mxu0 %v2117
  %3615 = vmatpush1.bf16.msra.mxu0 %v2116
  %3616 = vmatprep.mubr.bf16.mxu0 %v3460
  %3617 = vmatmul.mubr.bf16.gmra.mrb[0].mxu0 %v3459
  %v3618 = vpop.f32.mrb[0].mxu0
  %v3619 = vadd.f32 %v3578, %v3618
  %v3620 = vpop.f32.mrb[0].mxu0
  %v3621 = vadd.f32 %v3580, %v3620
  %v3622 = vpop.f32.mrb[0].mxu0
  %v3623 = vpop.f32.mrb[0].mxu0
  %3624 = vdwg.mxu0
  %v3625 = vmax.f32 %v3537, %v3539
  %v3626 = vmax.f32 %v3619, %v3621
  %v3627 = vmax.f32 %v3625, %v3626
  %v3628 = vsel %vm28, %v3627, 0.0
  %3629 = vadd.xlane.f32.xlu0 %v3628
  %v3630 = vpop.xlane.xlu0 %3629
  %v3631 = vmul.f32 %v3630, %v32
  %v3632 = vmul.f32 %v3627, %v3627
  %v3633 = vsel %vm28, %v3632, 0.0
  %3634 = vadd.xlane.f32.xlu0 %v3633
  %v3635 = vpop.xlane.xlu0 %3634
  %v3636 = vmul.f32 %v3635, %v32
  %v3637 = vmul.f32 %v3631, %v3631
  %v3638 = vsub.f32 %v3636, %v3637
  %v3639 = vmax.f32 %v3638, 0.0
  %v3640 = vsub.f32 %v3627, %v3631
  %v3641 = vadd.f32 %v3639, 1e-05
  %v3642 = vrsqrt.pop %v3641
  %v3643 = vmul.f32 %v3640, %v3642
  %v3644 = vmax.f32 %v3643, 0.0
  %v3645 = vld [vmem:[%s1 + $0x80] sm:$0xf]
  %v3646 = vadd.f32 %v3644, %v3645
  %v3647 = vmax.f32 %v3646, 0.0
  %v3648 = vsel %vm28, %v3647, 0.0
  %3649 = vadd.xlane.f32.xlu0 %v3648
  %v3650 = vpop.xlane.xlu0 %3649
  %v3651 = vmul.f32 %v3650, %v32
  %v3652 = vmul.f32 %v3647, %v3647
  %v3653 = vsel %vm28, %v3652, 0.0
  %3654 = vadd.xlane.f32.xlu0 %v3653
  %v3655 = vpop.xlane.xlu0 %3654
  %v3656 = vmul.f32 %v3655, %v32
  %v3657 = vmul.f32 %v3651, %v3651
  %v3658 = vsub.f32 %v3656, %v3657
  %v3659 = vmax.f32 %v3658, 0.0
  %v3660 = vsub.f32 %v3647, %v3651
  %v3661 = vadd.f32 %v3659, 1e-05
  %v3662 = vrsqrt.pop %v3661
  %v3663 = vmul.f32 %v3660, %v3662
  %s3664 = scalar_lea.vmem %s3, 192
  %v3665 = vld [vmem:[%s3664] sm:$0xf]
  %v3666 = vpack.c.bf16 %v3663, %v3663
  %v3668 = vsel %vm61, %v3665, 0
  %v3671 = vsel %vm68, %v3666, 0
  %3673 = vmatprep.subr.bf16.mxu0 0
  %3674 = vmatpush1.bf16.msra.mxu0 %v3671
  %3675 = vmatprep.subr.bf16.mxu0 0
  %3676 = vmatpush1.bf16.msra.mxu0 0
  %3677 = vmatprep.subr.bf16.mxu0 0
  %3678 = vmatpush1.bf16.msra.mxu0 0
  %3679 = vmatprep.subr.bf16.mxu0 0
  %3680 = vmatpush1.bf16.msra.mxu0 0
  %3681 = vmatprep.subr.bf16.mxu0 0
  %3682 = vmatpush1.bf16.msra.mxu0 0
  %3683 = vmatprep.subr.bf16.mxu0 0
  %3684 = vmatpush1.bf16.msra.mxu0 0
  %3685 = vmatprep.subr.bf16.mxu0 0
  %3686 = vmatpush1.bf16.msra.mxu0 0
  %3687 = vmatprep.subr.bf16.mxu0 0
  %3688 = vmatpush1.bf16.msra.mxu0 0
  %3689 = vmatprep.subr.bf16.mxu0 0
  %3690 = vmatpush1.bf16.msra.mxu0 0
  %3691 = vmatprep.subr.bf16.mxu0 0
  %3692 = vmatpush1.bf16.msra.mxu0 0
  %3693 = vmatprep.subr.bf16.mxu0 0
  %3694 = vmatpush1.bf16.msra.mxu0 0
  %3695 = vmatprep.subr.bf16.mxu0 0
  %3696 = vmatpush1.bf16.msra.mxu0 0
  %3697 = vmatprep.subr.bf16.mxu0 0
  %3698 = vmatpush1.bf16.msra.mxu0 0
  %3699 = vmatprep.subr.bf16.mxu0 0
  %3700 = vmatpush1.bf16.msra.mxu0 0
  %3701 = vmatprep.subr.bf16.mxu0 0
  %3702 = vmatpush1.bf16.msra.mxu0 0
  %3703 = vmatprep.subr.bf16.mxu0 0
  %3704 = vmatpush1.bf16.msra.mxu0 0
  %3705 = vmatprep.mubr.bf16.mxu0 0
  %3706 = vmatmul.mubr.bf16.gmra.mrb[0].mxu0 %v3668
  %v3707 = vpop.f32.mrb[0].mxu0
  %v3708 = vadd.f32 0.0, %v3707
  %v3709 = vpop.f32.mrb[0].mxu0
  %v3710 = vpop.f32.mrb[0].mxu0
  %v3711 = vpop.f32.mrb[0].mxu0
  %3712 = vdwg.mxu0
  %s3713 = scalar_lea.vmem %s3, 208
  %v3714 = vld [vmem:[%s3713] sm:$0xf]
  %v3716 = vsel %vm3112, %v3714, 0
  %v3719 = vsel %vm28, %v3234, 0
  %3721 = vmatprep.subr.bf16.mxu0 0
  %3722 = vmatpush1.bf16.msra.mxu0 %v3719
  %3723 = vmatprep.subr.bf16.mxu0 0
  %3724 = vmatpush1.bf16.msra.mxu0 0
  %3725 = vmatprep.subr.bf16.mxu0 0
  %3726 = vmatpush1.bf16.msra.mxu0 0
  %3727 = vmatprep.subr.bf16.mxu0 0
  %3728 = vmatpush1.bf16.msra.mxu0 0
  %3729 = vmatprep.subr.bf16.mxu0 0
  %3730 = vmatpush1.bf16.msra.mxu0 0
  %3731 = vmatprep.subr.bf16.mxu0 0
  %3732 = vmatpush1.bf16.msra.mxu0 0
  %3733 = vmatprep.subr.bf16.mxu0 0
  %3734 = vmatpush1.bf16.msra.mxu0 0
  %3735 = vmatprep.subr.bf16.mxu0 0
  %3736 = vmatpush1.bf16.msra.mxu0 0
  %3737 = vmatprep.subr.bf16.mxu0 0
  %3738 = vmatpush1.bf16.msra.mxu0 0
  %3739 = vmatprep.subr.bf16.mxu0 0
  %3740 = vmatpush1.bf16.msra.mxu0 0
  %3741 = vmatprep.subr.bf16.mxu0 0
  %3742 = vmatpush1.bf16.msra.mxu0 0
  %3743 = vmatprep.subr.bf16.mxu0 0
  %3744 = vmatpush1.bf16.msra.mxu0 0
  %3745 = vmatprep.subr.bf16.mxu0 0
  %3746 = vmatpush1.bf16.msra.mxu0 0
  %3747 = vmatprep.subr.bf16.mxu0 0
  %3748 = vmatpush1.bf16.msra.mxu0 0
  %3749 = vmatprep.subr.bf16.mxu0 0
  %3750 = vmatpush1.bf16.msra.mxu0 0
  %3751 = vmatprep.subr.bf16.mxu0 0
  %3752 = vmatpush1.bf16.msra.mxu0 0
  %3753 = vmatprep.mubr.bf16.mxu0 0
  %3754 = vmatmul.mubr.bf16.gmra.mrb[0].mxu0 %v3716
  %v3755 = vpop.f32.mrb[0].mxu0
  %v3756 = vadd.f32 0.0, %v3755
  %v3757 = vpop.f32.mrb[0].mxu0
  %v3758 = vpop.f32.mrb[0].mxu0
  %v3759 = vpop.f32.mrb[0].mxu0
  %3760 = vdwg.mxu0
  %v3761 = vsel %vm28, %v3756, 0.0
  %3762 = vadd.xlane.f32.xlu0 %v3761
  %v3763 = vpop.xlane.xlu0 %3762
  %v3764 = vmul.f32 %v3763, %v32
  %v3765 = vmul.f32 %v3756, %v3756
  %v3766 = vsel %vm28, %v3765, 0.0
  %3767 = vadd.xlane.f32.xlu0 %v3766
  %v3768 = vpop.xlane.xlu0 %3767
  %v3769 = vmul.f32 %v3768, %v32
  %v3770 = vmul.f32 %v3764, %v3764
  %v3771 = vsub.f32 %v3769, %v3770
  %v3772 = vmax.f32 %v3771, 0.0
  %v3773 = vsub.f32 %v3756, %v3764
  %v3774 = vadd.f32 %v3772, 1e-05
  %v3775 = vrsqrt.pop %v3774
  %v3776 = vmul.f32 %v3773, %v3775
  %v3777 = vsel %vm28, %v3708, 0.0
  %3778 = vadd.xlane.f32.xlu0 %v3777
  %v3779 = vpop.xlane.xlu0 %3778
  %v3780 = vmul.f32 %v3779, %v32
  %v3781 = vmul.f32 %v3708, %v3708
  %v3782 = vsel %vm28, %v3781, 0.0
  %3783 = vadd.xlane.f32.xlu0 %v3782
  %v3784 = vpop.xlane.xlu0 %3783
  %v3785 = vmul.f32 %v3784, %v32
  %v3786 = vmul.f32 %v3780, %v3780
  %v3787 = vsub.f32 %v3785, %v3786
  %v3788 = vmax.f32 %v3787, 0.0
  %v3789 = vsub.f32 %v3708, %v3780
  %v3790 = vadd.f32 %v3788, 1e-05
  %v3791 = vrsqrt.pop %v3790
  %v3792 = vmul.f32 %v3789, %v3791
  %v3793 = vadd.f32 %v3792, %v3776
  %v3794 = vmax.f32 %v3793, 0.0
  %v3795 = vtanh.pop %v3794
  %3796 = vst [vmem:[%s6] sm:$0xf] %v3795
  // Predicated region
  $region26: #{_lambda_.1} parent=0 // pred_check
    _
  $region27: #{_lambda_.1} parent=0 // pred_check_branch
    %3798 = sbr.rel (0) target = $region29
  $region28: #{_lambda_.1} parent=0 // pred_region
    _
  $region29: #{_lambda_.1} parent=0 // pred_fallthru
    _
  // Predicated region
  $region30: #{_lambda_.1} parent=0 // pred_check
    _
  $region31: #{_lambda_.1} parent=0 // pred_check_branch
    %3800 = sbr.rel (0) target = $region33
  $region32: #{_lambda_.1} parent=0 // pred_region
    _
  $region33: #{_lambda_.1} parent=0 // pred_fallthru
    _

</llo_original>
